<compile_context>
chip_gen: v7x
topology: tpu7x:2x2x1
jax: 0.10.0
libtpu: 0.0.40
codegen_flags: <defaults>
</compile_context>

<pallas_src>
import numpy as np
import jax
import jax.numpy as jnp
from jax import lax
from jax.experimental import pallas as pl
from jax.experimental.pallas import tpu as pltpu

# ----------------------------- configuration --------------------------------
B = 2                        # batch
H = W = 8                    # spatial resolution (L = H*W = 64)
C = 32                       # dim
DEPTH = 2                    # depth of this stage
NUM_HEADS = 4
WS = 4                       # window_size
SHIFT = WS // 2              # shift_size for odd blocks
MLP_RATIO = 4.0
HIDDEN = int(C * MLP_RATIO)
HD = C // NUM_HEADS          # head dim
N = WS * WS                  # tokens per window
NW = (H // WS) * (W // WS)   # windows per image
L = H * W
ROWS = NW * N                # tokens per image (== L here)
SCALE = HD ** -0.5           # qk_scale = head_dim ** -0.5
LN_EPS = 1e-5
NEG = -1e9                   # cross-window logit mask


# --------------------------- static (numpy) tables ---------------------------
def relative_position_index(ws):
    coords = np.stack(np.meshgrid(np.arange(ws), np.arange(ws), indexing="ij"))
    coords_flat = coords.reshape(2, -1)
    rel = coords_flat[:, :, None] - coords_flat[:, None, :]       # (2, N, N)
    rel = rel.transpose(1, 2, 0).astype(np.int64)
    rel[:, :, 0] += ws - 1
    rel[:, :, 1] += ws - 1
    rel[:, :, 0] *= 2 * ws - 1
    return rel.sum(-1).astype(np.int32)                           # (N, N)


def shifted_window_mask(shift):
    """(nW, N, N) shift-attention mask, values in {0, -100} (matches torch)."""
    if shift == 0:
        return np.zeros((NW, N, N), np.float32)
    img_mask = np.zeros((H, W), np.float32)
    cnt = 0
    for hs in (slice(0, -WS), slice(-WS, -shift), slice(-shift, None)):
        for ws_ in (slice(0, -WS), slice(-WS, -shift), slice(-shift, None)):
            img_mask[hs, ws_] = cnt
            cnt += 1
    mw = (img_mask.reshape(H // WS, WS, W // WS, WS)
          .transpose(0, 2, 1, 3).reshape(NW, N))
    attn_mask = mw[:, None, :] - mw[:, :, None]
    return np.where(attn_mask != 0, -100.0, 0.0).astype(np.float32)


def build_block_mask(shift):
    """(ROWS, ROWS): shift mask on the window block-diagonal, NEG elsewhere."""
    sm = shifted_window_mask(shift)
    out = np.full((ROWS, ROWS), NEG, np.float32)
    for w in range(NW):
        out[w * N:(w + 1) * N, w * N:(w + 1) * N] = sm[w]
    return out


def build_permutation(shift):
    """Token permutation equal to roll(-shift) + window_partition; + inverse."""
    nww = W // WS
    perm = np.empty(ROWS, np.int32)
    for w in range(NW):
        wi, wj = w // nww, w % nww
        for n in range(N):
            ni, nj = n // WS, n % WS
            hh = (wi * WS + ni + shift) % H
            ww = (wj * WS + nj + shift) % W
            perm[w * N + n] = hh * W + ww
    inv = np.empty_like(perm)
    inv[perm] = np.arange(ROWS, dtype=np.int32)
    return perm, inv


REL_IDX = relative_position_index(WS)
BLOCK_MASK = {s: build_block_mask(s) for s in (0, SHIFT)}
PERM = {s: build_permutation(s) for s in (0, SHIFT)}


# ------------------------------- Pallas kernel --------------------------------
def _layernorm(x, g, b):
    mu = jnp.mean(x, axis=-1, keepdims=True)
    var = jnp.mean(jnp.square(x - mu), axis=-1, keepdims=True)
    return (x - mu) * lax.rsqrt(var + LN_EPS) * g + b


def swin_stage_kernel(x_ref, bm_ref, g1_ref, b1_ref, wqkv_ref, bqkv_ref,
                      wp_ref, bp_ref, g2_ref, b2_ref,
                      w1_ref, fb1_ref, w2_ref, fb2_ref, o_ref):
    """Whole DEPTH=2 Swin stage for one batch element's (ROWS, C) token slab.

    Tokens stay in raster order: the roll/window permutations are folded into
    the precomputed bias+mask tables bm_ref (DEPTH, NH, ROWS, ROWS).
    """
    x = x_ref[...].astype(jnp.float32)                                 # (ROWS, C)

    for d in range(DEPTH):                         # static loop: both blocks fused
        # ---------------- norm1 + W-MSA (rolled per-head loop) ---------------
        xn = _layernorm(x, g1_ref[d], b1_ref[d])                       # (ROWS, C)

        def head_body(h, acc, _d=d, _xn=xn):
            # fused per-head QKV projection: (ROWS,C)@(C,3*HD); qk scale folded
            qkv = jnp.dot(_xn, wqkv_ref[_d, h],
                          preferred_element_type=jnp.float32) + bqkv_ref[_d, h]
            q = qkv[:, :HD]
            k = qkv[:, HD:2 * HD]
            v = qkv[:, 2 * HD:]
            # full-slab logits; cross-window entries killed by the -1e9 in bm,
            # within-window entries get rel-pos bias + shift mask from bm.
            logits = lax.dot_general(q, k, (((1,), (1,)), ((), ())),
                                     preferred_element_type=jnp.float32)
            logits = logits + bm_ref[_d, h]                            # (ROWS, ROWS)
            m = jnp.max(logits, axis=-1, keepdims=True)
            p = jnp.exp(logits - m)
            p = p / jnp.sum(p, axis=-1, keepdims=True)                 # exact softmax
            ctx = jnp.dot(p, v, preferred_element_type=jnp.float32)    # (ROWS, HD)
            # output projection accumulated per head (joint head/head_dim contract)
            return acc + jnp.dot(ctx, wp_ref[_d, h],
                                 preferred_element_type=jnp.float32)   # (ROWS, C)

        attn = lax.fori_loop(0, NUM_HEADS, head_body,
                             jnp.zeros((ROWS, C), jnp.float32))
        y = x + attn + bp_ref[d]                                       # residual 1

        # ---------------- norm2 + MLP + residual -----------------------------
        yn = _layernorm(y, g2_ref[d], b2_ref[d])
        hmid = jnp.dot(yn, w1_ref[d],
                       preferred_element_type=jnp.float32) + fb1_ref[d]  # (ROWS,HIDDEN)
        # TODO(synk): torch nn.GELU default is erf-exact; tanh approximation used here.
        hmid = jax.nn.gelu(hmid, approximate=True)
        z = jnp.dot(hmid, w2_ref[d],
                    preferred_element_type=jnp.float32) + fb2_ref[d]     # (ROWS, C)
        x = y + z                                                        # residual 2

    o_ref[...] = x.astype(o_ref.dtype)


# ----------------------------- pallas_call wrapper ----------------------------
def swin_stage_pallas(x, sp):
    """x: (B, L, C) raster-order tokens; one fused kernel for the whole stage."""
    Bb, Ls, Cc = x.shape
    xf = x.reshape(Bb * Ls, Cc)                    # contiguous reshape (no copy)

    def cspec(arr):
        nd = arr.ndim
        return pl.BlockSpec(arr.shape, lambda b, _n=nd: (0,) * _n)

    out = pl.pallas_call(
        swin_stage_kernel,
        out_shape=jax.ShapeDtypeStruct((Bb * Ls, Cc), x.dtype),
        grid_spec=pltpu.PrefetchScalarGridSpec(
            num_scalar_prefetch=0,
            grid=(Bb,),                                           # 2 parallel steps
            in_specs=[
                pl.BlockSpec((ROWS, C), lambda b: (b, 0)),        # tokens
                cspec(sp["bias_mask"]),                           # (D,NH,ROWS,ROWS)
                cspec(sp["ln1_g"]), cspec(sp["ln1_b"]),           # norm1
                cspec(sp["wqkv"]), cspec(sp["bqkv"]),             # fused per-head qkv
                cspec(sp["wp"]), cspec(sp["bp"]),                 # proj
                cspec(sp["ln2_g"]), cspec(sp["ln2_b"]),           # norm2
                cspec(sp["w1"]), cspec(sp["b1"]),                 # fc1
                cspec(sp["w2"]), cspec(sp["b2"]),                 # fc2
            ],
            out_specs=pl.BlockSpec((ROWS, C), lambda b: (b, 0)),
        ),
        compiler_params=pltpu.CompilerParams(
            dimension_semantics=("parallel",)),
    )(xf, sp["bias_mask"], sp["ln1_g"], sp["ln1_b"], sp["wqkv"], sp["bqkv"],
      sp["wp"], sp["bp"], sp["ln2_g"], sp["ln2_b"],
      sp["w1"], sp["b1"], sp["w2"], sp["b2"])
    return out.reshape(Bb, Ls, Cc)


def basic_layer_forward(x, stage_params):
    """x: (B, H*W, C) -> (x, x) (downsample is None), matching BasicLayer."""
    y = swin_stage_pallas(x, stage_params)
    return y, y


# -------------------- stage parameter prep (host, outside jit) ----------------
def prepare_stage(raw_params):
    """Per block: fuse qkv weights per head (qk scale folded into q), reshape the
    output projection per head, and precombine relative-position bias + shift
    mask + cross-window mask into one table permuted into RASTER token order
    (so the kernel never needs roll / window_partition gathers).  All blocks are
    stacked along a leading DEPTH axis for the single fused-stage kernel."""
    keys = ("bias_mask", "ln1_g", "ln1_b", "wqkv", "bqkv", "wp", "bp",
            "ln2_g", "ln2_b", "w1", "b1", "w2", "b2")
    acc = {k: [] for k in keys}

    for i, p in enumerate(raw_params):
        shift = 0 if i % 2 == 0 else SHIFT
        _, inv = PERM[shift]

        wqkv = np.asarray(p["wqkv"], np.float32)            # (C, 3C), x @ W conv.
        bqkv = np.asarray(p["bqkv"], np.float32).reshape(-1)
        wq, wk, wv = wqkv[:, :C], wqkv[:, C:2 * C], wqkv[:, 2 * C:]
        bq, bk, bv = bqkv[:C], bqkv[C:2 * C], bqkv[2 * C:]

        wqkv_h = np.stack(
            [np.concatenate([wq[:, h * HD:(h + 1) * HD] * SCALE,
                             wk[:, h * HD:(h + 1) * HD],
                             wv[:, h * HD:(h + 1) * HD]], axis=1)
             for h in range(NUM_HEADS)], axis=0)            # (NH, C, 3*HD)
        bqkv_h = np.stack(
            [np.concatenate([bq[h * HD:(h + 1) * HD] * SCALE,
                             bk[h * HD:(h + 1) * HD],
                             bv[h * HD:(h + 1) * HD]])[None, :]
             for h in range(NUM_HEADS)], axis=0)            # (NH, 1, 3*HD)

        rel = np.asarray(p["rpb_table"], np.float32)[REL_IDX.reshape(-1)]
        rel = rel.reshape(N, N, NUM_HEADS).transpose(2, 0, 1)          # (NH, N, N)
        bm = np.tile(rel, (1, NW, NW)) + BLOCK_MASK[shift][None]       # windowed order
        bm = bm[:, inv][:, :, inv]          # fold roll + window partition permutation

        acc["bias_mask"].append(bm.astype(np.float32))
        acc["ln1_g"].append(np.asarray(p["g1"], np.float32))
        acc["ln1_b"].append(np.asarray(p["b1"], np.float32))
        acc["wqkv"].append(wqkv_h.astype(np.float32))
        acc["bqkv"].append(bqkv_h.astype(np.float32))
        acc["wp"].append(np.asarray(p["wproj"], np.float32).reshape(NUM_HEADS, HD, C))
        acc["bp"].append(np.asarray(p["bproj"], np.float32))
        acc["ln2_g"].append(np.asarray(p["g2"], np.float32))
        acc["ln2_b"].append(np.asarray(p["b2"], np.float32))
        acc["w1"].append(np.asarray(p["w1"], np.float32))
        acc["b1"].append(np.asarray(p["bias1"], np.float32))
        acc["w2"].append(np.asarray(p["w2"], np.float32))
        acc["b2"].append(np.asarray(p["bias2"], np.float32))

    return {k: jnp.asarray(np.stack(v, axis=0)) for k, v in acc.items()}


# ------------------------------ parameter init --------------------------------
def init_block_params(key):
    ks = jax.random.split(key, 5)
    std = 0.02
    return dict(
        g1=jnp.ones((1, C), jnp.float32),
        b1=jnp.zeros((1, C), jnp.float32),
        wqkv=(jax.random.normal(ks[0], (C, 3 * C)) * std).astype(jnp.float32),
        bqkv=jnp.zeros((1, 3 * C), jnp.float32),
        wproj=(jax.random.normal(ks[1], (C, C)) * std).astype(jnp.float32),
        bproj=jnp.zeros((1, C), jnp.float32),
        rpb_table=(jax.random.normal(ks[2], ((2 * WS - 1) ** 2, NUM_HEADS)) * std
                   ).astype(jnp.float32),
        g2=jnp.ones((1, C), jnp.float32),
        b2=jnp.zeros((1, C), jnp.float32),
        w1=(jax.random.normal(ks[3], (C, HIDDEN)) * std).astype(jnp.float32),
        bias1=jnp.zeros((1, HIDDEN), jnp.float32),
        w2=(jax.random.normal(ks[4], (HIDDEN, C)) * std).astype(jnp.float32),
        bias2=jnp.zeros((1, C), jnp.float32),
    )


if __name__ == "__main__":
    key = jax.random.PRNGKey(0)
    kx, kp = jax.random.split(key)
    x = jax.random.normal(kx, (B, H * W, C), jnp.float32)

    raw_params = [init_block_params(k) for k in jax.random.split(kp, DEPTH)]
    stage_params = prepare_stage(raw_params)          # prep once, outside jit

    fwd = jax.jit(basic_layer_forward)
    out, out_down = fwd(x, stage_params)
    jax.block_until_ready((out, out_down))

    assert out.shape == (B, H * W, C) and out_down.shape == (B, H * W, C)
    assert bool(jnp.all(jnp.isfinite(out)))
    print("KERNEL_OK")
</pallas_src>

<mosaic_0001>
module attributes {stable_mosaic.version = 11 : i64} {
  func.func @swin_stage_kernel(%arg0: i32, %arg1: memref<64x32xf32, #tpu.memory_space<vmem>>, %arg2: memref<2x4x64x64xf32, #tpu.memory_space<vmem>>, %arg3: memref<2x1x32xf32, #tpu.memory_space<vmem>>, %arg4: memref<2x1x32xf32, #tpu.memory_space<vmem>>, %arg5: memref<2x4x32x24xf32, #tpu.memory_space<vmem>>, %arg6: memref<2x4x1x24xf32, #tpu.memory_space<vmem>>, %arg7: memref<2x4x8x32xf32, #tpu.memory_space<vmem>>, %arg8: memref<2x1x32xf32, #tpu.memory_space<vmem>>, %arg9: memref<2x1x32xf32, #tpu.memory_space<vmem>>, %arg10: memref<2x1x32xf32, #tpu.memory_space<vmem>>, %arg11: memref<2x32x128xf32, #tpu.memory_space<vmem>>, %arg12: memref<2x1x128xf32, #tpu.memory_space<vmem>>, %arg13: memref<2x128x32xf32, #tpu.memory_space<vmem>>, %arg14: memref<2x1x32xf32, #tpu.memory_space<vmem>>, %arg15: memref<64x32xf32, #tpu.memory_space<vmem>>) attributes {dimension_semantics = [#tpu.dimension_semantics<parallel>], iteration_bounds = array<i64: 2>, scalar_prefetch = 0 : i64, scratch_operands = 0 : i64, tpu.core_type = #tpu.core_type<tc>, window_params = [{transform_indices = @transform_0, window_bounds = array<i64: 64, 32>}, {pipeline_mode = #tpu.pipeline_mode<synchronous>, transform_indices = @transform_1, window_bounds = array<i64: 2, 4, 64, 64>}, {pipeline_mode = #tpu.pipeline_mode<synchronous>, transform_indices = @transform_2, window_bounds = array<i64: 2, 1, 32>}, {pipeline_mode = #tpu.pipeline_mode<synchronous>, transform_indices = @transform_3, window_bounds = array<i64: 2, 1, 32>}, {pipeline_mode = #tpu.pipeline_mode<synchronous>, transform_indices = @transform_4, window_bounds = array<i64: 2, 4, 32, 24>}, {pipeline_mode = #tpu.pipeline_mode<synchronous>, transform_indices = @transform_5, window_bounds = array<i64: 2, 4, 1, 24>}, {pipeline_mode = #tpu.pipeline_mode<synchronous>, transform_indices = @transform_6, window_bounds = array<i64: 2, 4, 8, 32>}, {pipeline_mode = #tpu.pipeline_mode<synchronous>, transform_indices = @transform_7, window_bounds = array<i64: 2, 1, 32>}, {pipeline_mode = #tpu.pipeline_mode<synchronous>, transform_indices = @transform_8, window_bounds = array<i64: 2, 1, 32>}, {pipeline_mode = #tpu.pipeline_mode<synchronous>, transform_indices = @transform_9, window_bounds = array<i64: 2, 1, 32>}, {pipeline_mode = #tpu.pipeline_mode<synchronous>, transform_indices = @transform_10, window_bounds = array<i64: 2, 32, 128>}, {pipeline_mode = #tpu.pipeline_mode<synchronous>, transform_indices = @transform_11, window_bounds = array<i64: 2, 1, 128>}, {pipeline_mode = #tpu.pipeline_mode<synchronous>, transform_indices = @transform_12, window_bounds = array<i64: 2, 128, 32>}, {pipeline_mode = #tpu.pipeline_mode<synchronous>, transform_indices = @transform_13, window_bounds = array<i64: 2, 1, 32>}, {transform_indices = @transform_14, window_bounds = array<i64: 64, 32>}]} {
    %c0 = arith.constant 0 : index
    %c0_0 = arith.constant 0 : index
    %0 = vector.load %arg1[%c0, %c0_0] : memref<64x32xf32, #tpu.memory_space<vmem>>, vector<64x32xf32>
    %c0_1 = arith.constant 0 : index
    %c0_2 = arith.constant 0 : index
    %c0_3 = arith.constant 0 : index
    %1 = vector.load %arg3[%c0_1, %c0_2, %c0_3] : memref<2x1x32xf32, #tpu.memory_space<vmem>>, vector<1x1x32xf32>
    %2 = vector.shape_cast %1 : vector<1x1x32xf32> to vector<1x32xf32>
    %c0_4 = arith.constant 0 : index
    %c0_5 = arith.constant 0 : index
    %c0_6 = arith.constant 0 : index
    %3 = vector.load %arg4[%c0_4, %c0_5, %c0_6] : memref<2x1x32xf32, #tpu.memory_space<vmem>>, vector<1x1x32xf32>
    %4 = vector.shape_cast %3 : vector<1x1x32xf32> to vector<1x32xf32>
    %cst = arith.constant dense<0.000000e+00> : vector<64xf32>
    %5 = vector.multi_reduction <add>, %0, %cst [1] : vector<64x32xf32> to vector<64xf32>
    %6 = vector.shape_cast %5 : vector<64xf32> to vector<64x1xf32>
    %cst_7 = arith.constant 3.200000e+01 : f32
    %7 = vector.broadcast %cst_7 : f32 to vector<64x1xf32>
    %8 = arith.divf %6, %7 : vector<64x1xf32>
    %9 = vector.broadcast %8 : vector<64x1xf32> to vector<64x32xf32>
    %10 = arith.subf %0, %9 : vector<64x32xf32>
    %11 = arith.mulf %10, %10 : vector<64x32xf32>
    %cst_8 = arith.constant dense<0.000000e+00> : vector<64xf32>
    %12 = vector.multi_reduction <add>, %11, %cst_8 [1] : vector<64x32xf32> to vector<64xf32>
    %13 = vector.shape_cast %12 : vector<64xf32> to vector<64x1xf32>
    %cst_9 = arith.constant 3.200000e+01 : f32
    %14 = vector.broadcast %cst_9 : f32 to vector<64x1xf32>
    %15 = arith.divf %13, %14 : vector<64x1xf32>
    %16 = vector.broadcast %8 : vector<64x1xf32> to vector<64x32xf32>
    %17 = arith.subf %0, %16 : vector<64x32xf32>
    %cst_10 = arith.constant 9.99999974E-6 : f32
    %18 = vector.broadcast %cst_10 : f32 to vector<64x1xf32>
    %19 = arith.addf %15, %18 : vector<64x1xf32>
    %20 = math.rsqrt %19 : vector<64x1xf32>
    %21 = vector.broadcast %20 : vector<64x1xf32> to vector<64x32xf32>
    %22 = arith.mulf %17, %21 : vector<64x32xf32>
    %23 = vector.broadcast %2 : vector<1x32xf32> to vector<64x32xf32>
    %24 = arith.mulf %22, %23 : vector<64x32xf32>
    %25 = vector.broadcast %4 : vector<1x32xf32> to vector<64x32xf32>
    %26 = arith.addf %24, %25 : vector<64x32xf32>
    %cst_11 = arith.constant 0.000000e+00 : f32
    %27 = vector.broadcast %cst_11 : f32 to vector<64x32xf32>
    %c0_i32 = arith.constant 0 : i32
    %c4_i32 = arith.constant 4 : i32
    %28 = arith.addi %c0_i32, %c4_i32 : i32
    %c1_i32 = arith.constant 1 : i32
    %29 = scf.for %arg16 = %c0_i32 to %28 step %c1_i32 iter_args(%arg17 = %27) -> (vector<64x32xf32>)  : i32 {
      %c0_94 = arith.constant 0 : index
      %178 = arith.index_cast %arg16 : i32 to index
      %c0_95 = arith.constant 0 : index
      %c0_96 = arith.constant 0 : index
      %179 = vector.load %arg5[%c0_94, %178, %c0_95, %c0_96] : memref<2x4x32x24xf32, #tpu.memory_space<vmem>>, vector<1x1x32x24xf32>
      %180 = vector.shape_cast %179 : vector<1x1x32x24xf32> to vector<32x24xf32>
      %cst_97 = arith.constant dense<0.000000e+00> : vector<64x24xf32>
      %181 = tpu.matmul %26, %180, %cst_97 {dimension_numbers = #tpu.dot_dimension_numbers<[1], [0], [0], [1], [0, 0, 1, 1], [], []>} : vector<64x32xf32>, vector<32x24xf32>, vector<64x24xf32> -> vector<64x24xf32>
      %c0_98 = arith.constant 0 : index
      %182 = arith.index_cast %arg16 : i32 to index
      %c0_99 = arith.constant 0 : index
      %c0_100 = arith.constant 0 : index
      %183 = vector.load %arg6[%c0_98, %182, %c0_99, %c0_100] : memref<2x4x1x24xf32, #tpu.memory_space<vmem>>, vector<1x1x1x24xf32>
      %184 = vector.shape_cast %183 : vector<1x1x1x24xf32> to vector<1x24xf32>
      %185 = vector.broadcast %184 : vector<1x24xf32> to vector<64x24xf32>
      %186 = arith.addf %181, %185 : vector<64x24xf32>
      %187 = vector.extract_strided_slice %186 {offsets = [0, 0], sizes = [64, 8], strides = [1, 1]} : vector<64x24xf32> to vector<64x8xf32>
      %188 = vector.extract_strided_slice %186 {offsets = [0, 8], sizes = [64, 8], strides = [1, 1]} : vector<64x24xf32> to vector<64x8xf32>
      %189 = vector.extract_strided_slice %186 {offsets = [0, 16], sizes = [64, 8], strides = [1, 1]} : vector<64x24xf32> to vector<64x8xf32>
      %cst_101 = arith.constant dense<0.000000e+00> : vector<64x64xf32>
      %190 = tpu.matmul %187, %188, %cst_101 {dimension_numbers = #tpu.dot_dimension_numbers<[1], [1], [0], [0], [0, 0, 1, 0], [], []>} : vector<64x8xf32>, vector<64x8xf32>, vector<64x64xf32> -> vector<64x64xf32>
      %c0_102 = arith.constant 0 : index
      %191 = arith.index_cast %arg16 : i32 to index
      %c0_103 = arith.constant 0 : index
      %c0_104 = arith.constant 0 : index
      %192 = vector.load %arg2[%c0_102, %191, %c0_103, %c0_104] : memref<2x4x64x64xf32, #tpu.memory_space<vmem>>, vector<1x1x64x64xf32>
      %193 = vector.shape_cast %192 : vector<1x1x64x64xf32> to vector<64x64xf32>
      %194 = arith.addf %190, %193 : vector<64x64xf32>
      %cst_105 = arith.constant dense<0xFF800000> : vector<64xf32>
      %195 = vector.multi_reduction <maximumf>, %194, %cst_105 [1] : vector<64x64xf32> to vector<64xf32>
      %196 = vector.shape_cast %195 : vector<64xf32> to vector<64x1xf32>
      %197 = vector.broadcast %196 : vector<64x1xf32> to vector<64x64xf32>
      %198 = arith.subf %194, %197 : vector<64x64xf32>
      %199 = math.exp %198 : vector<64x64xf32>
      %cst_106 = arith.constant dense<0.000000e+00> : vector<64xf32>
      %200 = vector.multi_reduction <add>, %199, %cst_106 [1] : vector<64x64xf32> to vector<64xf32>
      %201 = vector.shape_cast %200 : vector<64xf32> to vector<64x1xf32>
      %202 = vector.broadcast %201 : vector<64x1xf32> to vector<64x64xf32>
      %203 = arith.divf %199, %202 : vector<64x64xf32>
      %cst_107 = arith.constant dense<0.000000e+00> : vector<64x8xf32>
      %204 = tpu.matmul %203, %189, %cst_107 {dimension_numbers = #tpu.dot_dimension_numbers<[1], [0], [0], [1], [0, 0, 1, 1], [], []>} : vector<64x64xf32>, vector<64x8xf32>, vector<64x8xf32> -> vector<64x8xf32>
      %c0_108 = arith.constant 0 : index
      %205 = arith.index_cast %arg16 : i32 to index
      %c0_109 = arith.constant 0 : index
      %c0_110 = arith.constant 0 : index
      %206 = vector.load %arg7[%c0_108, %205, %c0_109, %c0_110] : memref<2x4x8x32xf32, #tpu.memory_space<vmem>>, vector<1x1x8x32xf32>
      %207 = vector.shape_cast %206 : vector<1x1x8x32xf32> to vector<8x32xf32>
      %cst_111 = arith.constant dense<0.000000e+00> : vector<64x32xf32>
      %208 = tpu.matmul %204, %207, %cst_111 {dimension_numbers = #tpu.dot_dimension_numbers<[1], [0], [0], [1], [0, 0, 1, 1], [], []>} : vector<64x8xf32>, vector<8x32xf32>, vector<64x32xf32> -> vector<64x32xf32>
      %209 = arith.addf %arg17, %208 : vector<64x32xf32>
      scf.yield %209 : vector<64x32xf32>
    }
    %c4_i32_12 = arith.constant 4 : i32
    %30 = arith.addf %0, %29 : vector<64x32xf32>
    %c0_13 = arith.constant 0 : index
    %c0_14 = arith.constant 0 : index
    %c0_15 = arith.constant 0 : index
    %31 = vector.load %arg8[%c0_13, %c0_14, %c0_15] : memref<2x1x32xf32, #tpu.memory_space<vmem>>, vector<1x1x32xf32>
    %32 = vector.shape_cast %31 : vector<1x1x32xf32> to vector<1x32xf32>
    %33 = vector.broadcast %32 : vector<1x32xf32> to vector<64x32xf32>
    %34 = arith.addf %30, %33 : vector<64x32xf32>
    %c0_16 = arith.constant 0 : index
    %c0_17 = arith.constant 0 : index
    %c0_18 = arith.constant 0 : index
    %35 = vector.load %arg9[%c0_16, %c0_17, %c0_18] : memref<2x1x32xf32, #tpu.memory_space<vmem>>, vector<1x1x32xf32>
    %36 = vector.shape_cast %35 : vector<1x1x32xf32> to vector<1x32xf32>
    %c0_19 = arith.constant 0 : index
    %c0_20 = arith.constant 0 : index
    %c0_21 = arith.constant 0 : index
    %37 = vector.load %arg10[%c0_19, %c0_20, %c0_21] : memref<2x1x32xf32, #tpu.memory_space<vmem>>, vector<1x1x32xf32>
    %38 = vector.shape_cast %37 : vector<1x1x32xf32> to vector<1x32xf32>
    %cst_22 = arith.constant dense<0.000000e+00> : vector<64xf32>
    %39 = vector.multi_reduction <add>, %34, %cst_22 [1] : vector<64x32xf32> to vector<64xf32>
    %40 = vector.shape_cast %39 : vector<64xf32> to vector<64x1xf32>
    %cst_23 = arith.constant 3.200000e+01 : f32
    %41 = vector.broadcast %cst_23 : f32 to vector<64x1xf32>
    %42 = arith.divf %40, %41 : vector<64x1xf32>
    %43 = vector.broadcast %42 : vector<64x1xf32> to vector<64x32xf32>
    %44 = arith.subf %34, %43 : vector<64x32xf32>
    %45 = arith.mulf %44, %44 : vector<64x32xf32>
    %cst_24 = arith.constant dense<0.000000e+00> : vector<64xf32>
    %46 = vector.multi_reduction <add>, %45, %cst_24 [1] : vector<64x32xf32> to vector<64xf32>
    %47 = vector.shape_cast %46 : vector<64xf32> to vector<64x1xf32>
    %cst_25 = arith.constant 3.200000e+01 : f32
    %48 = vector.broadcast %cst_25 : f32 to vector<64x1xf32>
    %49 = arith.divf %47, %48 : vector<64x1xf32>
    %50 = vector.broadcast %42 : vector<64x1xf32> to vector<64x32xf32>
    %51 = arith.subf %34, %50 : vector<64x32xf32>
    %cst_26 = arith.constant 9.99999974E-6 : f32
    %52 = vector.broadcast %cst_26 : f32 to vector<64x1xf32>
    %53 = arith.addf %49, %52 : vector<64x1xf32>
    %54 = math.rsqrt %53 : vector<64x1xf32>
    %55 = vector.broadcast %54 : vector<64x1xf32> to vector<64x32xf32>
    %56 = arith.mulf %51, %55 : vector<64x32xf32>
    %57 = vector.broadcast %36 : vector<1x32xf32> to vector<64x32xf32>
    %58 = arith.mulf %56, %57 : vector<64x32xf32>
    %59 = vector.broadcast %38 : vector<1x32xf32> to vector<64x32xf32>
    %60 = arith.addf %58, %59 : vector<64x32xf32>
    %c0_27 = arith.constant 0 : index
    %c0_28 = arith.constant 0 : index
    %c0_29 = arith.constant 0 : index
    %61 = vector.load %arg11[%c0_27, %c0_28, %c0_29] : memref<2x32x128xf32, #tpu.memory_space<vmem>>, vector<1x32x128xf32>
    %62 = vector.shape_cast %61 : vector<1x32x128xf32> to vector<32x128xf32>
    %cst_30 = arith.constant dense<0.000000e+00> : vector<64x128xf32>
    %63 = tpu.matmul %60, %62, %cst_30 {dimension_numbers = #tpu.dot_dimension_numbers<[1], [0], [0], [1], [0, 0, 1, 1], [], []>} : vector<64x32xf32>, vector<32x128xf32>, vector<64x128xf32> -> vector<64x128xf32>
    %c0_31 = arith.constant 0 : index
    %c0_32 = arith.constant 0 : index
    %c0_33 = arith.constant 0 : index
    %64 = vector.load %arg12[%c0_31, %c0_32, %c0_33] : memref<2x1x128xf32, #tpu.memory_space<vmem>>, vector<1x1x128xf32>
    %65 = vector.shape_cast %64 : vector<1x1x128xf32> to vector<1x128xf32>
    %66 = vector.broadcast %65 : vector<1x128xf32> to vector<64x128xf32>
    %67 = arith.addf %63, %66 : vector<64x128xf32>
    %68 = arith.mulf %67, %67 : vector<64x128xf32>
    %69 = arith.mulf %67, %68 : vector<64x128xf32>
    %cst_34 = arith.constant 4.471500e-02 : f32
    %70 = vector.broadcast %cst_34 : f32 to vector<64x128xf32>
    %71 = arith.mulf %70, %69 : vector<64x128xf32>
    %72 = arith.addf %67, %71 : vector<64x128xf32>
    %cst_35 = arith.constant 0.797884583 : f32
    %73 = vector.broadcast %cst_35 : f32 to vector<64x128xf32>
    %74 = arith.mulf %73, %72 : vector<64x128xf32>
    %75 = math.tanh %74 : vector<64x128xf32>
    %cst_36 = arith.constant 1.000000e+00 : f32
    %76 = vector.broadcast %cst_36 : f32 to vector<64x128xf32>
    %77 = arith.addf %76, %75 : vector<64x128xf32>
    %cst_37 = arith.constant 5.000000e-01 : f32
    %78 = vector.broadcast %cst_37 : f32 to vector<64x128xf32>
    %79 = arith.mulf %78, %77 : vector<64x128xf32>
    %80 = arith.mulf %67, %79 : vector<64x128xf32>
    %c0_38 = arith.constant 0 : index
    %c0_39 = arith.constant 0 : index
    %c0_40 = arith.constant 0 : index
    %81 = vector.load %arg13[%c0_38, %c0_39, %c0_40] : memref<2x128x32xf32, #tpu.memory_space<vmem>>, vector<1x128x32xf32>
    %82 = vector.shape_cast %81 : vector<1x128x32xf32> to vector<128x32xf32>
    %cst_41 = arith.constant dense<0.000000e+00> : vector<64x32xf32>
    %83 = tpu.matmul %80, %82, %cst_41 {dimension_numbers = #tpu.dot_dimension_numbers<[1], [0], [0], [1], [0, 0, 1, 1], [], []>} : vector<64x128xf32>, vector<128x32xf32>, vector<64x32xf32> -> vector<64x32xf32>
    %c0_42 = arith.constant 0 : index
    %c0_43 = arith.constant 0 : index
    %c0_44 = arith.constant 0 : index
    %84 = vector.load %arg14[%c0_42, %c0_43, %c0_44] : memref<2x1x32xf32, #tpu.memory_space<vmem>>, vector<1x1x32xf32>
    %85 = vector.shape_cast %84 : vector<1x1x32xf32> to vector<1x32xf32>
    %86 = vector.broadcast %85 : vector<1x32xf32> to vector<64x32xf32>
    %87 = arith.addf %83, %86 : vector<64x32xf32>
    %88 = arith.addf %34, %87 : vector<64x32xf32>
    %c1 = arith.constant 1 : index
    %c0_45 = arith.constant 0 : index
    %c0_46 = arith.constant 0 : index
    %89 = vector.load %arg3[%c1, %c0_45, %c0_46] : memref<2x1x32xf32, #tpu.memory_space<vmem>>, vector<1x1x32xf32>
    %90 = vector.shape_cast %89 : vector<1x1x32xf32> to vector<1x32xf32>
    %c1_47 = arith.constant 1 : index
    %c0_48 = arith.constant 0 : index
    %c0_49 = arith.constant 0 : index
    %91 = vector.load %arg4[%c1_47, %c0_48, %c0_49] : memref<2x1x32xf32, #tpu.memory_space<vmem>>, vector<1x1x32xf32>
    %92 = vector.shape_cast %91 : vector<1x1x32xf32> to vector<1x32xf32>
    %cst_50 = arith.constant dense<0.000000e+00> : vector<64xf32>
    %93 = vector.multi_reduction <add>, %88, %cst_50 [1] : vector<64x32xf32> to vector<64xf32>
    %94 = vector.shape_cast %93 : vector<64xf32> to vector<64x1xf32>
    %cst_51 = arith.constant 3.200000e+01 : f32
    %95 = vector.broadcast %cst_51 : f32 to vector<64x1xf32>
    %96 = arith.divf %94, %95 : vector<64x1xf32>
    %97 = vector.broadcast %96 : vector<64x1xf32> to vector<64x32xf32>
    %98 = arith.subf %88, %97 : vector<64x32xf32>
    %99 = arith.mulf %98, %98 : vector<64x32xf32>
    %cst_52 = arith.constant dense<0.000000e+00> : vector<64xf32>
    %100 = vector.multi_reduction <add>, %99, %cst_52 [1] : vector<64x32xf32> to vector<64xf32>
    %101 = vector.shape_cast %100 : vector<64xf32> to vector<64x1xf32>
    %cst_53 = arith.constant 3.200000e+01 : f32
    %102 = vector.broadcast %cst_53 : f32 to vector<64x1xf32>
    %103 = arith.divf %101, %102 : vector<64x1xf32>
    %104 = vector.broadcast %96 : vector<64x1xf32> to vector<64x32xf32>
    %105 = arith.subf %88, %104 : vector<64x32xf32>
    %cst_54 = arith.constant 9.99999974E-6 : f32
    %106 = vector.broadcast %cst_54 : f32 to vector<64x1xf32>
    %107 = arith.addf %103, %106 : vector<64x1xf32>
    %108 = math.rsqrt %107 : vector<64x1xf32>
    %109 = vector.broadcast %108 : vector<64x1xf32> to vector<64x32xf32>
    %110 = arith.mulf %105, %109 : vector<64x32xf32>
    %111 = vector.broadcast %90 : vector<1x32xf32> to vector<64x32xf32>
    %112 = arith.mulf %110, %111 : vector<64x32xf32>
    %113 = vector.broadcast %92 : vector<1x32xf32> to vector<64x32xf32>
    %114 = arith.addf %112, %113 : vector<64x32xf32>
    %cst_55 = arith.constant 0.000000e+00 : f32
    %115 = vector.broadcast %cst_55 : f32 to vector<64x32xf32>
    %c0_i32_56 = arith.constant 0 : i32
    %c4_i32_57 = arith.constant 4 : i32
    %116 = arith.addi %c0_i32_56, %c4_i32_57 : i32
    %c1_i32_58 = arith.constant 1 : i32
    %117 = scf.for %arg16 = %c0_i32_56 to %116 step %c1_i32_58 iter_args(%arg17 = %115) -> (vector<64x32xf32>)  : i32 {
      %c1_94 = arith.constant 1 : index
      %178 = arith.index_cast %arg16 : i32 to index
      %c0_95 = arith.constant 0 : index
      %c0_96 = arith.constant 0 : index
      %179 = vector.load %arg5[%c1_94, %178, %c0_95, %c0_96] : memref<2x4x32x24xf32, #tpu.memory_space<vmem>>, vector<1x1x32x24xf32>
      %180 = vector.shape_cast %179 : vector<1x1x32x24xf32> to vector<32x24xf32>
      %cst_97 = arith.constant dense<0.000000e+00> : vector<64x24xf32>
      %181 = tpu.matmul %114, %180, %cst_97 {dimension_numbers = #tpu.dot_dimension_numbers<[1], [0], [0], [1], [0, 0, 1, 1], [], []>} : vector<64x32xf32>, vector<32x24xf32>, vector<64x24xf32> -> vector<64x24xf32>
      %c1_98 = arith.constant 1 : index
      %182 = arith.index_cast %arg16 : i32 to index
      %c0_99 = arith.constant 0 : index
      %c0_100 = arith.constant 0 : index
      %183 = vector.load %arg6[%c1_98, %182, %c0_99, %c0_100] : memref<2x4x1x24xf32, #tpu.memory_space<vmem>>, vector<1x1x1x24xf32>
      %184 = vector.shape_cast %183 : vector<1x1x1x24xf32> to vector<1x24xf32>
      %185 = vector.broadcast %184 : vector<1x24xf32> to vector<64x24xf32>
      %186 = arith.addf %181, %185 : vector<64x24xf32>
      %187 = vector.extract_strided_slice %186 {offsets = [0, 0], sizes = [64, 8], strides = [1, 1]} : vector<64x24xf32> to vector<64x8xf32>
      %188 = vector.extract_strided_slice %186 {offsets = [0, 8], sizes = [64, 8], strides = [1, 1]} : vector<64x24xf32> to vector<64x8xf32>
      %189 = vector.extract_strided_slice %186 {offsets = [0, 16], sizes = [64, 8], strides = [1, 1]} : vector<64x24xf32> to vector<64x8xf32>
      %cst_101 = arith.constant dense<0.000000e+00> : vector<64x64xf32>
      %190 = tpu.matmul %187, %188, %cst_101 {dimension_numbers = #tpu.dot_dimension_numbers<[1], [1], [0], [0], [0, 0, 1, 0], [], []>} : vector<64x8xf32>, vector<64x8xf32>, vector<64x64xf32> -> vector<64x64xf32>
      %c1_102 = arith.constant 1 : index
      %191 = arith.index_cast %arg16 : i32 to index
      %c0_103 = arith.constant 0 : index
      %c0_104 = arith.constant 0 : index
      %192 = vector.load %arg2[%c1_102, %191, %c0_103, %c0_104] : memref<2x4x64x64xf32, #tpu.memory_space<vmem>>, vector<1x1x64x64xf32>
      %193 = vector.shape_cast %192 : vector<1x1x64x64xf32> to vector<64x64xf32>
      %194 = arith.addf %190, %193 : vector<64x64xf32>
      %cst_105 = arith.constant dense<0xFF800000> : vector<64xf32>
      %195 = vector.multi_reduction <maximumf>, %194, %cst_105 [1] : vector<64x64xf32> to vector<64xf32>
      %196 = vector.shape_cast %195 : vector<64xf32> to vector<64x1xf32>
      %197 = vector.broadcast %196 : vector<64x1xf32> to vector<64x64xf32>
      %198 = arith.subf %194, %197 : vector<64x64xf32>
      %199 = math.exp %198 : vector<64x64xf32>
      %cst_106 = arith.constant dense<0.000000e+00> : vector<64xf32>
      %200 = vector.multi_reduction <add>, %199, %cst_106 [1] : vector<64x64xf32> to vector<64xf32>
      %201 = vector.shape_cast %200 : vector<64xf32> to vector<64x1xf32>
      %202 = vector.broadcast %201 : vector<64x1xf32> to vector<64x64xf32>
      %203 = arith.divf %199, %202 : vector<64x64xf32>
      %cst_107 = arith.constant dense<0.000000e+00> : vector<64x8xf32>
      %204 = tpu.matmul %203, %189, %cst_107 {dimension_numbers = #tpu.dot_dimension_numbers<[1], [0], [0], [1], [0, 0, 1, 1], [], []>} : vector<64x64xf32>, vector<64x8xf32>, vector<64x8xf32> -> vector<64x8xf32>
      %c1_108 = arith.constant 1 : index
      %205 = arith.index_cast %arg16 : i32 to index
      %c0_109 = arith.constant 0 : index
      %c0_110 = arith.constant 0 : index
      %206 = vector.load %arg7[%c1_108, %205, %c0_109, %c0_110] : memref<2x4x8x32xf32, #tpu.memory_space<vmem>>, vector<1x1x8x32xf32>
      %207 = vector.shape_cast %206 : vector<1x1x8x32xf32> to vector<8x32xf32>
      %cst_111 = arith.constant dense<0.000000e+00> : vector<64x32xf32>
      %208 = tpu.matmul %204, %207, %cst_111 {dimension_numbers = #tpu.dot_dimension_numbers<[1], [0], [0], [1], [0, 0, 1, 1], [], []>} : vector<64x8xf32>, vector<8x32xf32>, vector<64x32xf32> -> vector<64x32xf32>
      %209 = arith.addf %arg17, %208 : vector<64x32xf32>
      scf.yield %209 : vector<64x32xf32>
    }
    %c4_i32_59 = arith.constant 4 : i32
    %118 = arith.addf %88, %117 : vector<64x32xf32>
    %c1_60 = arith.constant 1 : index
    %c0_61 = arith.constant 0 : index
    %c0_62 = arith.constant 0 : index
    %119 = vector.load %arg8[%c1_60, %c0_61, %c0_62] : memref<2x1x32xf32, #tpu.memory_space<vmem>>, vector<1x1x32xf32>
    %120 = vector.shape_cast %119 : vector<1x1x32xf32> to vector<1x32xf32>
    %121 = vector.broadcast %120 : vector<1x32xf32> to vector<64x32xf32>
    %122 = arith.addf %118, %121 : vector<64x32xf32>
    %c1_63 = arith.constant 1 : index
    %c0_64 = arith.constant 0 : index
    %c0_65 = arith.constant 0 : index
    %123 = vector.load %arg9[%c1_63, %c0_64, %c0_65] : memref<2x1x32xf32, #tpu.memory_space<vmem>>, vector<1x1x32xf32>
    %124 = vector.shape_cast %123 : vector<1x1x32xf32> to vector<1x32xf32>
    %c1_66 = arith.constant 1 : index
    %c0_67 = arith.constant 0 : index
    %c0_68 = arith.constant 0 : index
    %125 = vector.load %arg10[%c1_66, %c0_67, %c0_68] : memref<2x1x32xf32, #tpu.memory_space<vmem>>, vector<1x1x32xf32>
    %126 = vector.shape_cast %125 : vector<1x1x32xf32> to vector<1x32xf32>
    %cst_69 = arith.constant dense<0.000000e+00> : vector<64xf32>
    %127 = vector.multi_reduction <add>, %122, %cst_69 [1] : vector<64x32xf32> to vector<64xf32>
    %128 = vector.shape_cast %127 : vector<64xf32> to vector<64x1xf32>
    %cst_70 = arith.constant 3.200000e+01 : f32
    %129 = vector.broadcast %cst_70 : f32 to vector<64x1xf32>
    %130 = arith.divf %128, %129 : vector<64x1xf32>
    %131 = vector.broadcast %130 : vector<64x1xf32> to vector<64x32xf32>
    %132 = arith.subf %122, %131 : vector<64x32xf32>
    %133 = arith.mulf %132, %132 : vector<64x32xf32>
    %cst_71 = arith.constant dense<0.000000e+00> : vector<64xf32>
    %134 = vector.multi_reduction <add>, %133, %cst_71 [1] : vector<64x32xf32> to vector<64xf32>
    %135 = vector.shape_cast %134 : vector<64xf32> to vector<64x1xf32>
    %cst_72 = arith.constant 3.200000e+01 : f32
    %136 = vector.broadcast %cst_72 : f32 to vector<64x1xf32>
    %137 = arith.divf %135, %136 : vector<64x1xf32>
    %138 = vector.broadcast %130 : vector<64x1xf32> to vector<64x32xf32>
    %139 = arith.subf %122, %138 : vector<64x32xf32>
    %cst_73 = arith.constant 9.99999974E-6 : f32
    %140 = vector.broadcast %cst_73 : f32 to vector<64x1xf32>
    %141 = arith.addf %137, %140 : vector<64x1xf32>
    %142 = math.rsqrt %141 : vector<64x1xf32>
    %143 = vector.broadcast %142 : vector<64x1xf32> to vector<64x32xf32>
    %144 = arith.mulf %139, %143 : vector<64x32xf32>
    %145 = vector.broadcast %124 : vector<1x32xf32> to vector<64x32xf32>
    %146 = arith.mulf %144, %145 : vector<64x32xf32>
    %147 = vector.broadcast %126 : vector<1x32xf32> to vector<64x32xf32>
    %148 = arith.addf %146, %147 : vector<64x32xf32>
    %c1_74 = arith.constant 1 : index
    %c0_75 = arith.constant 0 : index
    %c0_76 = arith.constant 0 : index
    %149 = vector.load %arg11[%c1_74, %c0_75, %c0_76] : memref<2x32x128xf32, #tpu.memory_space<vmem>>, vector<1x32x128xf32>
    %150 = vector.shape_cast %149 : vector<1x32x128xf32> to vector<32x128xf32>
    %cst_77 = arith.constant dense<0.000000e+00> : vector<64x128xf32>
    %151 = tpu.matmul %148, %150, %cst_77 {dimension_numbers = #tpu.dot_dimension_numbers<[1], [0], [0], [1], [0, 0, 1, 1], [], []>} : vector<64x32xf32>, vector<32x128xf32>, vector<64x128xf32> -> vector<64x128xf32>
    %c1_78 = arith.constant 1 : index
    %c0_79 = arith.constant 0 : index
    %c0_80 = arith.constant 0 : index
    %152 = vector.load %arg12[%c1_78, %c0_79, %c0_80] : memref<2x1x128xf32, #tpu.memory_space<vmem>>, vector<1x1x128xf32>
    %153 = vector.shape_cast %152 : vector<1x1x128xf32> to vector<1x128xf32>
    %154 = vector.broadcast %153 : vector<1x128xf32> to vector<64x128xf32>
    %155 = arith.addf %151, %154 : vector<64x128xf32>
    %156 = arith.mulf %155, %155 : vector<64x128xf32>
    %157 = arith.mulf %155, %156 : vector<64x128xf32>
    %cst_81 = arith.constant 4.471500e-02 : f32
    %158 = vector.broadcast %cst_81 : f32 to vector<64x128xf32>
    %159 = arith.mulf %158, %157 : vector<64x128xf32>
    %160 = arith.addf %155, %159 : vector<64x128xf32>
    %cst_82 = arith.constant 0.797884583 : f32
    %161 = vector.broadcast %cst_82 : f32 to vector<64x128xf32>
    %162 = arith.mulf %161, %160 : vector<64x128xf32>
    %163 = math.tanh %162 : vector<64x128xf32>
    %cst_83 = arith.constant 1.000000e+00 : f32
    %164 = vector.broadcast %cst_83 : f32 to vector<64x128xf32>
    %165 = arith.addf %164, %163 : vector<64x128xf32>
    %cst_84 = arith.constant 5.000000e-01 : f32
    %166 = vector.broadcast %cst_84 : f32 to vector<64x128xf32>
    %167 = arith.mulf %166, %165 : vector<64x128xf32>
    %168 = arith.mulf %155, %167 : vector<64x128xf32>
    %c1_85 = arith.constant 1 : index
    %c0_86 = arith.constant 0 : index
    %c0_87 = arith.constant 0 : index
    %169 = vector.load %arg13[%c1_85, %c0_86, %c0_87] : memref<2x128x32xf32, #tpu.memory_space<vmem>>, vector<1x128x32xf32>
    %170 = vector.shape_cast %169 : vector<1x128x32xf32> to vector<128x32xf32>
    %cst_88 = arith.constant dense<0.000000e+00> : vector<64x32xf32>
    %171 = tpu.matmul %168, %170, %cst_88 {dimension_numbers = #tpu.dot_dimension_numbers<[1], [0], [0], [1], [0, 0, 1, 1], [], []>} : vector<64x128xf32>, vector<128x32xf32>, vector<64x32xf32> -> vector<64x32xf32>
    %c1_89 = arith.constant 1 : index
    %c0_90 = arith.constant 0 : index
    %c0_91 = arith.constant 0 : index
    %172 = vector.load %arg14[%c1_89, %c0_90, %c0_91] : memref<2x1x32xf32, #tpu.memory_space<vmem>>, vector<1x1x32xf32>
    %173 = vector.shape_cast %172 : vector<1x1x32xf32> to vector<1x32xf32>
    %174 = vector.broadcast %173 : vector<1x32xf32> to vector<64x32xf32>
    %175 = arith.addf %171, %174 : vector<64x32xf32>
    %176 = arith.addf %122, %175 : vector<64x32xf32>
    %c0_92 = arith.constant 0 : index
    %c0_93 = arith.constant 0 : index
    %177 = vector.load %arg15[%c0_92, %c0_93] : memref<64x32xf32, #tpu.memory_space<vmem>>, vector<64x32xf32>
    tpu.vector_store %arg15[%c0_92, %c0_93], %176 {strides = array<i32>} : memref<64x32xf32, #tpu.memory_space<vmem>>, vector<64x32xf32>,
    return
  }
  func.func @transform_0(%arg0: i32) -> (i32, i32) {
    %c0_i32 = arith.constant 0 : i32
    %c0_i32_0 = arith.constant 0 : i32
    return %arg0, %c0_i32 : i32, i32
  }
  func.func @transform_1(%arg0: i32) -> (i32, i32, i32, i32) {
    %c0_i32 = arith.constant 0 : i32
    %c0_i32_0 = arith.constant 0 : i32
    %c0_i32_1 = arith.constant 0 : i32
    %c0_i32_2 = arith.constant 0 : i32
    %c0_i32_3 = arith.constant 0 : i32
    return %c0_i32, %c0_i32_0, %c0_i32_1, %c0_i32_2 : i32, i32, i32, i32
  }
  func.func @transform_2(%arg0: i32) -> (i32, i32, i32) {
    %c0_i32 = arith.constant 0 : i32
    %c0_i32_0 = arith.constant 0 : i32
    %c0_i32_1 = arith.constant 0 : i32
    %c0_i32_2 = arith.constant 0 : i32
    return %c0_i32, %c0_i32_0, %c0_i32_1 : i32, i32, i32
  }
  func.func @transform_3(%arg0: i32) -> (i32, i32, i32) {
    %c0_i32 = arith.constant 0 : i32
    %c0_i32_0 = arith.constant 0 : i32
    %c0_i32_1 = arith.constant 0 : i32
    %c0_i32_2 = arith.constant 0 : i32
    return %c0_i32, %c0_i32_0, %c0_i32_1 : i32, i32, i32
  }
  func.func @transform_4(%arg0: i32) -> (i32, i32, i32, i32) {
    %c0_i32 = arith.constant 0 : i32
    %c0_i32_0 = arith.constant 0 : i32
    %c0_i32_1 = arith.constant 0 : i32
    %c0_i32_2 = arith.constant 0 : i32
    %c0_i32_3 = arith.constant 0 : i32
    return %c0_i32, %c0_i32_0, %c0_i32_1, %c0_i32_2 : i32, i32, i32, i32
  }
  func.func @transform_5(%arg0: i32) -> (i32, i32, i32, i32) {
    %c0_i32 = arith.constant 0 : i32
    %c0_i32_0 = arith.constant 0 : i32
    %c0_i32_1 = arith.constant 0 : i32
    %c0_i32_2 = arith.constant 0 : i32
    %c0_i32_3 = arith.constant 0 : i32
    return %c0_i32, %c0_i32_0, %c0_i32_1, %c0_i32_2 : i32, i32, i32, i32
  }
  func.func @transform_6(%arg0: i32) -> (i32, i32, i32, i32) {
    %c0_i32 = arith.constant 0 : i32
    %c0_i32_0 = arith.constant 0 : i32
    %c0_i32_1 = arith.constant 0 : i32
    %c0_i32_2 = arith.constant 0 : i32
    %c0_i32_3 = arith.constant 0 : i32
    return %c0_i32, %c0_i32_0, %c0_i32_1, %c0_i32_2 : i32, i32, i32, i32
  }
  func.func @transform_7(%arg0: i32) -> (i32, i32, i32) {
    %c0_i32 = arith.constant 0 : i32
    %c0_i32_0 = arith.constant 0 : i32
    %c0_i32_1 = arith.constant 0 : i32
    %c0_i32_2 = arith.constant 0 : i32
    return %c0_i32, %c0_i32_0, %c0_i32_1 : i32, i32, i32
  }
  func.func @transform_8(%arg0: i32) -> (i32, i32, i32) {
    %c0_i32 = arith.constant 0 : i32
    %c0_i32_0 = arith.constant 0 : i32
    %c0_i32_1 = arith.constant 0 : i32
    %c0_i32_2 = arith.constant 0 : i32
    return %c0_i32, %c0_i32_0, %c0_i32_1 : i32, i32, i32
  }
  func.func @transform_9(%arg0: i32) -> (i32, i32, i32) {
    %c0_i32 = arith.constant 0 : i32
    %c0_i32_0 = arith.constant 0 : i32
    %c0_i32_1 = arith.constant 0 : i32
    %c0_i32_2 = arith.constant 0 : i32
    return %c0_i32, %c0_i32_0, %c0_i32_1 : i32, i32, i32
  }
  func.func @transform_10(%arg0: i32) -> (i32, i32, i32) {
    %c0_i32 = arith.constant 0 : i32
    %c0_i32_0 = arith.constant 0 : i32
    %c0_i32_1 = arith.constant 0 : i32
    %c0_i32_2 = arith.constant 0 : i32
    return %c0_i32, %c0_i32_0, %c0_i32_1 : i32, i32, i32
  }
  func.func @transform_11(%arg0: i32) -> (i32, i32, i32) {
    %c0_i32 = arith.constant 0 : i32
    %c0_i32_0 = arith.constant 0 : i32
    %c0_i32_1 = arith.constant 0 : i32
    %c0_i32_2 = arith.constant 0 : i32
    return %c0_i32, %c0_i32_0, %c0_i32_1 : i32, i32, i32
  }
  func.func @transform_12(%arg0: i32) -> (i32, i32, i32) {
    %c0_i32 = arith.constant 0 : i32
    %c0_i32_0 = arith.constant 0 : i32
    %c0_i32_1 = arith.constant 0 : i32
    %c0_i32_2 = arith.constant 0 : i32
    return %c0_i32, %c0_i32_0, %c0_i32_1 : i32, i32, i32
  }
  func.func @transform_13(%arg0: i32) -> (i32, i32, i32) {
    %c0_i32 = arith.constant 0 : i32
    %c0_i32_0 = arith.constant 0 : i32
    %c0_i32_1 = arith.constant 0 : i32
    %c0_i32_2 = arith.constant 0 : i32
    return %c0_i32, %c0_i32_0, %c0_i32_1 : i32, i32, i32
  }
  func.func @transform_14(%arg0: i32) -> (i32, i32) {
    %c0_i32 = arith.constant 0 : i32
    %c0_i32_0 = arith.constant 0 : i32
    return %arg0, %c0_i32 : i32, i32
  }
}

</mosaic_0001>

<llo_original>
// kernel: basic_layer_forward.1
$region0: #{basic_layer_forward.1}
  #allocation0 [shape = 'u32[]', space=smem, size = 0x4, offset = 0x4, fixed_abs, tag = 'smem constant byte address 0x4 - core index']
  #allocation1 [shape = 'u32[144,128]{1,0:T(1,128)}', space=vmem, size = 0x12000, scoped, tag = 'internal scratch']
  %s0 = inlined_call_operand.vmem [shape: f32[128,32], index: 0, kind: input, shape index: {}]
  %s1 = inlined_call_operand.vmem [shape: f32[2,4,64,64], index: 1, kind: input, shape index: {}]
  %s2 = inlined_call_operand.vmem [shape: f32[2,1,32], index: 2, kind: input, shape index: {}]
  %s3 = inlined_call_operand.vmem [shape: f32[2,1,32], index: 3, kind: input, shape index: {}]
  %s4 = inlined_call_operand.vmem [shape: f32[2,4,32,24], index: 4, kind: input, shape index: {}]
  %s5 = inlined_call_operand.vmem [shape: f32[2,4,1,24], index: 5, kind: input, shape index: {}]
  %s6 = inlined_call_operand.vmem [shape: f32[2,4,8,32], index: 6, kind: input, shape index: {}]
  %s7 = inlined_call_operand.vmem [shape: f32[2,1,32], index: 7, kind: input, shape index: {}]
  %s8 = inlined_call_operand.vmem [shape: f32[2,1,32], index: 8, kind: input, shape index: {}]
  %s9 = inlined_call_operand.vmem [shape: f32[2,1,32], index: 9, kind: input, shape index: {}]
  %s10 = inlined_call_operand.vmem [shape: f32[2,32,128], index: 10, kind: input, shape index: {}]
  %s11 = inlined_call_operand.vmem [shape: f32[2,1,128], index: 11, kind: input, shape index: {}]
  %s12 = inlined_call_operand.vmem [shape: f32[2,128,32], index: 12, kind: input, shape index: {}]
  %s13 = inlined_call_operand.vmem [shape: f32[2,1,32], index: 13, kind: input, shape index: {}]
  %s14 = inlined_call_operand.vmem [shape: f32[128,32], index: 14, kind: output, shape index: {}]
  %s15 = sld [smem:[#allocation0]]
  $region103: #{basic_layer_forward.1} parent=0
    _
  %s17 = ssub.s32 1, %s15
  %s18 = scalar_select 0, %s17, %s15
  loop: start=0, step=1, limit=4
  $region2: #{basic_layer_forward.1} parent=0 // loop_pre_header
    _
  $region3: #{basic_layer_forward.1} parent=0 // loop_header
    %s20 = sphi 0, %s24
    %p21 = scmp.ge.s32.totalorder %s20, 4
    %s30 = sphi 0, %s32
    %s33 = sphi 0, %s30
    %s34 = sphi 0, %s33
    %s50 = sphi 0, %s34
    %s54 = sphi 0, %s54
    %s56 = sphi 0, %s54
    %s57 = sphi 0, %s56
    %s71 = sphi 0, %s57
    %s75 = sphi 0, %s75
    %s77 = sphi 0, %s75
    %s78 = sphi 0, %s77
    %s92 = sphi 0, %s78
    %s96 = sphi 0, %s96
    %s98 = sphi 0, %s96
    %s99 = sphi 0, %s98
    %s113 = sphi 0, %s99
    %s117 = sphi 0, %s117
    %s119 = sphi 0, %s117
    %s120 = sphi 0, %s119
    %s134 = sphi 0, %s120
    %s138 = sphi 0, %s138
    %s140 = sphi 0, %s138
    %s141 = sphi 0, %s140
    %s155 = sphi 0, %s141
    %s159 = sphi 0, %s159
    %s161 = sphi 0, %s159
    %s162 = sphi 0, %s161
    %s176 = sphi 0, %s162
    %s180 = sphi 0, %s180
    %s182 = sphi 0, %s180
    %s183 = sphi 0, %s182
    %s197 = sphi 0, %s183
    %s201 = sphi 0, %s201
    %s203 = sphi 0, %s201
    %s204 = sphi 0, %s203
    %s218 = sphi 0, %s204
    %s222 = sphi 0, %s222
    %s224 = sphi 0, %s222
    %s225 = sphi 0, %s224
    %s239 = sphi 0, %s225
    %s243 = sphi 0, %s243
    %s245 = sphi 0, %s243
    %s246 = sphi 0, %s245
    %s260 = sphi 0, %s246
    %s264 = sphi 0, %s264
    %s266 = sphi 0, %s264
    %s267 = sphi 0, %s266
    %s281 = sphi 0, %s267
    %s285 = sphi 0, %s285
    %s287 = sphi 0, %s285
    %s288 = sphi 0, %s287
    %s302 = sphi 0, %s288
    %s306 = sphi 0, %s306
    %s308 = sphi 0, %s306
    %s309 = sphi 0, %s308
    %s323 = sphi 0, %s309
    %s329 = sphi 0, %s331
    %s332 = sphi 0, %s329
    %s333 = sphi 0, %s332
    %s349 = sphi 0, %s333
  $region4: #{basic_layer_forward.1} parent=0 // loop_header_branch
    %23 = sbr.rel (%p21) target = $region8
  $region5: #{basic_layer_forward.1} parent=0 // loop_body
    %s25 = ssub.s32 %s20, 1
    %s26 = ssub.s32 %s20, 2
    %s27 = sadd.s32 %s20, 1
    %s28 = ssub.s32 %s20, %s27
    %p29 = scmp.eq.s32.totalorder %s28, 0
    %s31 = sadd.s32 %s30, 1
    %s32 = scalar_select %p29, %s30, %s31
    %p35 = pneg %p29
    %p36 = scmp.eq.s32.totalorder %s20, 1
    %p37 = por %p35, %p36
    %p38 = scmp.ne.s32.totalorder %s30, %s33
    %p39 = scmp.eq.s32.totalorder %s20, 0
    %p40 = por %p38, %p39
    %p41 = scmp.ne.s32.totalorder %s30, %s33
    %p42 = scmp.eq.s32.totalorder %s25, 1
    %p43 = por %p41, %p42
    %p44 = scmp.ne.s32.totalorder %s33, %s34
    %p45 = scmp.eq.s32.totalorder %s25, 0
    %p46 = por %p44, %p45
    %p47 = scmp.ne.s32.totalorder %s33, %s34
    %p48 = scmp.eq.s32.totalorder %s26, 1
    %p49 = por %p47, %p48
    %p51 = scmp.ne.s32.totalorder %s34, %s50
    %p52 = scmp.eq.s32.totalorder %s26, 0
    %p53 = por %p51, %p52
    %s55 = sadd.s32 %s54, 1
    %p58 = scmp.eq.s32.totalorder %s20, 1
    %p59 = scmp.ne.s32.totalorder %s54, %s56
    %p60 = scmp.eq.s32.totalorder %s20, 0
    %p61 = por %p59, %p60
    %p62 = scmp.ne.s32.totalorder %s54, %s56
    %p63 = scmp.eq.s32.totalorder %s25, 1
    %p64 = por %p62, %p63
    %p65 = scmp.ne.s32.totalorder %s56, %s57
    %p66 = scmp.eq.s32.totalorder %s25, 0
    %p67 = por %p65, %p66
    %p68 = scmp.ne.s32.totalorder %s56, %s57
    %p69 = scmp.eq.s32.totalorder %s26, 1
    %p70 = por %p68, %p69
    %p72 = scmp.ne.s32.totalorder %s57, %s71
    %p73 = scmp.eq.s32.totalorder %s26, 0
    %p74 = por %p72, %p73
    %s76 = sadd.s32 %s75, 1
    %p79 = scmp.eq.s32.totalorder %s20, 1
    %p80 = scmp.ne.s32.totalorder %s75, %s77
    %p81 = scmp.eq.s32.totalorder %s20, 0
    %p82 = por %p80, %p81
    %p83 = scmp.ne.s32.totalorder %s75, %s77
    %p84 = scmp.eq.s32.totalorder %s25, 1
    %p85 = por %p83, %p84
    %p86 = scmp.ne.s32.totalorder %s77, %s78
    %p87 = scmp.eq.s32.totalorder %s25, 0
    %p88 = por %p86, %p87
    %p89 = scmp.ne.s32.totalorder %s77, %s78
    %p90 = scmp.eq.s32.totalorder %s26, 1
    %p91 = por %p89, %p90
    %p93 = scmp.ne.s32.totalorder %s78, %s92
    %p94 = scmp.eq.s32.totalorder %s26, 0
    %p95 = por %p93, %p94
    %s97 = sadd.s32 %s96, 1
    %p100 = scmp.eq.s32.totalorder %s20, 1
    %p101 = scmp.ne.s32.totalorder %s96, %s98
    %p102 = scmp.eq.s32.totalorder %s20, 0
    %p103 = por %p101, %p102
    %p104 = scmp.ne.s32.totalorder %s96, %s98
    %p105 = scmp.eq.s32.totalorder %s25, 1
    %p106 = por %p104, %p105
    %p107 = scmp.ne.s32.totalorder %s98, %s99
    %p108 = scmp.eq.s32.totalorder %s25, 0
    %p109 = por %p107, %p108
    %p110 = scmp.ne.s32.totalorder %s98, %s99
    %p111 = scmp.eq.s32.totalorder %s26, 1
    %p112 = por %p110, %p111
    %p114 = scmp.ne.s32.totalorder %s99, %s113
    %p115 = scmp.eq.s32.totalorder %s26, 0
    %p116 = por %p114, %p115
    %s118 = sadd.s32 %s117, 1
    %p121 = scmp.eq.s32.totalorder %s20, 1
    %p122 = scmp.ne.s32.totalorder %s117, %s119
    %p123 = scmp.eq.s32.totalorder %s20, 0
    %p124 = por %p122, %p123
    %p125 = scmp.ne.s32.totalorder %s117, %s119
    %p126 = scmp.eq.s32.totalorder %s25, 1
    %p127 = por %p125, %p126
    %p128 = scmp.ne.s32.totalorder %s119, %s120
    %p129 = scmp.eq.s32.totalorder %s25, 0
    %p130 = por %p128, %p129
    %p131 = scmp.ne.s32.totalorder %s119, %s120
    %p132 = scmp.eq.s32.totalorder %s26, 1
    %p133 = por %p131, %p132
    %p135 = scmp.ne.s32.totalorder %s120, %s134
    %p136 = scmp.eq.s32.totalorder %s26, 0
    %p137 = por %p135, %p136
    %s139 = sadd.s32 %s138, 1
    %p142 = scmp.eq.s32.totalorder %s20, 1
    %p143 = scmp.ne.s32.totalorder %s138, %s140
    %p144 = scmp.eq.s32.totalorder %s20, 0
    %p145 = por %p143, %p144
    %p146 = scmp.ne.s32.totalorder %s138, %s140
    %p147 = scmp.eq.s32.totalorder %s25, 1
    %p148 = por %p146, %p147
    %p149 = scmp.ne.s32.totalorder %s140, %s141
    %p150 = scmp.eq.s32.totalorder %s25, 0
    %p151 = por %p149, %p150
    %p152 = scmp.ne.s32.totalorder %s140, %s141
    %p153 = scmp.eq.s32.totalorder %s26, 1
    %p154 = por %p152, %p153
    %p156 = scmp.ne.s32.totalorder %s141, %s155
    %p157 = scmp.eq.s32.totalorder %s26, 0
    %p158 = por %p156, %p157
    %s160 = sadd.s32 %s159, 1
    %p163 = scmp.eq.s32.totalorder %s20, 1
    %p164 = scmp.ne.s32.totalorder %s159, %s161
    %p165 = scmp.eq.s32.totalorder %s20, 0
    %p166 = por %p164, %p165
    %p167 = scmp.ne.s32.totalorder %s159, %s161
    %p168 = scmp.eq.s32.totalorder %s25, 1
    %p169 = por %p167, %p168
    %p170 = scmp.ne.s32.totalorder %s161, %s162
    %p171 = scmp.eq.s32.totalorder %s25, 0
    %p172 = por %p170, %p171
    %p173 = scmp.ne.s32.totalorder %s161, %s162
    %p174 = scmp.eq.s32.totalorder %s26, 1
    %p175 = por %p173, %p174
    %p177 = scmp.ne.s32.totalorder %s162, %s176
    %p178 = scmp.eq.s32.totalorder %s26, 0
    %p179 = por %p177, %p178
    %s181 = sadd.s32 %s180, 1
    %p184 = scmp.eq.s32.totalorder %s20, 1
    %p185 = scmp.ne.s32.totalorder %s180, %s182
    %p186 = scmp.eq.s32.totalorder %s20, 0
    %p187 = por %p185, %p186
    %p188 = scmp.ne.s32.totalorder %s180, %s182
    %p189 = scmp.eq.s32.totalorder %s25, 1
    %p190 = por %p188, %p189
    %p191 = scmp.ne.s32.totalorder %s182, %s183
    %p192 = scmp.eq.s32.totalorder %s25, 0
    %p193 = por %p191, %p192
    %p194 = scmp.ne.s32.totalorder %s182, %s183
    %p195 = scmp.eq.s32.totalorder %s26, 1
    %p196 = por %p194, %p195
    %p198 = scmp.ne.s32.totalorder %s183, %s197
    %p199 = scmp.eq.s32.totalorder %s26, 0
    %p200 = por %p198, %p199
    %s202 = sadd.s32 %s201, 1
    %p205 = scmp.eq.s32.totalorder %s20, 1
    %p206 = scmp.ne.s32.totalorder %s201, %s203
    %p207 = scmp.eq.s32.totalorder %s20, 0
    %p208 = por %p206, %p207
    %p209 = scmp.ne.s32.totalorder %s201, %s203
    %p210 = scmp.eq.s32.totalorder %s25, 1
    %p211 = por %p209, %p210
    %p212 = scmp.ne.s32.totalorder %s203, %s204
    %p213 = scmp.eq.s32.totalorder %s25, 0
    %p214 = por %p212, %p213
    %p215 = scmp.ne.s32.totalorder %s203, %s204
    %p216 = scmp.eq.s32.totalorder %s26, 1
    %p217 = por %p215, %p216
    %p219 = scmp.ne.s32.totalorder %s204, %s218
    %p220 = scmp.eq.s32.totalorder %s26, 0
    %p221 = por %p219, %p220
    %s223 = sadd.s32 %s222, 1
    %p226 = scmp.eq.s32.totalorder %s20, 1
    %p227 = scmp.ne.s32.totalorder %s222, %s224
    %p228 = scmp.eq.s32.totalorder %s20, 0
    %p229 = por %p227, %p228
    %p230 = scmp.ne.s32.totalorder %s222, %s224
    %p231 = scmp.eq.s32.totalorder %s25, 1
    %p232 = por %p230, %p231
    %p233 = scmp.ne.s32.totalorder %s224, %s225
    %p234 = scmp.eq.s32.totalorder %s25, 0
    %p235 = por %p233, %p234
    %p236 = scmp.ne.s32.totalorder %s224, %s225
    %p237 = scmp.eq.s32.totalorder %s26, 1
    %p238 = por %p236, %p237
    %p240 = scmp.ne.s32.totalorder %s225, %s239
    %p241 = scmp.eq.s32.totalorder %s26, 0
    %p242 = por %p240, %p241
    %s244 = sadd.s32 %s243, 1
    %p247 = scmp.eq.s32.totalorder %s20, 1
    %p248 = scmp.ne.s32.totalorder %s243, %s245
    %p249 = scmp.eq.s32.totalorder %s20, 0
    %p250 = por %p248, %p249
    %p251 = scmp.ne.s32.totalorder %s243, %s245
    %p252 = scmp.eq.s32.totalorder %s25, 1
    %p253 = por %p251, %p252
    %p254 = scmp.ne.s32.totalorder %s245, %s246
    %p255 = scmp.eq.s32.totalorder %s25, 0
    %p256 = por %p254, %p255
    %p257 = scmp.ne.s32.totalorder %s245, %s246
    %p258 = scmp.eq.s32.totalorder %s26, 1
    %p259 = por %p257, %p258
    %p261 = scmp.ne.s32.totalorder %s246, %s260
    %p262 = scmp.eq.s32.totalorder %s26, 0
    %p263 = por %p261, %p262
    %s265 = sadd.s32 %s264, 1
    %p268 = scmp.eq.s32.totalorder %s20, 1
    %p269 = scmp.ne.s32.totalorder %s264, %s266
    %p270 = scmp.eq.s32.totalorder %s20, 0
    %p271 = por %p269, %p270
    %p272 = scmp.ne.s32.totalorder %s264, %s266
    %p273 = scmp.eq.s32.totalorder %s25, 1
    %p274 = por %p272, %p273
    %p275 = scmp.ne.s32.totalorder %s266, %s267
    %p276 = scmp.eq.s32.totalorder %s25, 0
    %p277 = por %p275, %p276
    %p278 = scmp.ne.s32.totalorder %s266, %s267
    %p279 = scmp.eq.s32.totalorder %s26, 1
    %p280 = por %p278, %p279
    %p282 = scmp.ne.s32.totalorder %s267, %s281
    %p283 = scmp.eq.s32.totalorder %s26, 0
    %p284 = por %p282, %p283
    %s286 = sadd.s32 %s285, 1
    %p289 = scmp.eq.s32.totalorder %s20, 1
    %p290 = scmp.ne.s32.totalorder %s285, %s287
    %p291 = scmp.eq.s32.totalorder %s20, 0
    %p292 = por %p290, %p291
    %p293 = scmp.ne.s32.totalorder %s285, %s287
    %p294 = scmp.eq.s32.totalorder %s25, 1
    %p295 = por %p293, %p294
    %p296 = scmp.ne.s32.totalorder %s287, %s288
    %p297 = scmp.eq.s32.totalorder %s25, 0
    %p298 = por %p296, %p297
    %p299 = scmp.ne.s32.totalorder %s287, %s288
    %p300 = scmp.eq.s32.totalorder %s26, 1
    %p301 = por %p299, %p300
    %p303 = scmp.ne.s32.totalorder %s288, %s302
    %p304 = scmp.eq.s32.totalorder %s26, 0
    %p305 = por %p303, %p304
    %s307 = sadd.s32 %s306, 1
    %p310 = scmp.eq.s32.totalorder %s20, 1
    %p311 = scmp.ne.s32.totalorder %s306, %s308
    %p312 = scmp.eq.s32.totalorder %s20, 0
    %p313 = por %p311, %p312
    %p314 = scmp.ne.s32.totalorder %s306, %s308
    %p315 = scmp.eq.s32.totalorder %s25, 1
    %p316 = por %p314, %p315
    %p317 = scmp.ne.s32.totalorder %s308, %s309
    %p318 = scmp.eq.s32.totalorder %s25, 0
    %p319 = por %p317, %p318
    %p320 = scmp.ne.s32.totalorder %s308, %s309
    %p321 = scmp.eq.s32.totalorder %s26, 1
    %p322 = por %p320, %p321
    %p324 = scmp.ne.s32.totalorder %s309, %s323
    %p325 = scmp.eq.s32.totalorder %s26, 0
    %p326 = por %p324, %p325
    %s327 = ssub.s32 %s20, %s27
    %p328 = scmp.eq.s32.totalorder %s327, 0
    %s330 = sadd.s32 %s329, 1
    %s331 = scalar_select %p328, %s329, %s330
    %p334 = pneg %p328
    %p335 = scmp.eq.s32.totalorder %s20, 1
    %p336 = por %p334, %p335
    %p337 = scmp.ne.s32.totalorder %s329, %s332
    %p338 = scmp.eq.s32.totalorder %s20, 0
    %p339 = por %p337, %p338
    %p340 = scmp.ne.s32.totalorder %s329, %s332
    %p341 = scmp.eq.s32.totalorder %s25, 1
    %p342 = por %p340, %p341
    %p343 = scmp.ne.s32.totalorder %s332, %s333
    %p344 = scmp.eq.s32.totalorder %s25, 0
    %p345 = por %p343, %p344
    %p346 = scmp.ne.s32.totalorder %s332, %s333
    %p347 = scmp.eq.s32.totalorder %s26, 1
    %p348 = por %p346, %p347
    %p350 = scmp.ne.s32.totalorder %s333, %s349
    %p351 = scmp.eq.s32.totalorder %s26, 0
    %p352 = por %p350, %p351
    %p353 = scmp.le.s32.totalorder 1, %s20
    %p354 = scmp.lt.s32.totalorder %s20, 3
    %p355 = pnand %p353, %p354
    %p356 = pneg %p355
    // Predicated region
    $region9: #{basic_layer_forward.1} parent=5 // pred_check
      _
    $region10: #{basic_layer_forward.1} parent=5 // pred_check_branch
      %358 = sbr.rel (%p355) target = $region12
    $region11: #{basic_layer_forward.1} parent=5 // pred_region
      %s359 = ssub.s32 %s20, 1
      // Predicated region
      $region13: #{basic_layer_forward.1} parent=11 // pred_check
        %p360 = pneg %p67
      $region14: #{basic_layer_forward.1} parent=11 // pred_check_branch
        %362 = sbr.rel (%p360) target = $region16
      $region15: #{basic_layer_forward.1} parent=11 // pred_region
        _
      $region16: #{basic_layer_forward.1} parent=11 // pred_fallthru
        _
      // Predicated region
      $region17: #{basic_layer_forward.1} parent=11 // pred_check
        %p363 = pneg %p88
      $region18: #{basic_layer_forward.1} parent=11 // pred_check_branch
        %365 = sbr.rel (%p363) target = $region20
      $region19: #{basic_layer_forward.1} parent=11 // pred_region
        _
      $region20: #{basic_layer_forward.1} parent=11 // pred_fallthru
        _
      // Predicated region
      $region21: #{basic_layer_forward.1} parent=11 // pred_check
        %p366 = pneg %p109
      $region22: #{basic_layer_forward.1} parent=11 // pred_check_branch
        %368 = sbr.rel (%p366) target = $region24
      $region23: #{basic_layer_forward.1} parent=11 // pred_region
        _
      $region24: #{basic_layer_forward.1} parent=11 // pred_fallthru
        _
      // Predicated region
      $region25: #{basic_layer_forward.1} parent=11 // pred_check
        %p369 = pneg %p130
      $region26: #{basic_layer_forward.1} parent=11 // pred_check_branch
        %371 = sbr.rel (%p369) target = $region28
      $region27: #{basic_layer_forward.1} parent=11 // pred_region
        _
      $region28: #{basic_layer_forward.1} parent=11 // pred_fallthru
        _
      // Predicated region
      $region29: #{basic_layer_forward.1} parent=11 // pred_check
        %p372 = pneg %p151
      $region30: #{basic_layer_forward.1} parent=11 // pred_check_branch
        %374 = sbr.rel (%p372) target = $region32
      $region31: #{basic_layer_forward.1} parent=11 // pred_region
        _
      $region32: #{basic_layer_forward.1} parent=11 // pred_fallthru
        _
      // Predicated region
      $region33: #{basic_layer_forward.1} parent=11 // pred_check
        %p375 = pneg %p172
      $region34: #{basic_layer_forward.1} parent=11 // pred_check_branch
        %377 = sbr.rel (%p375) target = $region36
      $region35: #{basic_layer_forward.1} parent=11 // pred_region
        _
      $region36: #{basic_layer_forward.1} parent=11 // pred_fallthru
        _
      // Predicated region
      $region37: #{basic_layer_forward.1} parent=11 // pred_check
        %p378 = pneg %p193
      $region38: #{basic_layer_forward.1} parent=11 // pred_check_branch
        %380 = sbr.rel (%p378) target = $region40
      $region39: #{basic_layer_forward.1} parent=11 // pred_region
        _
      $region40: #{basic_layer_forward.1} parent=11 // pred_fallthru
        _
      // Predicated region
      $region41: #{basic_layer_forward.1} parent=11 // pred_check
        %p381 = pneg %p214
      $region42: #{basic_layer_forward.1} parent=11 // pred_check_branch
        %383 = sbr.rel (%p381) target = $region44
      $region43: #{basic_layer_forward.1} parent=11 // pred_region
        _
      $region44: #{basic_layer_forward.1} parent=11 // pred_fallthru
        _
      // Predicated region
      $region45: #{basic_layer_forward.1} parent=11 // pred_check
        %p384 = pneg %p235
      $region46: #{basic_layer_forward.1} parent=11 // pred_check_branch
        %386 = sbr.rel (%p384) target = $region48
      $region47: #{basic_layer_forward.1} parent=11 // pred_region
        _
      $region48: #{basic_layer_forward.1} parent=11 // pred_fallthru
        _
      // Predicated region
      $region49: #{basic_layer_forward.1} parent=11 // pred_check
        %p387 = pneg %p256
      $region50: #{basic_layer_forward.1} parent=11 // pred_check_branch
        %389 = sbr.rel (%p387) target = $region52
      $region51: #{basic_layer_forward.1} parent=11 // pred_region
        _
      $region52: #{basic_layer_forward.1} parent=11 // pred_fallthru
        _
      // Predicated region
      $region53: #{basic_layer_forward.1} parent=11 // pred_check
        %p390 = pneg %p277
      $region54: #{basic_layer_forward.1} parent=11 // pred_check_branch
        %392 = sbr.rel (%p390) target = $region56
      $region55: #{basic_layer_forward.1} parent=11 // pred_region
        _
      $region56: #{basic_layer_forward.1} parent=11 // pred_fallthru
        _
      // Predicated region
      $region57: #{basic_layer_forward.1} parent=11 // pred_check
        %p393 = pneg %p298
      $region58: #{basic_layer_forward.1} parent=11 // pred_check_branch
        %395 = sbr.rel (%p393) target = $region60
      $region59: #{basic_layer_forward.1} parent=11 // pred_region
        _
      $region60: #{basic_layer_forward.1} parent=11 // pred_fallthru
        _
      // Predicated region
      $region61: #{basic_layer_forward.1} parent=11 // pred_check
        %p396 = pneg %p319
      $region62: #{basic_layer_forward.1} parent=11 // pred_check_branch
        %398 = sbr.rel (%p396) target = $region64
      $region63: #{basic_layer_forward.1} parent=11 // pred_region
        _
      $region64: #{basic_layer_forward.1} parent=11 // pred_fallthru
        _
    $region12: #{basic_layer_forward.1} parent=5 // pred_fallthru
      _
    %p399 = scmp.lt.s32.totalorder %s20, 2
    // Predicated region
    $region65: #{basic_layer_forward.1} parent=5 // pred_check
      %p400 = pneg %p399
    $region66: #{basic_layer_forward.1} parent=5 // pred_check_branch
      %402 = sbr.rel (%p400) target = $region68
    $region67: #{basic_layer_forward.1} parent=5 // pred_region
      // Predicated region
      $region69: #{basic_layer_forward.1} parent=67 // pred_check
        %p403 = pneg %p40
      $region70: #{basic_layer_forward.1} parent=67 // pred_check_branch
        %405 = sbr.rel (%p403) target = $region72
      $region71: #{basic_layer_forward.1} parent=67 // pred_region
        %s406 = smul.u32 8, %s20
        %p407 = scmp.lt.s32.totalorder %s406, 15
        %s408 = scalar_select %p407, %s406, 15
        %s409 = smul.addr %s408, 8
        %s410 = scalar_lea.vmem %s0, %s409
        %s411 = smul.u32 8, %s20
      $region72: #{basic_layer_forward.1} parent=67 // pred_fallthru
        _
    $region68: #{basic_layer_forward.1} parent=5 // pred_fallthru
      _
    %p412 = scmp.le.s32.totalorder 1, %s20
    %p413 = scmp.lt.s32.totalorder %s20, 3
    %p414 = pnand %p412, %p413
    %p415 = pneg %p414
    // Predicated region
    $region73: #{basic_layer_forward.1} parent=5 // pred_check
      _
    $region74: #{basic_layer_forward.1} parent=5 // pred_check_branch
      %417 = sbr.rel (%p414) target = $region76
    $region75: #{basic_layer_forward.1} parent=5 // pred_region
      %s418 = ssub.s32 %s20, 1
      %s419 = smul.u32 8, %s25
      %p420 = scmp.lt.s32.totalorder %s419, 15
      %s421 = scalar_select %p420, %s419, 15
      %s422 = smul.addr %s421, 8
      %s423 = scalar_lea.vmem %s0, %s422
      %p424 = pneg %p46
      %p425 = pneg %p43
      %p426 = pneg %p67
      %p427 = pneg %p64
      %p428 = pneg %p88
      %p429 = pneg %p85
      %p430 = pneg %p109
      %p431 = pneg %p106
      %p432 = pneg %p130
      %p433 = pneg %p127
      %p434 = pneg %p151
      %p435 = pneg %p148
      %p436 = pneg %p172
      %p437 = pneg %p169
      %p438 = pneg %p193
      %p439 = pneg %p190
      %p440 = pneg %p214
      %p441 = pneg %p211
      %p442 = pneg %p235
      %p443 = pneg %p232
      %p444 = pneg %p256
      %p445 = pneg %p253
      %p446 = pneg %p277
      %p447 = pneg %p274
      %p448 = pneg %p298
      %p449 = pneg %p295
      %p450 = pneg %p319
      %p451 = pneg %p316
      %p452 = pneg %p345
      %p453 = pneg %p342
      %s454 = smul.u32 8, %s25
      %p455 = scmp.lt.s32.totalorder %s454, 15
      %s456 = scalar_select %p455, %s454, 15
      %s457 = smul.addr %s456, 8
      %s458 = scalar_lea.vmem %s14, %s457
      %s459 = smul.u32 8, %s25
      %p460 = scmp.lt.s32.totalorder %s459, 15
      %s461 = scalar_select %p460, %s459, 15
      %s462 = smul.addr %s461, 8
      %s463 = scalar_lea.vmem %s0, %s462
      %s464 = smul.u32 8, %s25
      %s465 = smul.u32 8, %s25
      %p466 = scmp.lt.s32.totalorder %s465, 15
      %s467 = scalar_select %p466, %s465, 15
      %s468 = smul.addr %s467, 8
      %s469 = scalar_lea.vmem %s14, %s468
      %s470 = smul.u32 8, %s25
      %v471 = vld [vmem:[%s463] sm:$0xff]
      %v472 = vld [vmem:[%s463 + $0x8] sm:$0xff]
      %v473 = vld [vmem:[%s463 + $0x10] sm:$0xff]
      %v474 = vld [vmem:[%s463 + $0x18] sm:$0xff]
      %v475 = vld [vmem:[%s463 + $0x20] sm:$0xff]
      %v476 = vld [vmem:[%s463 + $0x28] sm:$0xff]
      %v477 = vld [vmem:[%s463 + $0x30] sm:$0xff]
      %v478 = vld [vmem:[%s463 + $0x38] sm:$0xff]
      %v479 = vld [vmem:[%s2] sm:$0x1]
      %v480 = vld [vmem:[%s3] sm:$0x1]
      %vm481 = vcmask 261120
      %v482 = vsel %vm481, %v471, 0.0
      %483 = vadd.xlane.f32.xlu0 %v482
      %v484 = vpop.xlane.xlu0 %483
      %v485 = vsel %vm481, %v472, 0.0
      %486 = vadd.xlane.f32.xlu0 %v485
      %v487 = vpop.xlane.xlu0 %486
      %v488 = vsel %vm481, %v473, 0.0
      %489 = vadd.xlane.f32.xlu0 %v488
      %v490 = vpop.xlane.xlu0 %489
      %v491 = vsel %vm481, %v474, 0.0
      %492 = vadd.xlane.f32.xlu0 %v491
      %v493 = vpop.xlane.xlu0 %492
      %v494 = vsel %vm481, %v475, 0.0
      %495 = vadd.xlane.f32.xlu0 %v494
      %v496 = vpop.xlane.xlu0 %495
      %v497 = vsel %vm481, %v476, 0.0
      %498 = vadd.xlane.f32.xlu0 %v497
      %v499 = vpop.xlane.xlu0 %498
      %v500 = vsel %vm481, %v477, 0.0
      %501 = vadd.xlane.f32.xlu0 %v500
      %v502 = vpop.xlane.xlu0 %501
      %v503 = vsel %vm481, %v478, 0.0
      %504 = vadd.xlane.f32.xlu0 %v503
      %v505 = vpop.xlane.xlu0 %504
      %v506 = vrcp.pop 32.0
      %v507 = vmul.f32 %v484, %v506
      %v508 = vmul.f32 %v487, %v506
      %v509 = vmul.f32 %v490, %v506
      %v510 = vmul.f32 %v493, %v506
      %v511 = vmul.f32 %v496, %v506
      %v512 = vmul.f32 %v499, %v506
      %v513 = vmul.f32 %v502, %v506
      %v514 = vmul.f32 %v505, %v506
      %v515 = vsub.f32 %v471, %v507
      %v516 = vsub.f32 %v472, %v508
      %v517 = vsub.f32 %v473, %v509
      %v518 = vsub.f32 %v474, %v510
      %v519 = vsub.f32 %v475, %v511
      %v520 = vsub.f32 %v476, %v512
      %v521 = vsub.f32 %v477, %v513
      %v522 = vsub.f32 %v478, %v514
      %v523 = vmul.f32 %v515, %v515
      %v524 = vmul.f32 %v516, %v516
      %v525 = vmul.f32 %v517, %v517
      %v526 = vmul.f32 %v518, %v518
      %v527 = vmul.f32 %v519, %v519
      %v528 = vmul.f32 %v520, %v520
      %v529 = vmul.f32 %v521, %v521
      %v530 = vmul.f32 %v522, %v522
      %v531 = vsel %vm481, %v523, 0.0
      %532 = vadd.xlane.f32.xlu0 %v531
      %v533 = vpop.xlane.xlu0 %532
      %v534 = vsel %vm481, %v524, 0.0
      %535 = vadd.xlane.f32.xlu0 %v534
      %v536 = vpop.xlane.xlu0 %535
      %v537 = vsel %vm481, %v525, 0.0
      %538 = vadd.xlane.f32.xlu0 %v537
      %v539 = vpop.xlane.xlu0 %538
      %v540 = vsel %vm481, %v526, 0.0
      %541 = vadd.xlane.f32.xlu0 %v540
      %v542 = vpop.xlane.xlu0 %541
      %v543 = vsel %vm481, %v527, 0.0
      %544 = vadd.xlane.f32.xlu0 %v543
      %v545 = vpop.xlane.xlu0 %544
      %v546 = vsel %vm481, %v528, 0.0
      %547 = vadd.xlane.f32.xlu0 %v546
      %v548 = vpop.xlane.xlu0 %547
      %v549 = vsel %vm481, %v529, 0.0
      %550 = vadd.xlane.f32.xlu0 %v549
      %v551 = vpop.xlane.xlu0 %550
      %v552 = vsel %vm481, %v530, 0.0
      %553 = vadd.xlane.f32.xlu0 %v552
      %v554 = vpop.xlane.xlu0 %553
      %v555 = vmul.f32 %v533, %v506
      %v556 = vmul.f32 %v536, %v506
      %v557 = vmul.f32 %v539, %v506
      %v558 = vmul.f32 %v542, %v506
      %v559 = vmul.f32 %v545, %v506
      %v560 = vmul.f32 %v548, %v506
      %v561 = vmul.f32 %v551, %v506
      %v562 = vmul.f32 %v554, %v506
      %v563 = vadd.f32 %v555, 1e-05
      %v564 = vadd.f32 %v556, 1e-05
      %v565 = vadd.f32 %v557, 1e-05
      %v566 = vadd.f32 %v558, 1e-05
      %v567 = vadd.f32 %v559, 1e-05
      %v568 = vadd.f32 %v560, 1e-05
      %v569 = vadd.f32 %v561, 1e-05
      %v570 = vadd.f32 %v562, 1e-05
      %v571 = vrsqrt.pop %v563
      %v572 = vrsqrt.pop %v564
      %v573 = vrsqrt.pop %v565
      %v574 = vrsqrt.pop %v566
      %v575 = vrsqrt.pop %v567
      %v576 = vrsqrt.pop %v568
      %v577 = vrsqrt.pop %v569
      %v578 = vrsqrt.pop %v570
      %v579 = vmul.f32 %v515, %v571
      %v580 = vmul.f32 %v516, %v572
      %v581 = vmul.f32 %v517, %v573
      %v582 = vmul.f32 %v518, %v574
      %v583 = vmul.f32 %v519, %v575
      %v584 = vmul.f32 %v520, %v576
      %v585 = vmul.f32 %v521, %v577
      %v586 = vmul.f32 %v522, %v578
      %v588 = vlaneseq
      %v589 = vshrl.u32 %v588, 7
      %v590 = vsub.s32 0, %v589
      %v591 = vrot.slane %v479, %v590
      %v593 = vmul.f32 %v579, %v591
      %v594 = vmul.f32 %v580, %v591
      %v595 = vmul.f32 %v581, %v591
      %v596 = vmul.f32 %v582, %v591
      %v597 = vmul.f32 %v583, %v591
      %v598 = vmul.f32 %v584, %v591
      %v599 = vmul.f32 %v585, %v591
      %v600 = vmul.f32 %v586, %v591
      %v602 = vlaneseq
      %v603 = vshrl.u32 %v602, 7
      %v604 = vsub.s32 0, %v603
      %v605 = vrot.slane %v480, %v604
      %v607 = vadd.f32 %v593, %v605
      %v608 = vadd.f32 %v594, %v605
      %v609 = vadd.f32 %v595, %v605
      %v610 = vadd.f32 %v596, %v605
      %v611 = vadd.f32 %v597, %v605
      %v612 = vadd.f32 %v598, %v605
      %v613 = vadd.f32 %v599, %v605
      %v614 = vadd.f32 %v600, %v605
      loop: start=0, step=1, limit=4
      $region77: #{basic_layer_forward.1} parent=75 // loop_pre_header
        _
      $region78: #{basic_layer_forward.1} parent=75 // loop_header
        %s616 = sphi 0, %s620
        %p617 = scmp.ge.s32.totalorder %s616, 4
        %v621 = vphi 0.0, %v1318
        %v622 = vphi 0.0, %v1319
        %v623 = vphi 0.0, %v1320
        %v624 = vphi 0.0, %v1321
        %v625 = vphi 0.0, %v1322
        %v626 = vphi 0.0, %v1323
        %v627 = vphi 0.0, %v1324
        %v628 = vphi 0.0, %v1325
      $region79: #{basic_layer_forward.1} parent=75 // loop_header_branch
        %619 = sbr.rel (%p617) target = $region83
      $region80: #{basic_layer_forward.1} parent=75 // loop_body
        %s629 = smul.u32 %s616, 32
        %s630 = scalar_lea.vmem %s4, %s629
        %v631 = vld [vmem:[%s630] sm:$0xff]
        %v632 = vld [vmem:[%s630 + $0x8] sm:$0xff]
        %v633 = vld [vmem:[%s630 + $0x10] sm:$0xff]
        %v634 = vld [vmem:[%s630 + $0x18] sm:$0xff]
        %s635 = scalar_lea.vmem %s5, %s616
        %v636 = vld [vmem:[%s635] sm:$0x1]
        %v638 = vlaneseq
        %v639 = vshrl.u32 %v638, 7
        %v640 = vsub.s32 0, %v639
        %v641 = vrot.slane %v636, %v640
        %v644 = vsel %vm481, %v607, 0
        %v647 = vsel %vm481, %v608, 0
        %v650 = vsel %vm481, %v609, 0
        %v653 = vsel %vm481, %v610, 0
        %v656 = vsel %vm481, %v611, 0
        %v659 = vsel %vm481, %v612, 0
        %v662 = vsel %vm481, %v613, 0
        %v665 = vsel %vm481, %v614, 0
        %667 = vmatprep.subr.mxu0 0.0
        %668 = vmatpush1.msra.mxu0 %v631
        %669 = vmatprep.subr.mxu0 0.0
        %670 = vmatpush1.msra.mxu0 %v632
        %671 = vmatprep.subr.mxu0 0.0
        %672 = vmatpush1.msra.mxu0 %v633
        %673 = vmatprep.subr.mxu0 0.0
        %674 = vmatpush1.msra.mxu0 %v634
        %675 = vmatprep.subr.mxu0 0.0
        %676 = vmatpush1.msra.mxu0 0.0
        %677 = vmatprep.subr.mxu0 0.0
        %678 = vmatpush1.msra.mxu0 0.0
        %679 = vmatprep.subr.mxu0 0.0
        %680 = vmatpush1.msra.mxu0 0.0
        %681 = vmatprep.subr.mxu0 0.0
        %682 = vmatpush1.msra.mxu0 0.0
        %683 = vmatprep.subr.mxu0 0.0
        %684 = vmatpush1.msra.mxu0 0.0
        %685 = vmatprep.subr.mxu0 0.0
        %686 = vmatpush1.msra.mxu0 0.0
        %687 = vmatprep.subr.mxu0 0.0
        %688 = vmatpush1.msra.mxu0 0.0
        %689 = vmatprep.subr.mxu0 0.0
        %690 = vmatpush1.msra.mxu0 0.0
        %691 = vmatprep.subr.mxu0 0.0
        %692 = vmatpush1.msra.mxu0 0.0
        %693 = vmatprep.subr.mxu0 0.0
        %694 = vmatpush1.msra.mxu0 0.0
        %695 = vmatprep.subr.mxu0 0.0
        %696 = vmatpush1.msra.mxu0 0.0
        %697 = vmatprep.subr.mxu0 0.0
        %698 = vmatpush1.msra.mxu0 0.0
        %699 = vmatprep.subr.mxu0 0.0
        %700 = vmatpush1.msra.mxu0 0.0
        %701 = vmatprep.subr.mxu0 0.0
        %702 = vmatpush1.msra.mxu0 0.0
        %703 = vmatprep.subr.mxu0 0.0
        %704 = vmatpush1.msra.mxu0 0.0
        %705 = vmatprep.subr.mxu0 0.0
        %706 = vmatpush1.msra.mxu0 0.0
        %707 = vmatprep.subr.mxu0 0.0
        %708 = vmatpush1.msra.mxu0 0.0
        %709 = vmatprep.subr.mxu0 0.0
        %710 = vmatpush1.msra.mxu0 0.0
        %711 = vmatprep.subr.mxu0 0.0
        %712 = vmatpush1.msra.mxu0 0.0
        %713 = vmatprep.subr.mxu0 0.0
        %714 = vmatpush1.msra.mxu0 0.0
        %715 = vmatprep.subr.mxu0 0.0
        %716 = vmatpush1.msra.mxu0 0.0
        %717 = vmatprep.subr.mxu0 0.0
        %718 = vmatpush1.msra.mxu0 0.0
        %719 = vmatprep.subr.mxu0 0.0
        %720 = vmatpush1.msra.mxu0 0.0
        %721 = vmatprep.subr.mxu0 0.0
        %722 = vmatpush1.msra.mxu0 0.0
        %723 = vmatprep.subr.mxu0 0.0
        %724 = vmatpush1.msra.mxu0 0.0
        %725 = vmatprep.subr.mxu0 0.0
        %726 = vmatpush1.msra.mxu0 0.0
        %727 = vmatprep.subr.mxu0 0.0
        %728 = vmatpush1.msra.mxu0 0.0
        %729 = vmatprep.subr.mxu0 0.0
        %730 = vmatpush1.msra.mxu0 0.0
        %731 = vmatprep.mubr.f32.mxu0 0.0
        %732 = vmatmul.mubr.f32.gmra.mrb[0].mxu0 %v644
        %v733 = vpop.f32.mrb[0].mxu0
        %v734 = vadd.f32 %v641, %v733
        %v735 = vpop.f32.mrb[0].mxu0
        %736 = vmatprep.mubr.f32.mxu0 0.0
        %737 = vmatmul.mubr.f32.gmra.mrb[0].mxu0 %v647
        %v738 = vpop.f32.mrb[0].mxu0
        %v739 = vadd.f32 %v641, %v738
        %v740 = vpop.f32.mrb[0].mxu0
        %741 = vmatprep.mubr.f32.mxu0 0.0
        %742 = vmatmul.mubr.f32.gmra.mrb[0].mxu0 %v650
        %v743 = vpop.f32.mrb[0].mxu0
        %v744 = vadd.f32 %v641, %v743
        %v745 = vpop.f32.mrb[0].mxu0
        %746 = vmatprep.mubr.f32.mxu0 0.0
        %747 = vmatmul.mubr.f32.gmra.mrb[0].mxu0 %v653
        %v748 = vpop.f32.mrb[0].mxu0
        %v749 = vadd.f32 %v641, %v748
        %v750 = vpop.f32.mrb[0].mxu0
        %751 = vmatprep.mubr.f32.mxu0 0.0
        %752 = vmatmul.mubr.f32.gmra.mrb[0].mxu0 %v656
        %v753 = vpop.f32.mrb[0].mxu0
        %v754 = vadd.f32 %v641, %v753
        %v755 = vpop.f32.mrb[0].mxu0
        %756 = vmatprep.mubr.f32.mxu0 0.0
        %757 = vmatmul.mubr.f32.gmra.mrb[0].mxu0 %v659
        %v758 = vpop.f32.mrb[0].mxu0
        %v759 = vadd.f32 %v641, %v758
        %v760 = vpop.f32.mrb[0].mxu0
        %761 = vmatprep.mubr.f32.mxu0 0.0
        %762 = vmatmul.mubr.f32.gmra.mrb[0].mxu0 %v662
        %v763 = vpop.f32.mrb[0].mxu0
        %v764 = vadd.f32 %v641, %v763
        %v765 = vpop.f32.mrb[0].mxu0
        %766 = vmatprep.mubr.f32.mxu0 0.0
        %767 = vmatmul.mubr.f32.gmra.mrb[0].mxu0 %v665
        %v768 = vpop.f32.mrb[0].mxu0
        %v769 = vadd.f32 %v641, %v768
        %v770 = vpop.f32.mrb[0].mxu0
        %771 = vdwg.mxu0
        %s772 = smul.u32 %s616, 64
        %s773 = scalar_lea.vmem %s1, %s772
        %v774 = vld [vmem:[%s773] sm:$0xff]
        %v775 = vld [vmem:[%s773 + $0x8] sm:$0xff]
        %v776 = vld [vmem:[%s773 + $0x10] sm:$0xff]
        %v777 = vld [vmem:[%s773 + $0x18] sm:$0xff]
        %v778 = vld [vmem:[%s773 + $0x20] sm:$0xff]
        %v779 = vld [vmem:[%s773 + $0x28] sm:$0xff]
        %v780 = vld [vmem:[%s773 + $0x30] sm:$0xff]
        %v781 = vld [vmem:[%s773 + $0x38] sm:$0xff]
        %790 = vrot.lane.b32.xlu0 %v734, 120
        %v791 = vpop.permute.xlu0 %790
        %792 = vrot.lane.b32.xlu0 %v739, 120
        %v793 = vpop.permute.xlu0 %792
        %794 = vrot.lane.b32.xlu0 %v744, 120
        %v795 = vpop.permute.xlu0 %794
        %796 = vrot.lane.b32.xlu0 %v749, 120
        %v797 = vpop.permute.xlu0 %796
        %798 = vrot.lane.b32.xlu0 %v754, 120
        %v799 = vpop.permute.xlu0 %798
        %800 = vrot.lane.b32.xlu0 %v759, 120
        %v801 = vpop.permute.xlu0 %800
        %802 = vrot.lane.b32.xlu0 %v764, 120
        %v803 = vpop.permute.xlu0 %802
        %804 = vrot.lane.b32.xlu0 %v769, 120
        %v805 = vpop.permute.xlu0 %804
        %vm806 = vcmask 64512
        %v807 = vsel %vm806, %v734, 0
        %v809 = vsel %vm806, %v739, 0
        %v811 = vsel %vm806, %v744, 0
        %v813 = vsel %vm806, %v749, 0
        %v815 = vsel %vm806, %v754, 0
        %v817 = vsel %vm806, %v759, 0
        %v819 = vsel %vm806, %v764, 0
        %v821 = vsel %vm806, %v769, 0
        %v823 = vsel %vm806, %v791, 0
        %v825 = vsel %vm806, %v793, 0
        %v827 = vsel %vm806, %v795, 0
        %v829 = vsel %vm806, %v797, 0
        %v831 = vsel %vm806, %v799, 0
        %v833 = vsel %vm806, %v801, 0
        %v835 = vsel %vm806, %v803, 0
        %v837 = vsel %vm806, %v805, 0
        %839 = vmatprep.subr.mxu0 0.0
        %840 = vmatpush1.xpose.msra.mxu0 %v823
        %841 = vmatprep.subr.mxu0 0.0
        %842 = vmatpush1.xpose.msra.mxu0 %v825
        %843 = vmatprep.subr.mxu0 0.0
        %844 = vmatpush1.xpose.msra.mxu0 %v827
        %845 = vmatprep.subr.mxu0 0.0
        %846 = vmatpush1.xpose.msra.mxu0 %v829
        %847 = vmatprep.subr.mxu0 0.0
        %848 = vmatpush1.xpose.msra.mxu0 %v831
        %849 = vmatprep.subr.mxu0 0.0
        %850 = vmatpush1.xpose.msra.mxu0 %v833
        %851 = vmatprep.subr.mxu0 0.0
        %852 = vmatpush1.xpose.msra.mxu0 %v835
        %853 = vmatprep.subr.mxu0 0.0
        %854 = vmatpush1.xpose.msra.mxu0 %v837
        %855 = vmatprep.subr.mxu0 0.0
        %856 = vmatpush1.xpose.msra.mxu0 0.0
        %857 = vmatprep.subr.mxu0 0.0
        %858 = vmatpush1.xpose.msra.mxu0 0.0
        %859 = vmatprep.subr.mxu0 0.0
        %860 = vmatpush1.xpose.msra.mxu0 0.0
        %861 = vmatprep.subr.mxu0 0.0
        %862 = vmatpush1.xpose.msra.mxu0 0.0
        %863 = vmatprep.subr.mxu0 0.0
        %864 = vmatpush1.xpose.msra.mxu0 0.0
        %865 = vmatprep.subr.mxu0 0.0
        %866 = vmatpush1.xpose.msra.mxu0 0.0
        %867 = vmatprep.subr.mxu0 0.0
        %868 = vmatpush1.xpose.msra.mxu0 0.0
        %869 = vmatprep.subr.mxu0 0.0
        %870 = vmatpush1.xpose.msra.mxu0 0.0
        %871 = vmatprep.subr.mxu0 0.0
        %872 = vmatpush1.xpose.msra.mxu0 0.0
        %873 = vmatprep.subr.mxu0 0.0
        %874 = vmatpush1.xpose.msra.mxu0 0.0
        %875 = vmatprep.subr.mxu0 0.0
        %876 = vmatpush1.xpose.msra.mxu0 0.0
        %877 = vmatprep.subr.mxu0 0.0
        %878 = vmatpush1.xpose.msra.mxu0 0.0
        %879 = vmatprep.subr.mxu0 0.0
        %880 = vmatpush1.xpose.msra.mxu0 0.0
        %881 = vmatprep.subr.mxu0 0.0
        %882 = vmatpush1.xpose.msra.mxu0 0.0
        %883 = vmatprep.subr.mxu0 0.0
        %884 = vmatpush1.xpose.msra.mxu0 0.0
        %885 = vmatprep.subr.mxu0 0.0
        %886 = vmatpush1.xpose.msra.mxu0 0.0
        %887 = vmatprep.subr.mxu0 0.0
        %888 = vmatpush1.xpose.msra.mxu0 0.0
        %889 = vmatprep.subr.mxu0 0.0
        %890 = vmatpush1.xpose.msra.mxu0 0.0
        %891 = vmatprep.subr.mxu0 0.0
        %892 = vmatpush1.xpose.msra.mxu0 0.0
        %893 = vmatprep.subr.mxu0 0.0
        %894 = vmatpush1.xpose.msra.mxu0 0.0
        %895 = vmatprep.subr.mxu0 0.0
        %896 = vmatpush1.xpose.msra.mxu0 0.0
        %897 = vmatprep.subr.mxu0 0.0
        %898 = vmatpush1.xpose.msra.mxu0 0.0
        %899 = vmatprep.subr.mxu0 0.0
        %900 = vmatpush1.xpose.msra.mxu0 0.0
        %901 = vmatprep.subr.mxu0 0.0
        %902 = vmatpush1.xpose.msra.mxu0 0.0
        %903 = vmatprep.mubr.f32.mxu0 0.0
        %904 = vmatmul.mubr.f32.gmra.mrb[0].mxu0 %v807
        %v905 = vpop.f32.mrb[0].mxu0
        %v906 = vadd.f32 %v774, %v905
        %v907 = vpop.f32.mrb[0].mxu0
        %908 = vmatprep.mubr.f32.mxu0 0.0
        %909 = vmatmul.mubr.f32.gmra.mrb[0].mxu0 %v809
        %v910 = vpop.f32.mrb[0].mxu0
        %v911 = vadd.f32 %v775, %v910
        %v912 = vpop.f32.mrb[0].mxu0
        %913 = vmatprep.mubr.f32.mxu0 0.0
        %914 = vmatmul.mubr.f32.gmra.mrb[0].mxu0 %v811
        %v915 = vpop.f32.mrb[0].mxu0
        %v916 = vadd.f32 %v776, %v915
        %v917 = vpop.f32.mrb[0].mxu0
        %918 = vmatprep.mubr.f32.mxu0 0.0
        %919 = vmatmul.mubr.f32.gmra.mrb[0].mxu0 %v813
        %v920 = vpop.f32.mrb[0].mxu0
        %v921 = vadd.f32 %v777, %v920
        %v922 = vpop.f32.mrb[0].mxu0
        %923 = vmatprep.mubr.f32.mxu0 0.0
        %924 = vmatmul.mubr.f32.gmra.mrb[0].mxu0 %v815
        %v925 = vpop.f32.mrb[0].mxu0
        %v926 = vadd.f32 %v778, %v925
        %v927 = vpop.f32.mrb[0].mxu0
        %928 = vmatprep.mubr.f32.mxu0 0.0
        %929 = vmatmul.mubr.f32.gmra.mrb[0].mxu0 %v817
        %v930 = vpop.f32.mrb[0].mxu0
        %v931 = vadd.f32 %v779, %v930
        %v932 = vpop.f32.mrb[0].mxu0
        %933 = vmatprep.mubr.f32.mxu0 0.0
        %934 = vmatmul.mubr.f32.gmra.mrb[0].mxu0 %v819
        %v935 = vpop.f32.mrb[0].mxu0
        %v936 = vadd.f32 %v780, %v935
        %v937 = vpop.f32.mrb[0].mxu0
        %938 = vmatprep.mubr.f32.mxu0 0.0
        %939 = vmatmul.mubr.f32.gmra.mrb[0].mxu0 %v821
        %v940 = vpop.f32.mrb[0].mxu0
        %v941 = vadd.f32 %v781, %v940
        %v942 = vpop.f32.mrb[0].mxu0
        %943 = vdwg.mxu0
        %vm944 = vcmask 523264
        %v945 = vsel %vm944, %v906, -inf
        %946 = vmax.xlane.f32.xlu0 %v945
        %v947 = vpop.xlane.xlu0 %946
        %v948 = vsel %vm944, %v911, -inf
        %949 = vmax.xlane.f32.xlu0 %v948
        %v950 = vpop.xlane.xlu0 %949
        %v951 = vsel %vm944, %v916, -inf
        %952 = vmax.xlane.f32.xlu0 %v951
        %v953 = vpop.xlane.xlu0 %952
        %v954 = vsel %vm944, %v921, -inf
        %955 = vmax.xlane.f32.xlu0 %v954
        %v956 = vpop.xlane.xlu0 %955
        %v957 = vsel %vm944, %v926, -inf
        %958 = vmax.xlane.f32.xlu0 %v957
        %v959 = vpop.xlane.xlu0 %958
        %v960 = vsel %vm944, %v931, -inf
        %961 = vmax.xlane.f32.xlu0 %v960
        %v962 = vpop.xlane.xlu0 %961
        %v963 = vsel %vm944, %v936, -inf
        %964 = vmax.xlane.f32.xlu0 %v963
        %v965 = vpop.xlane.xlu0 %964
        %v966 = vsel %vm944, %v941, -inf
        %967 = vmax.xlane.f32.xlu0 %v966
        %v968 = vpop.xlane.xlu0 %967
        %v969 = vsub.f32 %v906, %v947
        %v970 = vsub.f32 %v911, %v950
        %v971 = vsub.f32 %v916, %v953
        %v972 = vsub.f32 %v921, %v956
        %v973 = vsub.f32 %v926, %v959
        %v974 = vsub.f32 %v931, %v962
        %v975 = vsub.f32 %v936, %v965
        %v976 = vsub.f32 %v941, %v968
        %v977 = vmul.f32 %v969, 1.442695
        %v978 = vpow.pop %v977
        %v979 = vmul.f32 %v970, 1.442695
        %v980 = vpow.pop %v979
        %v981 = vmul.f32 %v971, 1.442695
        %v982 = vpow.pop %v981
        %v983 = vmul.f32 %v972, 1.442695
        %v984 = vpow.pop %v983
        %v985 = vmul.f32 %v973, 1.442695
        %v986 = vpow.pop %v985
        %v987 = vmul.f32 %v974, 1.442695
        %v988 = vpow.pop %v987
        %v989 = vmul.f32 %v975, 1.442695
        %v990 = vpow.pop %v989
        %v991 = vmul.f32 %v976, 1.442695
        %v992 = vpow.pop %v991
        %v993 = vsel %vm944, %v978, 0.0
        %994 = vadd.xlane.f32.xlu0 %v993
        %v995 = vpop.xlane.xlu0 %994
        %v996 = vsel %vm944, %v980, 0.0
        %997 = vadd.xlane.f32.xlu0 %v996
        %v998 = vpop.xlane.xlu0 %997
        %v999 = vsel %vm944, %v982, 0.0
        %1000 = vadd.xlane.f32.xlu0 %v999
        %v1001 = vpop.xlane.xlu0 %1000
        %v1002 = vsel %vm944, %v984, 0.0
        %1003 = vadd.xlane.f32.xlu0 %v1002
        %v1004 = vpop.xlane.xlu0 %1003
        %v1005 = vsel %vm944, %v986, 0.0
        %1006 = vadd.xlane.f32.xlu0 %v1005
        %v1007 = vpop.xlane.xlu0 %1006
        %v1008 = vsel %vm944, %v988, 0.0
        %1009 = vadd.xlane.f32.xlu0 %v1008
        %v1010 = vpop.xlane.xlu0 %1009
        %v1011 = vsel %vm944, %v990, 0.0
        %1012 = vadd.xlane.f32.xlu0 %v1011
        %v1013 = vpop.xlane.xlu0 %1012
        %v1014 = vsel %vm944, %v992, 0.0
        %1015 = vadd.xlane.f32.xlu0 %v1014
        %v1016 = vpop.xlane.xlu0 %1015
        %v1017 = vrcp.pop %v995
        %v1018 = vmul.f32 %v978, %v1017
        %v1019 = vrcp.pop %v998
        %v1020 = vmul.f32 %v980, %v1019
        %v1021 = vrcp.pop %v1001
        %v1022 = vmul.f32 %v982, %v1021
        %v1023 = vrcp.pop %v1004
        %v1024 = vmul.f32 %v984, %v1023
        %v1025 = vrcp.pop %v1007
        %v1026 = vmul.f32 %v986, %v1025
        %v1027 = vrcp.pop %v1010
        %v1028 = vmul.f32 %v988, %v1027
        %v1029 = vrcp.pop %v1013
        %v1030 = vmul.f32 %v990, %v1029
        %v1031 = vrcp.pop %v1016
        %v1032 = vmul.f32 %v992, %v1031
        %1033 = vrot.lane.b32.xlu0 %v734, 112
        %v1034 = vpop.permute.xlu0 %1033
        %1035 = vrot.lane.b32.xlu0 %v739, 112
        %v1036 = vpop.permute.xlu0 %1035
        %1037 = vrot.lane.b32.xlu0 %v744, 112
        %v1038 = vpop.permute.xlu0 %1037
        %1039 = vrot.lane.b32.xlu0 %v749, 112
        %v1040 = vpop.permute.xlu0 %1039
        %1041 = vrot.lane.b32.xlu0 %v754, 112
        %v1042 = vpop.permute.xlu0 %1041
        %1043 = vrot.lane.b32.xlu0 %v759, 112
        %v1044 = vpop.permute.xlu0 %1043
        %1045 = vrot.lane.b32.xlu0 %v764, 112
        %v1046 = vpop.permute.xlu0 %1045
        %1047 = vrot.lane.b32.xlu0 %v769, 112
        %v1048 = vpop.permute.xlu0 %1047
        %v1058 = vsel %vm944, %v1018, 0
        %v1061 = vsel %vm944, %v1020, 0
        %v1064 = vsel %vm944, %v1022, 0
        %v1067 = vsel %vm944, %v1024, 0
        %v1070 = vsel %vm944, %v1026, 0
        %v1073 = vsel %vm944, %v1028, 0
        %v1076 = vsel %vm944, %v1030, 0
        %v1079 = vsel %vm944, %v1032, 0
        %1081 = vmatprep.subr.mxu0 0.0
        %1082 = vmatpush1.msra.mxu0 %v1034
        %1083 = vmatprep.subr.mxu0 0.0
        %1084 = vmatpush1.msra.mxu0 %v1036
        %1085 = vmatprep.subr.mxu0 0.0
        %1086 = vmatpush1.msra.mxu0 %v1038
        %1087 = vmatprep.subr.mxu0 0.0
        %1088 = vmatpush1.msra.mxu0 %v1040
        %1089 = vmatprep.subr.mxu0 0.0
        %1090 = vmatpush1.msra.mxu0 %v1042
        %1091 = vmatprep.subr.mxu0 0.0
        %1092 = vmatpush1.msra.mxu0 %v1044
        %1093 = vmatprep.subr.mxu0 0.0
        %1094 = vmatpush1.msra.mxu0 %v1046
        %1095 = vmatprep.subr.mxu0 0.0
        %1096 = vmatpush1.msra.mxu0 %v1048
        %1097 = vmatprep.subr.mxu0 0.0
        %1098 = vmatpush1.msra.mxu0 0.0
        %1099 = vmatprep.subr.mxu0 0.0
        %1100 = vmatpush1.msra.mxu0 0.0
        %1101 = vmatprep.subr.mxu0 0.0
        %1102 = vmatpush1.msra.mxu0 0.0
        %1103 = vmatprep.subr.mxu0 0.0
        %1104 = vmatpush1.msra.mxu0 0.0
        %1105 = vmatprep.subr.mxu0 0.0
        %1106 = vmatpush1.msra.mxu0 0.0
        %1107 = vmatprep.subr.mxu0 0.0
        %1108 = vmatpush1.msra.mxu0 0.0
        %1109 = vmatprep.subr.mxu0 0.0
        %1110 = vmatpush1.msra.mxu0 0.0
        %1111 = vmatprep.subr.mxu0 0.0
        %1112 = vmatpush1.msra.mxu0 0.0
        %1113 = vmatprep.subr.mxu0 0.0
        %1114 = vmatpush1.msra.mxu0 0.0
        %1115 = vmatprep.subr.mxu0 0.0
        %1116 = vmatpush1.msra.mxu0 0.0
        %1117 = vmatprep.subr.mxu0 0.0
        %1118 = vmatpush1.msra.mxu0 0.0
        %1119 = vmatprep.subr.mxu0 0.0
        %1120 = vmatpush1.msra.mxu0 0.0
        %1121 = vmatprep.subr.mxu0 0.0
        %1122 = vmatpush1.msra.mxu0 0.0
        %1123 = vmatprep.subr.mxu0 0.0
        %1124 = vmatpush1.msra.mxu0 0.0
        %1125 = vmatprep.subr.mxu0 0.0
        %1126 = vmatpush1.msra.mxu0 0.0
        %1127 = vmatprep.subr.mxu0 0.0
        %1128 = vmatpush1.msra.mxu0 0.0
        %1129 = vmatprep.subr.mxu0 0.0
        %1130 = vmatpush1.msra.mxu0 0.0
        %1131 = vmatprep.subr.mxu0 0.0
        %1132 = vmatpush1.msra.mxu0 0.0
        %1133 = vmatprep.subr.mxu0 0.0
        %1134 = vmatpush1.msra.mxu0 0.0
        %1135 = vmatprep.subr.mxu0 0.0
        %1136 = vmatpush1.msra.mxu0 0.0
        %1137 = vmatprep.subr.mxu0 0.0
        %1138 = vmatpush1.msra.mxu0 0.0
        %1139 = vmatprep.subr.mxu0 0.0
        %1140 = vmatpush1.msra.mxu0 0.0
        %1141 = vmatprep.subr.mxu0 0.0
        %1142 = vmatpush1.msra.mxu0 0.0
        %1143 = vmatprep.subr.mxu0 0.0
        %1144 = vmatpush1.msra.mxu0 0.0
        %1145 = vmatprep.mubr.f32.mxu0 0.0
        %1146 = vmatmul.mubr.f32.gmra.mrb[0].mxu0 %v1058
        %v1147 = vpop.f32.mrb[0].mxu0
        %v1148 = vadd.f32 0.0, %v1147
        %v1149 = vpop.f32.mrb[0].mxu0
        %1150 = vmatprep.mubr.f32.mxu0 0.0
        %1151 = vmatmul.mubr.f32.gmra.mrb[0].mxu0 %v1061
        %v1152 = vpop.f32.mrb[0].mxu0
        %v1153 = vadd.f32 0.0, %v1152
        %v1154 = vpop.f32.mrb[0].mxu0
        %1155 = vmatprep.mubr.f32.mxu0 0.0
        %1156 = vmatmul.mubr.f32.gmra.mrb[0].mxu0 %v1064
        %v1157 = vpop.f32.mrb[0].mxu0
        %v1158 = vadd.f32 0.0, %v1157
        %v1159 = vpop.f32.mrb[0].mxu0
        %1160 = vmatprep.mubr.f32.mxu0 0.0
        %1161 = vmatmul.mubr.f32.gmra.mrb[0].mxu0 %v1067
        %v1162 = vpop.f32.mrb[0].mxu0
        %v1163 = vadd.f32 0.0, %v1162
        %v1164 = vpop.f32.mrb[0].mxu0
        %1165 = vmatprep.mubr.f32.mxu0 0.0
        %1166 = vmatmul.mubr.f32.gmra.mrb[0].mxu0 %v1070
        %v1167 = vpop.f32.mrb[0].mxu0
        %v1168 = vadd.f32 0.0, %v1167
        %v1169 = vpop.f32.mrb[0].mxu0
        %1170 = vmatprep.mubr.f32.mxu0 0.0
        %1171 = vmatmul.mubr.f32.gmra.mrb[0].mxu0 %v1073
        %v1172 = vpop.f32.mrb[0].mxu0
        %v1173 = vadd.f32 0.0, %v1172
        %v1174 = vpop.f32.mrb[0].mxu0
        %1175 = vmatprep.mubr.f32.mxu0 0.0
        %1176 = vmatmul.mubr.f32.gmra.mrb[0].mxu0 %v1076
        %v1177 = vpop.f32.mrb[0].mxu0
        %v1178 = vadd.f32 0.0, %v1177
        %v1179 = vpop.f32.mrb[0].mxu0
        %1180 = vmatprep.mubr.f32.mxu0 0.0
        %1181 = vmatmul.mubr.f32.gmra.mrb[0].mxu0 %v1079
        %v1182 = vpop.f32.mrb[0].mxu0
        %v1183 = vadd.f32 0.0, %v1182
        %v1184 = vpop.f32.mrb[0].mxu0
        %1185 = vdwg.mxu0
        %s1186 = smul.u32 %s616, 8
        %s1187 = scalar_lea.vmem %s6, %s1186
        %v1188 = vld [vmem:[%s1187] sm:$0xff]
        %v1190 = vsel %vm806, %v1148, 0
        %v1193 = vsel %vm806, %v1153, 0
        %v1196 = vsel %vm806, %v1158, 0
        %v1199 = vsel %vm806, %v1163, 0
        %v1202 = vsel %vm806, %v1168, 0
        %v1205 = vsel %vm806, %v1173, 0
        %v1208 = vsel %vm806, %v1178, 0
        %v1211 = vsel %vm806, %v1183, 0
        %1213 = vmatprep.subr.mxu0 0.0
        %1214 = vmatpush1.msra.mxu0 %v1188
        %1215 = vmatprep.subr.mxu0 0.0
        %1216 = vmatpush1.msra.mxu0 0.0
        %1217 = vmatprep.subr.mxu0 0.0
        %1218 = vmatpush1.msra.mxu0 0.0
        %1219 = vmatprep.subr.mxu0 0.0
        %1220 = vmatpush1.msra.mxu0 0.0
        %1221 = vmatprep.subr.mxu0 0.0
        %1222 = vmatpush1.msra.mxu0 0.0
        %1223 = vmatprep.subr.mxu0 0.0
        %1224 = vmatpush1.msra.mxu0 0.0
        %1225 = vmatprep.subr.mxu0 0.0
        %1226 = vmatpush1.msra.mxu0 0.0
        %1227 = vmatprep.subr.mxu0 0.0
        %1228 = vmatpush1.msra.mxu0 0.0
        %1229 = vmatprep.subr.mxu0 0.0
        %1230 = vmatpush1.msra.mxu0 0.0
        %1231 = vmatprep.subr.mxu0 0.0
        %1232 = vmatpush1.msra.mxu0 0.0
        %1233 = vmatprep.subr.mxu0 0.0
        %1234 = vmatpush1.msra.mxu0 0.0
        %1235 = vmatprep.subr.mxu0 0.0
        %1236 = vmatpush1.msra.mxu0 0.0
        %1237 = vmatprep.subr.mxu0 0.0
        %1238 = vmatpush1.msra.mxu0 0.0
        %1239 = vmatprep.subr.mxu0 0.0
        %1240 = vmatpush1.msra.mxu0 0.0
        %1241 = vmatprep.subr.mxu0 0.0
        %1242 = vmatpush1.msra.mxu0 0.0
        %1243 = vmatprep.subr.mxu0 0.0
        %1244 = vmatpush1.msra.mxu0 0.0
        %1245 = vmatprep.subr.mxu0 0.0
        %1246 = vmatpush1.msra.mxu0 0.0
        %1247 = vmatprep.subr.mxu0 0.0
        %1248 = vmatpush1.msra.mxu0 0.0
        %1249 = vmatprep.subr.mxu0 0.0
        %1250 = vmatpush1.msra.mxu0 0.0
        %1251 = vmatprep.subr.mxu0 0.0
        %1252 = vmatpush1.msra.mxu0 0.0
        %1253 = vmatprep.subr.mxu0 0.0
        %1254 = vmatpush1.msra.mxu0 0.0
        %1255 = vmatprep.subr.mxu0 0.0
        %1256 = vmatpush1.msra.mxu0 0.0
        %1257 = vmatprep.subr.mxu0 0.0
        %1258 = vmatpush1.msra.mxu0 0.0
        %1259 = vmatprep.subr.mxu0 0.0
        %1260 = vmatpush1.msra.mxu0 0.0
        %1261 = vmatprep.subr.mxu0 0.0
        %1262 = vmatpush1.msra.mxu0 0.0
        %1263 = vmatprep.subr.mxu0 0.0
        %1264 = vmatpush1.msra.mxu0 0.0
        %1265 = vmatprep.subr.mxu0 0.0
        %1266 = vmatpush1.msra.mxu0 0.0
        %1267 = vmatprep.subr.mxu0 0.0
        %1268 = vmatpush1.msra.mxu0 0.0
        %1269 = vmatprep.subr.mxu0 0.0
        %1270 = vmatpush1.msra.mxu0 0.0
        %1271 = vmatprep.subr.mxu0 0.0
        %1272 = vmatpush1.msra.mxu0 0.0
        %1273 = vmatprep.subr.mxu0 0.0
        %1274 = vmatpush1.msra.mxu0 0.0
        %1275 = vmatprep.subr.mxu0 0.0
        %1276 = vmatpush1.msra.mxu0 0.0
        %1277 = vmatprep.mubr.f32.mxu0 0.0
        %1278 = vmatmul.mubr.f32.gmra.mrb[0].mxu0 %v1190
        %v1279 = vpop.f32.mrb[0].mxu0
        %v1280 = vadd.f32 0.0, %v1279
        %v1281 = vpop.f32.mrb[0].mxu0
        %1282 = vmatprep.mubr.f32.mxu0 0.0
        %1283 = vmatmul.mubr.f32.gmra.mrb[0].mxu0 %v1193
        %v1284 = vpop.f32.mrb[0].mxu0
        %v1285 = vadd.f32 0.0, %v1284
        %v1286 = vpop.f32.mrb[0].mxu0
        %1287 = vmatprep.mubr.f32.mxu0 0.0
        %1288 = vmatmul.mubr.f32.gmra.mrb[0].mxu0 %v1196
        %v1289 = vpop.f32.mrb[0].mxu0
        %v1290 = vadd.f32 0.0, %v1289
        %v1291 = vpop.f32.mrb[0].mxu0
        %1292 = vmatprep.mubr.f32.mxu0 0.0
        %1293 = vmatmul.mubr.f32.gmra.mrb[0].mxu0 %v1199
        %v1294 = vpop.f32.mrb[0].mxu0
        %v1295 = vadd.f32 0.0, %v1294
        %v1296 = vpop.f32.mrb[0].mxu0
        %1297 = vmatprep.mubr.f32.mxu0 0.0
        %1298 = vmatmul.mubr.f32.gmra.mrb[0].mxu0 %v1202
        %v1299 = vpop.f32.mrb[0].mxu0
        %v1300 = vadd.f32 0.0, %v1299
        %v1301 = vpop.f32.mrb[0].mxu0
        %1302 = vmatprep.mubr.f32.mxu0 0.0
        %1303 = vmatmul.mubr.f32.gmra.mrb[0].mxu0 %v1205
        %v1304 = vpop.f32.mrb[0].mxu0
        %v1305 = vadd.f32 0.0, %v1304
        %v1306 = vpop.f32.mrb[0].mxu0
        %1307 = vmatprep.mubr.f32.mxu0 0.0
        %1308 = vmatmul.mubr.f32.gmra.mrb[0].mxu0 %v1208
        %v1309 = vpop.f32.mrb[0].mxu0
        %v1310 = vadd.f32 0.0, %v1309
        %v1311 = vpop.f32.mrb[0].mxu0
        %1312 = vmatprep.mubr.f32.mxu0 0.0
        %1313 = vmatmul.mubr.f32.gmra.mrb[0].mxu0 %v1211
        %v1314 = vpop.f32.mrb[0].mxu0
        %v1315 = vadd.f32 0.0, %v1314
        %v1316 = vpop.f32.mrb[0].mxu0
        %1317 = vdwg.mxu0
        %v1318 = vadd.f32 %v621, %v1280
        %v1319 = vadd.f32 %v622, %v1285
        %v1320 = vadd.f32 %v623, %v1290
        %v1321 = vadd.f32 %v624, %v1295
        %v1322 = vadd.f32 %v625, %v1300
        %v1323 = vadd.f32 %v626, %v1305
        %v1324 = vadd.f32 %v627, %v1310
        %v1325 = vadd.f32 %v628, %v1315
      $region81: #{basic_layer_forward.1} parent=75 // loop_footer
        %s620 = sadd.s32 1, %s616
      $region82: #{basic_layer_forward.1} parent=75 // loop_footer_branch
        %615 = sbr.rel target = $region78
      $region83: #{basic_layer_forward.1} parent=75 // loop_exit
        _
      %v1326 = vadd.f32 %v471, %v621
      %v1327 = vadd.f32 %v472, %v622
      %v1328 = vadd.f32 %v473, %v623
      %v1329 = vadd.f32 %v474, %v624
      %v1330 = vadd.f32 %v475, %v625
      %v1331 = vadd.f32 %v476, %v626
      %v1332 = vadd.f32 %v477, %v627
      %v1333 = vadd.f32 %v478, %v628
      %v1334 = vld [vmem:[%s7] sm:$0x1]
      %v1336 = vlaneseq
      %v1337 = vshrl.u32 %v1336, 7
      %v1338 = vsub.s32 0, %v1337
      %v1339 = vrot.slane %v1334, %v1338
      %v1341 = vadd.f32 %v1326, %v1339
      %v1342 = vadd.f32 %v1327, %v1339
      %v1343 = vadd.f32 %v1328, %v1339
      %v1344 = vadd.f32 %v1329, %v1339
      %v1345 = vadd.f32 %v1330, %v1339
      %v1346 = vadd.f32 %v1331, %v1339
      %v1347 = vadd.f32 %v1332, %v1339
      %v1348 = vadd.f32 %v1333, %v1339
      %v1349 = vld [vmem:[%s8] sm:$0x1]
      %v1350 = vld [vmem:[%s9] sm:$0x1]
      %v1351 = vsel %vm481, %v1341, 0.0
      %1352 = vadd.xlane.f32.xlu0 %v1351
      %v1353 = vpop.xlane.xlu0 %1352
      %v1354 = vsel %vm481, %v1342, 0.0
      %1355 = vadd.xlane.f32.xlu0 %v1354
      %v1356 = vpop.xlane.xlu0 %1355
      %v1357 = vsel %vm481, %v1343, 0.0
      %1358 = vadd.xlane.f32.xlu0 %v1357
      %v1359 = vpop.xlane.xlu0 %1358
      %v1360 = vsel %vm481, %v1344, 0.0
      %1361 = vadd.xlane.f32.xlu0 %v1360
      %v1362 = vpop.xlane.xlu0 %1361
      %v1363 = vsel %vm481, %v1345, 0.0
      %1364 = vadd.xlane.f32.xlu0 %v1363
      %v1365 = vpop.xlane.xlu0 %1364
      %v1366 = vsel %vm481, %v1346, 0.0
      %1367 = vadd.xlane.f32.xlu0 %v1366
      %v1368 = vpop.xlane.xlu0 %1367
      %v1369 = vsel %vm481, %v1347, 0.0
      %1370 = vadd.xlane.f32.xlu0 %v1369
      %v1371 = vpop.xlane.xlu0 %1370
      %v1372 = vsel %vm481, %v1348, 0.0
      %1373 = vadd.xlane.f32.xlu0 %v1372
      %v1374 = vpop.xlane.xlu0 %1373
      %v1375 = vmul.f32 %v1353, %v506
      %v1376 = vmul.f32 %v1356, %v506
      %v1377 = vmul.f32 %v1359, %v506
      %v1378 = vmul.f32 %v1362, %v506
      %v1379 = vmul.f32 %v1365, %v506
      %v1380 = vmul.f32 %v1368, %v506
      %v1381 = vmul.f32 %v1371, %v506
      %v1382 = vmul.f32 %v1374, %v506
      %v1383 = vsub.f32 %v1341, %v1375
      %v1384 = vsub.f32 %v1342, %v1376
      %v1385 = vsub.f32 %v1343, %v1377
      %v1386 = vsub.f32 %v1344, %v1378
      %v1387 = vsub.f32 %v1345, %v1379
      %v1388 = vsub.f32 %v1346, %v1380
      %v1389 = vsub.f32 %v1347, %v1381
      %v1390 = vsub.f32 %v1348, %v1382
      %v1391 = vmul.f32 %v1383, %v1383
      %v1392 = vmul.f32 %v1384, %v1384
      %v1393 = vmul.f32 %v1385, %v1385
      %v1394 = vmul.f32 %v1386, %v1386
      %v1395 = vmul.f32 %v1387, %v1387
      %v1396 = vmul.f32 %v1388, %v1388
      %v1397 = vmul.f32 %v1389, %v1389
      %v1398 = vmul.f32 %v1390, %v1390
      %v1399 = vsel %vm481, %v1391, 0.0
      %1400 = vadd.xlane.f32.xlu0 %v1399
      %v1401 = vpop.xlane.xlu0 %1400
      %v1402 = vsel %vm481, %v1392, 0.0
      %1403 = vadd.xlane.f32.xlu0 %v1402
      %v1404 = vpop.xlane.xlu0 %1403
      %v1405 = vsel %vm481, %v1393, 0.0
      %1406 = vadd.xlane.f32.xlu0 %v1405
      %v1407 = vpop.xlane.xlu0 %1406
      %v1408 = vsel %vm481, %v1394, 0.0
      %1409 = vadd.xlane.f32.xlu0 %v1408
      %v1410 = vpop.xlane.xlu0 %1409
      %v1411 = vsel %vm481, %v1395, 0.0
      %1412 = vadd.xlane.f32.xlu0 %v1411
      %v1413 = vpop.xlane.xlu0 %1412
      %v1414 = vsel %vm481, %v1396, 0.0
      %1415 = vadd.xlane.f32.xlu0 %v1414
      %v1416 = vpop.xlane.xlu0 %1415
      %v1417 = vsel %vm481, %v1397, 0.0
      %1418 = vadd.xlane.f32.xlu0 %v1417
      %v1419 = vpop.xlane.xlu0 %1418
      %v1420 = vsel %vm481, %v1398, 0.0
      %1421 = vadd.xlane.f32.xlu0 %v1420
      %v1422 = vpop.xlane.xlu0 %1421
      %v1423 = vmul.f32 %v1401, %v506
      %v1424 = vmul.f32 %v1404, %v506
      %v1425 = vmul.f32 %v1407, %v506
      %v1426 = vmul.f32 %v1410, %v506
      %v1427 = vmul.f32 %v1413, %v506
      %v1428 = vmul.f32 %v1416, %v506
      %v1429 = vmul.f32 %v1419, %v506
      %v1430 = vmul.f32 %v1422, %v506
      %v1431 = vadd.f32 %v1423, 1e-05
      %v1432 = vadd.f32 %v1424, 1e-05
      %v1433 = vadd.f32 %v1425, 1e-05
      %v1434 = vadd.f32 %v1426, 1e-05
      %v1435 = vadd.f32 %v1427, 1e-05
      %v1436 = vadd.f32 %v1428, 1e-05
      %v1437 = vadd.f32 %v1429, 1e-05
      %v1438 = vadd.f32 %v1430, 1e-05
      %v1439 = vrsqrt.pop %v1431
      %v1440 = vrsqrt.pop %v1432
      %v1441 = vrsqrt.pop %v1433
      %v1442 = vrsqrt.pop %v1434
      %v1443 = vrsqrt.pop %v1435
      %v1444 = vrsqrt.pop %v1436
      %v1445 = vrsqrt.pop %v1437
      %v1446 = vrsqrt.pop %v1438
      %v1447 = vmul.f32 %v1383, %v1439
      %v1448 = vmul.f32 %v1384, %v1440
      %v1449 = vmul.f32 %v1385, %v1441
      %v1450 = vmul.f32 %v1386, %v1442
      %v1451 = vmul.f32 %v1387, %v1443
      %v1452 = vmul.f32 %v1388, %v1444
      %v1453 = vmul.f32 %v1389, %v1445
      %v1454 = vmul.f32 %v1390, %v1446
      %v1456 = vlaneseq
      %v1457 = vshrl.u32 %v1456, 7
      %v1458 = vsub.s32 0, %v1457
      %v1459 = vrot.slane %v1349, %v1458
      %v1461 = vmul.f32 %v1447, %v1459
      %v1462 = vmul.f32 %v1448, %v1459
      %v1463 = vmul.f32 %v1449, %v1459
      %v1464 = vmul.f32 %v1450, %v1459
      %v1465 = vmul.f32 %v1451, %v1459
      %v1466 = vmul.f32 %v1452, %v1459
      %v1467 = vmul.f32 %v1453, %v1459
      %v1468 = vmul.f32 %v1454, %v1459
      %v1470 = vlaneseq
      %v1471 = vshrl.u32 %v1470, 7
      %v1472 = vsub.s32 0, %v1471
      %v1473 = vrot.slane %v1350, %v1472
      %v1475 = vadd.f32 %v1461, %v1473
      %v1476 = vadd.f32 %v1462, %v1473
      %v1477 = vadd.f32 %v1463, %v1473
      %v1478 = vadd.f32 %v1464, %v1473
      %v1479 = vadd.f32 %v1465, %v1473
      %v1480 = vadd.f32 %v1466, %v1473
      %v1481 = vadd.f32 %v1467, %v1473
      %v1482 = vadd.f32 %v1468, %v1473
      %v1483 = vld [vmem:[%s10] sm:$0xff]
      %v1484 = vld [vmem:[%s10 + $0x8] sm:$0xff]
      %v1485 = vld [vmem:[%s10 + $0x10] sm:$0xff]
      %v1486 = vld [vmem:[%s10 + $0x18] sm:$0xff]
      %v1487 = vld [vmem:[%s11] sm:$0x1]
      %v1489 = vlaneseq
      %v1490 = vshrl.u32 %v1489, 7
      %v1491 = vsub.s32 0, %v1490
      %v1492 = vrot.slane %v1487, %v1491
      %v1495 = vsel %vm481, %v1475, 0
      %v1498 = vsel %vm481, %v1476, 0
      %v1501 = vsel %vm481, %v1477, 0
      %v1504 = vsel %vm481, %v1478, 0
      %v1507 = vsel %vm481, %v1479, 0
      %v1510 = vsel %vm481, %v1480, 0
      %v1513 = vsel %vm481, %v1481, 0
      %v1516 = vsel %vm481, %v1482, 0
      %1518 = vmatprep.subr.mxu0 0.0
      %1519 = vmatpush1.msra.mxu0 %v1483
      %1520 = vmatprep.subr.mxu0 0.0
      %1521 = vmatpush1.msra.mxu0 %v1484
      %1522 = vmatprep.subr.mxu0 0.0
      %1523 = vmatpush1.msra.mxu0 %v1485
      %1524 = vmatprep.subr.mxu0 0.0
      %1525 = vmatpush1.msra.mxu0 %v1486
      %1526 = vmatprep.subr.mxu0 0.0
      %1527 = vmatpush1.msra.mxu0 0.0
      %1528 = vmatprep.subr.mxu0 0.0
      %1529 = vmatpush1.msra.mxu0 0.0
      %1530 = vmatprep.subr.mxu0 0.0
      %1531 = vmatpush1.msra.mxu0 0.0
      %1532 = vmatprep.subr.mxu0 0.0
      %1533 = vmatpush1.msra.mxu0 0.0
      %1534 = vmatprep.subr.mxu0 0.0
      %1535 = vmatpush1.msra.mxu0 0.0
      %1536 = vmatprep.subr.mxu0 0.0
      %1537 = vmatpush1.msra.mxu0 0.0
      %1538 = vmatprep.subr.mxu0 0.0
      %1539 = vmatpush1.msra.mxu0 0.0
      %1540 = vmatprep.subr.mxu0 0.0
      %1541 = vmatpush1.msra.mxu0 0.0
      %1542 = vmatprep.subr.mxu0 0.0
      %1543 = vmatpush1.msra.mxu0 0.0
      %1544 = vmatprep.subr.mxu0 0.0
      %1545 = vmatpush1.msra.mxu0 0.0
      %1546 = vmatprep.subr.mxu0 0.0
      %1547 = vmatpush1.msra.mxu0 0.0
      %1548 = vmatprep.subr.mxu0 0.0
      %1549 = vmatpush1.msra.mxu0 0.0
      %1550 = vmatprep.subr.mxu0 0.0
      %1551 = vmatpush1.msra.mxu0 0.0
      %1552 = vmatprep.subr.mxu0 0.0
      %1553 = vmatpush1.msra.mxu0 0.0
      %1554 = vmatprep.subr.mxu0 0.0
      %1555 = vmatpush1.msra.mxu0 0.0
      %1556 = vmatprep.subr.mxu0 0.0
      %1557 = vmatpush1.msra.mxu0 0.0
      %1558 = vmatprep.subr.mxu0 0.0
      %1559 = vmatpush1.msra.mxu0 0.0
      %1560 = vmatprep.subr.mxu0 0.0
      %1561 = vmatpush1.msra.mxu0 0.0
      %1562 = vmatprep.subr.mxu0 0.0
      %1563 = vmatpush1.msra.mxu0 0.0
      %1564 = vmatprep.subr.mxu0 0.0
      %1565 = vmatpush1.msra.mxu0 0.0
      %1566 = vmatprep.subr.mxu0 0.0
      %1567 = vmatpush1.msra.mxu0 0.0
      %1568 = vmatprep.subr.mxu0 0.0
      %1569 = vmatpush1.msra.mxu0 0.0
      %1570 = vmatprep.subr.mxu0 0.0
      %1571 = vmatpush1.msra.mxu0 0.0
      %1572 = vmatprep.subr.mxu0 0.0
      %1573 = vmatpush1.msra.mxu0 0.0
      %1574 = vmatprep.subr.mxu0 0.0
      %1575 = vmatpush1.msra.mxu0 0.0
      %1576 = vmatprep.subr.mxu0 0.0
      %1577 = vmatpush1.msra.mxu0 0.0
      %1578 = vmatprep.subr.mxu0 0.0
      %1579 = vmatpush1.msra.mxu0 0.0
      %1580 = vmatprep.subr.mxu0 0.0
      %1581 = vmatpush1.msra.mxu0 0.0
      %1582 = vmatprep.mubr.f32.mxu0 0.0
      %1583 = vmatmul.mubr.f32.gmra.mrb[0].mxu0 %v1495
      %v1584 = vpop.f32.mrb[0].mxu0
      %v1585 = vadd.f32 %v1492, %v1584
      %v1586 = vpop.f32.mrb[0].mxu0
      %1587 = vmatprep.mubr.f32.mxu0 0.0
      %1588 = vmatmul.mubr.f32.gmra.mrb[0].mxu0 %v1498
      %v1589 = vpop.f32.mrb[0].mxu0
      %v1590 = vadd.f32 %v1492, %v1589
      %v1591 = vpop.f32.mrb[0].mxu0
      %1592 = vmatprep.mubr.f32.mxu0 0.0
      %1593 = vmatmul.mubr.f32.gmra.mrb[0].mxu0 %v1501
      %v1594 = vpop.f32.mrb[0].mxu0
      %v1595 = vadd.f32 %v1492, %v1594
      %v1596 = vpop.f32.mrb[0].mxu0
      %1597 = vmatprep.mubr.f32.mxu0 0.0
      %1598 = vmatmul.mubr.f32.gmra.mrb[0].mxu0 %v1504
      %v1599 = vpop.f32.mrb[0].mxu0
      %v1600 = vadd.f32 %v1492, %v1599
      %v1601 = vpop.f32.mrb[0].mxu0
      %1602 = vmatprep.mubr.f32.mxu0 0.0
      %1603 = vmatmul.mubr.f32.gmra.mrb[0].mxu0 %v1507
      %v1604 = vpop.f32.mrb[0].mxu0
      %v1605 = vadd.f32 %v1492, %v1604
      %v1606 = vpop.f32.mrb[0].mxu0
      %1607 = vmatprep.mubr.f32.mxu0 0.0
      %1608 = vmatmul.mubr.f32.gmra.mrb[0].mxu0 %v1510
      %v1609 = vpop.f32.mrb[0].mxu0
      %v1610 = vadd.f32 %v1492, %v1609
      %v1611 = vpop.f32.mrb[0].mxu0
      %1612 = vmatprep.mubr.f32.mxu0 0.0
      %1613 = vmatmul.mubr.f32.gmra.mrb[0].mxu0 %v1513
      %v1614 = vpop.f32.mrb[0].mxu0
      %v1615 = vadd.f32 %v1492, %v1614
      %v1616 = vpop.f32.mrb[0].mxu0
      %1617 = vmatprep.mubr.f32.mxu0 0.0
      %1618 = vmatmul.mubr.f32.gmra.mrb[0].mxu0 %v1516
      %v1619 = vpop.f32.mrb[0].mxu0
      %v1620 = vadd.f32 %v1492, %v1619
      %v1621 = vpop.f32.mrb[0].mxu0
      %1622 = vdwg.mxu0
      %v1623 = vmul.f32 %v1585, %v1585
      %v1624 = vmul.f32 %v1590, %v1590
      %v1625 = vmul.f32 %v1595, %v1595
      %v1626 = vmul.f32 %v1600, %v1600
      %v1627 = vmul.f32 %v1605, %v1605
      %v1628 = vmul.f32 %v1610, %v1610
      %v1629 = vmul.f32 %v1615, %v1615
      %v1630 = vmul.f32 %v1620, %v1620
      %v1631 = vmul.f32 %v1585, %v1623
      %v1632 = vmul.f32 %v1590, %v1624
      %v1633 = vmul.f32 %v1595, %v1625
      %v1634 = vmul.f32 %v1600, %v1626
      %v1635 = vmul.f32 %v1605, %v1627
      %v1636 = vmul.f32 %v1610, %v1628
      %v1637 = vmul.f32 %v1615, %v1629
      %v1638 = vmul.f32 %v1620, %v1630
      %v1639 = vmul.f32 %v1631, 0.044715
      %v1640 = vmul.f32 %v1632, 0.044715
      %v1641 = vmul.f32 %v1633, 0.044715
      %v1642 = vmul.f32 %v1634, 0.044715
      %v1643 = vmul.f32 %v1635, 0.044715
      %v1644 = vmul.f32 %v1636, 0.044715
      %v1645 = vmul.f32 %v1637, 0.044715
      %v1646 = vmul.f32 %v1638, 0.044715
      %v1647 = vadd.f32 %v1585, %v1639
      %v1648 = vadd.f32 %v1590, %v1640
      %v1649 = vadd.f32 %v1595, %v1641
      %v1650 = vadd.f32 %v1600, %v1642
      %v1651 = vadd.f32 %v1605, %v1643
      %v1652 = vadd.f32 %v1610, %v1644
      %v1653 = vadd.f32 %v1615, %v1645
      %v1654 = vadd.f32 %v1620, %v1646
      %v1655 = vmul.f32 %v1647, 0.7978846
      %v1656 = vmul.f32 %v1648, 0.7978846
      %v1657 = vmul.f32 %v1649, 0.7978846
      %v1658 = vmul.f32 %v1650, 0.7978846
      %v1659 = vmul.f32 %v1651, 0.7978846
      %v1660 = vmul.f32 %v1652, 0.7978846
      %v1661 = vmul.f32 %v1653, 0.7978846
      %v1662 = vmul.f32 %v1654, 0.7978846
      %v1663 = vtanh.pop %v1655
      %v1664 = vtanh.pop %v1656
      %v1665 = vtanh.pop %v1657
      %v1666 = vtanh.pop %v1658
      %v1667 = vtanh.pop %v1659
      %v1668 = vtanh.pop %v1660
      %v1669 = vtanh.pop %v1661
      %v1670 = vtanh.pop %v1662
      %v1671 = vadd.f32 %v1663, 1.0
      %v1672 = vadd.f32 %v1664, 1.0
      %v1673 = vadd.f32 %v1665, 1.0
      %v1674 = vadd.f32 %v1666, 1.0
      %v1675 = vadd.f32 %v1667, 1.0
      %v1676 = vadd.f32 %v1668, 1.0
      %v1677 = vadd.f32 %v1669, 1.0
      %v1678 = vadd.f32 %v1670, 1.0
      %v1679 = vmul.f32 %v1671, 0.5
      %v1680 = vmul.f32 %v1672, 0.5
      %v1681 = vmul.f32 %v1673, 0.5
      %v1682 = vmul.f32 %v1674, 0.5
      %v1683 = vmul.f32 %v1675, 0.5
      %v1684 = vmul.f32 %v1676, 0.5
      %v1685 = vmul.f32 %v1677, 0.5
      %v1686 = vmul.f32 %v1678, 0.5
      %v1687 = vmul.f32 %v1585, %v1679
      %v1688 = vmul.f32 %v1590, %v1680
      %v1689 = vmul.f32 %v1595, %v1681
      %v1690 = vmul.f32 %v1600, %v1682
      %v1691 = vmul.f32 %v1605, %v1683
      %v1692 = vmul.f32 %v1610, %v1684
      %v1693 = vmul.f32 %v1615, %v1685
      %v1694 = vmul.f32 %v1620, %v1686
      %v1695 = vld [vmem:[%s12] sm:$0xff]
      %v1696 = vld [vmem:[%s12 + $0x8] sm:$0xff]
      %v1697 = vld [vmem:[%s12 + $0x10] sm:$0xff]
      %v1698 = vld [vmem:[%s12 + $0x18] sm:$0xff]
      %v1699 = vld [vmem:[%s12 + $0x20] sm:$0xff]
      %v1700 = vld [vmem:[%s12 + $0x28] sm:$0xff]
      %v1701 = vld [vmem:[%s12 + $0x30] sm:$0xff]
      %v1702 = vld [vmem:[%s12 + $0x38] sm:$0xff]
      %v1703 = vld [vmem:[%s12 + $0x40] sm:$0xff]
      %v1704 = vld [vmem:[%s12 + $0x48] sm:$0xff]
      %v1705 = vld [vmem:[%s12 + $0x50] sm:$0xff]
      %v1706 = vld [vmem:[%s12 + $0x58] sm:$0xff]
      %v1707 = vld [vmem:[%s12 + $0x60] sm:$0xff]
      %v1708 = vld [vmem:[%s12 + $0x68] sm:$0xff]
      %v1709 = vld [vmem:[%s12 + $0x70] sm:$0xff]
      %v1710 = vld [vmem:[%s12 + $0x78] sm:$0xff]
      %v1711 = vld [vmem:[%s13] sm:$0x1]
      %v1713 = vlaneseq
      %v1714 = vshrl.u32 %v1713, 7
      %v1715 = vsub.s32 0, %v1714
      %v1716 = vrot.slane %v1711, %v1715
      %1718 = vmatprep.subr.mxu0 0.0
      %1719 = vmatpush1.msra.mxu0 %v1695
      %1720 = vmatprep.subr.mxu0 0.0
      %1721 = vmatpush1.msra.mxu0 %v1696
      %1722 = vmatprep.subr.mxu0 0.0
      %1723 = vmatpush1.msra.mxu0 %v1697
      %1724 = vmatprep.subr.mxu0 0.0
      %1725 = vmatpush1.msra.mxu0 %v1698
      %1726 = vmatprep.subr.mxu0 0.0
      %1727 = vmatpush1.msra.mxu0 %v1699
      %1728 = vmatprep.subr.mxu0 0.0
      %1729 = vmatpush1.msra.mxu0 %v1700
      %1730 = vmatprep.subr.mxu0 0.0
      %1731 = vmatpush1.msra.mxu0 %v1701
      %1732 = vmatprep.subr.mxu0 0.0
      %1733 = vmatpush1.msra.mxu0 %v1702
      %1734 = vmatprep.subr.mxu0 0.0
      %1735 = vmatpush1.msra.mxu0 %v1703
      %1736 = vmatprep.subr.mxu0 0.0
      %1737 = vmatpush1.msra.mxu0 %v1704
      %1738 = vmatprep.subr.mxu0 0.0
      %1739 = vmatpush1.msra.mxu0 %v1705
      %1740 = vmatprep.subr.mxu0 0.0
      %1741 = vmatpush1.msra.mxu0 %v1706
      %1742 = vmatprep.subr.mxu0 0.0
      %1743 = vmatpush1.msra.mxu0 %v1707
      %1744 = vmatprep.subr.mxu0 0.0
      %1745 = vmatpush1.msra.mxu0 %v1708
      %1746 = vmatprep.subr.mxu0 0.0
      %1747 = vmatpush1.msra.mxu0 %v1709
      %1748 = vmatprep.subr.mxu0 0.0
      %1749 = vmatpush1.msra.mxu0 %v1710
      %1750 = vmatprep.subr.mxu0 0.0
      %1751 = vmatpush1.msra.mxu0 0.0
      %1752 = vmatprep.subr.mxu0 0.0
      %1753 = vmatpush1.msra.mxu0 0.0
      %1754 = vmatprep.subr.mxu0 0.0
      %1755 = vmatpush1.msra.mxu0 0.0
      %1756 = vmatprep.subr.mxu0 0.0
      %1757 = vmatpush1.msra.mxu0 0.0
      %1758 = vmatprep.subr.mxu0 0.0
      %1759 = vmatpush1.msra.mxu0 0.0
      %1760 = vmatprep.subr.mxu0 0.0
      %1761 = vmatpush1.msra.mxu0 0.0
      %1762 = vmatprep.subr.mxu0 0.0
      %1763 = vmatpush1.msra.mxu0 0.0
      %1764 = vmatprep.subr.mxu0 0.0
      %1765 = vmatpush1.msra.mxu0 0.0
      %1766 = vmatprep.subr.mxu0 0.0
      %1767 = vmatpush1.msra.mxu0 0.0
      %1768 = vmatprep.subr.mxu0 0.0
      %1769 = vmatpush1.msra.mxu0 0.0
      %1770 = vmatprep.subr.mxu0 0.0
      %1771 = vmatpush1.msra.mxu0 0.0
      %1772 = vmatprep.subr.mxu0 0.0
      %1773 = vmatpush1.msra.mxu0 0.0
      %1774 = vmatprep.subr.mxu0 0.0
      %1775 = vmatpush1.msra.mxu0 0.0
      %1776 = vmatprep.subr.mxu0 0.0
      %1777 = vmatpush1.msra.mxu0 0.0
      %1778 = vmatprep.subr.mxu0 0.0
      %1779 = vmatpush1.msra.mxu0 0.0
      %1780 = vmatprep.subr.mxu0 0.0
      %1781 = vmatpush1.msra.mxu0 0.0
      %1782 = vmatprep.mubr.f32.mxu0 0.0
      %1783 = vmatmul.mubr.f32.gmra.mrb[0].mxu0 %v1687
      %v1784 = vpop.f32.mrb[0].mxu0
      %v1785 = vadd.f32 %v1716, %v1784
      %v1786 = vpop.f32.mrb[0].mxu0
      %1787 = vmatprep.mubr.f32.mxu0 0.0
      %1788 = vmatmul.mubr.f32.gmra.mrb[0].mxu0 %v1688
      %v1789 = vpop.f32.mrb[0].mxu0
      %v1790 = vadd.f32 %v1716, %v1789
      %v1791 = vpop.f32.mrb[0].mxu0
      %1792 = vmatprep.mubr.f32.mxu0 0.0
      %1793 = vmatmul.mubr.f32.gmra.mrb[0].mxu0 %v1689
      %v1794 = vpop.f32.mrb[0].mxu0
      %v1795 = vadd.f32 %v1716, %v1794
      %v1796 = vpop.f32.mrb[0].mxu0
      %1797 = vmatprep.mubr.f32.mxu0 0.0
      %1798 = vmatmul.mubr.f32.gmra.mrb[0].mxu0 %v1690
      %v1799 = vpop.f32.mrb[0].mxu0
      %v1800 = vadd.f32 %v1716, %v1799
      %v1801 = vpop.f32.mrb[0].mxu0
      %1802 = vmatprep.mubr.f32.mxu0 0.0
      %1803 = vmatmul.mubr.f32.gmra.mrb[0].mxu0 %v1691
      %v1804 = vpop.f32.mrb[0].mxu0
      %v1805 = vadd.f32 %v1716, %v1804
      %v1806 = vpop.f32.mrb[0].mxu0
      %1807 = vmatprep.mubr.f32.mxu0 0.0
      %1808 = vmatmul.mubr.f32.gmra.mrb[0].mxu0 %v1692
      %v1809 = vpop.f32.mrb[0].mxu0
      %v1810 = vadd.f32 %v1716, %v1809
      %v1811 = vpop.f32.mrb[0].mxu0
      %1812 = vmatprep.mubr.f32.mxu0 0.0
      %1813 = vmatmul.mubr.f32.gmra.mrb[0].mxu0 %v1693
      %v1814 = vpop.f32.mrb[0].mxu0
      %v1815 = vadd.f32 %v1716, %v1814
      %v1816 = vpop.f32.mrb[0].mxu0
      %1817 = vmatprep.mubr.f32.mxu0 0.0
      %1818 = vmatmul.mubr.f32.gmra.mrb[0].mxu0 %v1694
      %v1819 = vpop.f32.mrb[0].mxu0
      %v1820 = vadd.f32 %v1716, %v1819
      %v1821 = vpop.f32.mrb[0].mxu0
      %1822 = vdwg.mxu0
      %v1823 = vadd.f32 %v1341, %v1785
      %v1824 = vadd.f32 %v1342, %v1790
      %v1825 = vadd.f32 %v1343, %v1795
      %v1826 = vadd.f32 %v1344, %v1800
      %v1827 = vadd.f32 %v1345, %v1805
      %v1828 = vadd.f32 %v1346, %v1810
      %v1829 = vadd.f32 %v1347, %v1815
      %v1830 = vadd.f32 %v1348, %v1820
      %s1831 = scalar_lea.vmem %s2, 1
      %v1832 = vld [vmem:[%s1831] sm:$0x1]
      %s1833 = scalar_lea.vmem %s3, 1
      %v1834 = vld [vmem:[%s1833] sm:$0x1]
      %v1835 = vsel %vm481, %v1823, 0.0
      %1836 = vadd.xlane.f32.xlu0 %v1835
      %v1837 = vpop.xlane.xlu0 %1836
      %v1838 = vsel %vm481, %v1824, 0.0
      %1839 = vadd.xlane.f32.xlu0 %v1838
      %v1840 = vpop.xlane.xlu0 %1839
      %v1841 = vsel %vm481, %v1825, 0.0
      %1842 = vadd.xlane.f32.xlu0 %v1841
      %v1843 = vpop.xlane.xlu0 %1842
      %v1844 = vsel %vm481, %v1826, 0.0
      %1845 = vadd.xlane.f32.xlu0 %v1844
      %v1846 = vpop.xlane.xlu0 %1845
      %v1847 = vsel %vm481, %v1827, 0.0
      %1848 = vadd.xlane.f32.xlu0 %v1847
      %v1849 = vpop.xlane.xlu0 %1848
      %v1850 = vsel %vm481, %v1828, 0.0
      %1851 = vadd.xlane.f32.xlu0 %v1850
      %v1852 = vpop.xlane.xlu0 %1851
      %v1853 = vsel %vm481, %v1829, 0.0
      %1854 = vadd.xlane.f32.xlu0 %v1853
      %v1855 = vpop.xlane.xlu0 %1854
      %v1856 = vsel %vm481, %v1830, 0.0
      %1857 = vadd.xlane.f32.xlu0 %v1856
      %v1858 = vpop.xlane.xlu0 %1857
      %v1859 = vmul.f32 %v1837, %v506
      %v1860 = vmul.f32 %v1840, %v506
      %v1861 = vmul.f32 %v1843, %v506
      %v1862 = vmul.f32 %v1846, %v506
      %v1863 = vmul.f32 %v1849, %v506
      %v1864 = vmul.f32 %v1852, %v506
      %v1865 = vmul.f32 %v1855, %v506
      %v1866 = vmul.f32 %v1858, %v506
      %v1867 = vsub.f32 %v1823, %v1859
      %v1868 = vsub.f32 %v1824, %v1860
      %v1869 = vsub.f32 %v1825, %v1861
      %v1870 = vsub.f32 %v1826, %v1862
      %v1871 = vsub.f32 %v1827, %v1863
      %v1872 = vsub.f32 %v1828, %v1864
      %v1873 = vsub.f32 %v1829, %v1865
      %v1874 = vsub.f32 %v1830, %v1866
      %v1875 = vmul.f32 %v1867, %v1867
      %v1876 = vmul.f32 %v1868, %v1868
      %v1877 = vmul.f32 %v1869, %v1869
      %v1878 = vmul.f32 %v1870, %v1870
      %v1879 = vmul.f32 %v1871, %v1871
      %v1880 = vmul.f32 %v1872, %v1872
      %v1881 = vmul.f32 %v1873, %v1873
      %v1882 = vmul.f32 %v1874, %v1874
      %v1883 = vsel %vm481, %v1875, 0.0
      %1884 = vadd.xlane.f32.xlu0 %v1883
      %v1885 = vpop.xlane.xlu0 %1884
      %v1886 = vsel %vm481, %v1876, 0.0
      %1887 = vadd.xlane.f32.xlu0 %v1886
      %v1888 = vpop.xlane.xlu0 %1887
      %v1889 = vsel %vm481, %v1877, 0.0
      %1890 = vadd.xlane.f32.xlu0 %v1889
      %v1891 = vpop.xlane.xlu0 %1890
      %v1892 = vsel %vm481, %v1878, 0.0
      %1893 = vadd.xlane.f32.xlu0 %v1892
      %v1894 = vpop.xlane.xlu0 %1893
      %v1895 = vsel %vm481, %v1879, 0.0
      %1896 = vadd.xlane.f32.xlu0 %v1895
      %v1897 = vpop.xlane.xlu0 %1896
      %v1898 = vsel %vm481, %v1880, 0.0
      %1899 = vadd.xlane.f32.xlu0 %v1898
      %v1900 = vpop.xlane.xlu0 %1899
      %v1901 = vsel %vm481, %v1881, 0.0
      %1902 = vadd.xlane.f32.xlu0 %v1901
      %v1903 = vpop.xlane.xlu0 %1902
      %v1904 = vsel %vm481, %v1882, 0.0
      %1905 = vadd.xlane.f32.xlu0 %v1904
      %v1906 = vpop.xlane.xlu0 %1905
      %v1907 = vmul.f32 %v1885, %v506
      %v1908 = vmul.f32 %v1888, %v506
      %v1909 = vmul.f32 %v1891, %v506
      %v1910 = vmul.f32 %v1894, %v506
      %v1911 = vmul.f32 %v1897, %v506
      %v1912 = vmul.f32 %v1900, %v506
      %v1913 = vmul.f32 %v1903, %v506
      %v1914 = vmul.f32 %v1906, %v506
      %v1915 = vadd.f32 %v1907, 1e-05
      %v1916 = vadd.f32 %v1908, 1e-05
      %v1917 = vadd.f32 %v1909, 1e-05
      %v1918 = vadd.f32 %v1910, 1e-05
      %v1919 = vadd.f32 %v1911, 1e-05
      %v1920 = vadd.f32 %v1912, 1e-05
      %v1921 = vadd.f32 %v1913, 1e-05
      %v1922 = vadd.f32 %v1914, 1e-05
      %v1923 = vrsqrt.pop %v1915
      %v1924 = vrsqrt.pop %v1916
      %v1925 = vrsqrt.pop %v1917
      %v1926 = vrsqrt.pop %v1918
      %v1927 = vrsqrt.pop %v1919
      %v1928 = vrsqrt.pop %v1920
      %v1929 = vrsqrt.pop %v1921
      %v1930 = vrsqrt.pop %v1922
      %v1931 = vmul.f32 %v1867, %v1923
      %v1932 = vmul.f32 %v1868, %v1924
      %v1933 = vmul.f32 %v1869, %v1925
      %v1934 = vmul.f32 %v1870, %v1926
      %v1935 = vmul.f32 %v1871, %v1927
      %v1936 = vmul.f32 %v1872, %v1928
      %v1937 = vmul.f32 %v1873, %v1929
      %v1938 = vmul.f32 %v1874, %v1930
      %v1940 = vlaneseq
      %v1941 = vshrl.u32 %v1940, 7
      %v1942 = vsub.s32 0, %v1941
      %v1943 = vrot.slane %v1832, %v1942
      %v1945 = vmul.f32 %v1931, %v1943
      %v1946 = vmul.f32 %v1932, %v1943
      %v1947 = vmul.f32 %v1933, %v1943
      %v1948 = vmul.f32 %v1934, %v1943
      %v1949 = vmul.f32 %v1935, %v1943
      %v1950 = vmul.f32 %v1936, %v1943
      %v1951 = vmul.f32 %v1937, %v1943
      %v1952 = vmul.f32 %v1938, %v1943
      %v1954 = vlaneseq
      %v1955 = vshrl.u32 %v1954, 7
      %v1956 = vsub.s32 0, %v1955
      %v1957 = vrot.slane %v1834, %v1956
      %v1959 = vadd.f32 %v1945, %v1957
      %v1960 = vadd.f32 %v1946, %v1957
      %v1961 = vadd.f32 %v1947, %v1957
      %v1962 = vadd.f32 %v1948, %v1957
      %v1963 = vadd.f32 %v1949, %v1957
      %v1964 = vadd.f32 %v1950, %v1957
      %v1965 = vadd.f32 %v1951, %v1957
      %v1966 = vadd.f32 %v1952, %v1957
      loop: start=0, step=1, limit=4
      $region84: #{basic_layer_forward.1} parent=75 // loop_pre_header
        _
      $region85: #{basic_layer_forward.1} parent=75 // loop_header
        %s1968 = sphi 0, %s1972
        %p1969 = scmp.ge.s32.totalorder %s1968, 4
        %v1973 = vphi 0.0, %v2674
        %v1974 = vphi 0.0, %v2675
        %v1975 = vphi 0.0, %v2676
        %v1976 = vphi 0.0, %v2677
        %v1977 = vphi 0.0, %v2678
        %v1978 = vphi 0.0, %v2679
        %v1979 = vphi 0.0, %v2680
        %v1980 = vphi 0.0, %v2681
      $region86: #{basic_layer_forward.1} parent=75 // loop_header_branch
        %1971 = sbr.rel (%p1969) target = $region90
      $region87: #{basic_layer_forward.1} parent=75 // loop_body
        %s1981 = smul.u32 %s1968, 32
        %s1982 = sadd.s32 %s1981, 128
        %s1983 = scalar_lea.vmem %s4, %s1982
        %v1984 = vld [vmem:[%s1983] sm:$0xff]
        %v1985 = vld [vmem:[%s1983 + $0x8] sm:$0xff]
        %v1986 = vld [vmem:[%s1983 + $0x10] sm:$0xff]
        %v1987 = vld [vmem:[%s1983 + $0x18] sm:$0xff]
        %s1988 = sadd.s32 %s1968, 4
        %s1989 = scalar_lea.vmem %s5, %s1988
        %v1990 = vld [vmem:[%s1989] sm:$0x1]
        %v1992 = vlaneseq
        %v1993 = vshrl.u32 %v1992, 7
        %v1994 = vsub.s32 0, %v1993
        %v1995 = vrot.slane %v1990, %v1994
        %v1998 = vsel %vm481, %v1959, 0
        %v2001 = vsel %vm481, %v1960, 0
        %v2004 = vsel %vm481, %v1961, 0
        %v2007 = vsel %vm481, %v1962, 0
        %v2010 = vsel %vm481, %v1963, 0
        %v2013 = vsel %vm481, %v1964, 0
        %v2016 = vsel %vm481, %v1965, 0
        %v2019 = vsel %vm481, %v1966, 0
        %2021 = vmatprep.subr.mxu0 0.0
        %2022 = vmatpush1.msra.mxu0 %v1984
        %2023 = vmatprep.subr.mxu0 0.0
        %2024 = vmatpush1.msra.mxu0 %v1985
        %2025 = vmatprep.subr.mxu0 0.0
        %2026 = vmatpush1.msra.mxu0 %v1986
        %2027 = vmatprep.subr.mxu0 0.0
        %2028 = vmatpush1.msra.mxu0 %v1987
        %2029 = vmatprep.subr.mxu0 0.0
        %2030 = vmatpush1.msra.mxu0 0.0
        %2031 = vmatprep.subr.mxu0 0.0
        %2032 = vmatpush1.msra.mxu0 0.0
        %2033 = vmatprep.subr.mxu0 0.0
        %2034 = vmatpush1.msra.mxu0 0.0
        %2035 = vmatprep.subr.mxu0 0.0
        %2036 = vmatpush1.msra.mxu0 0.0
        %2037 = vmatprep.subr.mxu0 0.0
        %2038 = vmatpush1.msra.mxu0 0.0
        %2039 = vmatprep.subr.mxu0 0.0
        %2040 = vmatpush1.msra.mxu0 0.0
        %2041 = vmatprep.subr.mxu0 0.0
        %2042 = vmatpush1.msra.mxu0 0.0
        %2043 = vmatprep.subr.mxu0 0.0
        %2044 = vmatpush1.msra.mxu0 0.0
        %2045 = vmatprep.subr.mxu0 0.0
        %2046 = vmatpush1.msra.mxu0 0.0
        %2047 = vmatprep.subr.mxu0 0.0
        %2048 = vmatpush1.msra.mxu0 0.0
        %2049 = vmatprep.subr.mxu0 0.0
        %2050 = vmatpush1.msra.mxu0 0.0
        %2051 = vmatprep.subr.mxu0 0.0
        %2052 = vmatpush1.msra.mxu0 0.0
        %2053 = vmatprep.subr.mxu0 0.0
        %2054 = vmatpush1.msra.mxu0 0.0
        %2055 = vmatprep.subr.mxu0 0.0
        %2056 = vmatpush1.msra.mxu0 0.0
        %2057 = vmatprep.subr.mxu0 0.0
        %2058 = vmatpush1.msra.mxu0 0.0
        %2059 = vmatprep.subr.mxu0 0.0
        %2060 = vmatpush1.msra.mxu0 0.0
        %2061 = vmatprep.subr.mxu0 0.0
        %2062 = vmatpush1.msra.mxu0 0.0
        %2063 = vmatprep.subr.mxu0 0.0
        %2064 = vmatpush1.msra.mxu0 0.0
        %2065 = vmatprep.subr.mxu0 0.0
        %2066 = vmatpush1.msra.mxu0 0.0
        %2067 = vmatprep.subr.mxu0 0.0
        %2068 = vmatpush1.msra.mxu0 0.0
        %2069 = vmatprep.subr.mxu0 0.0
        %2070 = vmatpush1.msra.mxu0 0.0
        %2071 = vmatprep.subr.mxu0 0.0
        %2072 = vmatpush1.msra.mxu0 0.0
        %2073 = vmatprep.subr.mxu0 0.0
        %2074 = vmatpush1.msra.mxu0 0.0
        %2075 = vmatprep.subr.mxu0 0.0
        %2076 = vmatpush1.msra.mxu0 0.0
        %2077 = vmatprep.subr.mxu0 0.0
        %2078 = vmatpush1.msra.mxu0 0.0
        %2079 = vmatprep.subr.mxu0 0.0
        %2080 = vmatpush1.msra.mxu0 0.0
        %2081 = vmatprep.subr.mxu0 0.0
        %2082 = vmatpush1.msra.mxu0 0.0
        %2083 = vmatprep.subr.mxu0 0.0
        %2084 = vmatpush1.msra.mxu0 0.0
        %2085 = vmatprep.mubr.f32.mxu0 0.0
        %2086 = vmatmul.mubr.f32.gmra.mrb[0].mxu0 %v1998
        %v2087 = vpop.f32.mrb[0].mxu0
        %v2088 = vadd.f32 %v1995, %v2087
        %v2089 = vpop.f32.mrb[0].mxu0
        %2090 = vmatprep.mubr.f32.mxu0 0.0
        %2091 = vmatmul.mubr.f32.gmra.mrb[0].mxu0 %v2001
        %v2092 = vpop.f32.mrb[0].mxu0
        %v2093 = vadd.f32 %v1995, %v2092
        %v2094 = vpop.f32.mrb[0].mxu0
        %2095 = vmatprep.mubr.f32.mxu0 0.0
        %2096 = vmatmul.mubr.f32.gmra.mrb[0].mxu0 %v2004
        %v2097 = vpop.f32.mrb[0].mxu0
        %v2098 = vadd.f32 %v1995, %v2097
        %v2099 = vpop.f32.mrb[0].mxu0
        %2100 = vmatprep.mubr.f32.mxu0 0.0
        %2101 = vmatmul.mubr.f32.gmra.mrb[0].mxu0 %v2007
        %v2102 = vpop.f32.mrb[0].mxu0
        %v2103 = vadd.f32 %v1995, %v2102
        %v2104 = vpop.f32.mrb[0].mxu0
        %2105 = vmatprep.mubr.f32.mxu0 0.0
        %2106 = vmatmul.mubr.f32.gmra.mrb[0].mxu0 %v2010
        %v2107 = vpop.f32.mrb[0].mxu0
        %v2108 = vadd.f32 %v1995, %v2107
        %v2109 = vpop.f32.mrb[0].mxu0
        %2110 = vmatprep.mubr.f32.mxu0 0.0
        %2111 = vmatmul.mubr.f32.gmra.mrb[0].mxu0 %v2013
        %v2112 = vpop.f32.mrb[0].mxu0
        %v2113 = vadd.f32 %v1995, %v2112
        %v2114 = vpop.f32.mrb[0].mxu0
        %2115 = vmatprep.mubr.f32.mxu0 0.0
        %2116 = vmatmul.mubr.f32.gmra.mrb[0].mxu0 %v2016
        %v2117 = vpop.f32.mrb[0].mxu0
        %v2118 = vadd.f32 %v1995, %v2117
        %v2119 = vpop.f32.mrb[0].mxu0
        %2120 = vmatprep.mubr.f32.mxu0 0.0
        %2121 = vmatmul.mubr.f32.gmra.mrb[0].mxu0 %v2019
        %v2122 = vpop.f32.mrb[0].mxu0
        %v2123 = vadd.f32 %v1995, %v2122
        %v2124 = vpop.f32.mrb[0].mxu0
        %2125 = vdwg.mxu0
        %s2126 = smul.u32 %s1968, 64
        %s2127 = sadd.s32 %s2126, 256
        %s2128 = scalar_lea.vmem %s1, %s2127
        %v2129 = vld [vmem:[%s2128] sm:$0xff]
        %v2130 = vld [vmem:[%s2128 + $0x8] sm:$0xff]
        %v2131 = vld [vmem:[%s2128 + $0x10] sm:$0xff]
        %v2132 = vld [vmem:[%s2128 + $0x18] sm:$0xff]
        %v2133 = vld [vmem:[%s2128 + $0x20] sm:$0xff]
        %v2134 = vld [vmem:[%s2128 + $0x28] sm:$0xff]
        %v2135 = vld [vmem:[%s2128 + $0x30] sm:$0xff]
        %v2136 = vld [vmem:[%s2128 + $0x38] sm:$0xff]
        %2145 = vrot.lane.b32.xlu0 %v2088, 120
        %v2146 = vpop.permute.xlu0 %2145
        %2147 = vrot.lane.b32.xlu0 %v2093, 120
        %v2148 = vpop.permute.xlu0 %2147
        %2149 = vrot.lane.b32.xlu0 %v2098, 120
        %v2150 = vpop.permute.xlu0 %2149
        %2151 = vrot.lane.b32.xlu0 %v2103, 120
        %v2152 = vpop.permute.xlu0 %2151
        %2153 = vrot.lane.b32.xlu0 %v2108, 120
        %v2154 = vpop.permute.xlu0 %2153
        %2155 = vrot.lane.b32.xlu0 %v2113, 120
        %v2156 = vpop.permute.xlu0 %2155
        %2157 = vrot.lane.b32.xlu0 %v2118, 120
        %v2158 = vpop.permute.xlu0 %2157
        %2159 = vrot.lane.b32.xlu0 %v2123, 120
        %v2160 = vpop.permute.xlu0 %2159
        %vm2161 = vcmask 64512
        %v2162 = vsel %vm2161, %v2088, 0
        %v2164 = vsel %vm2161, %v2093, 0
        %v2166 = vsel %vm2161, %v2098, 0
        %v2168 = vsel %vm2161, %v2103, 0
        %v2170 = vsel %vm2161, %v2108, 0
        %v2172 = vsel %vm2161, %v2113, 0
        %v2174 = vsel %vm2161, %v2118, 0
        %v2176 = vsel %vm2161, %v2123, 0
        %v2178 = vsel %vm2161, %v2146, 0
        %v2180 = vsel %vm2161, %v2148, 0
        %v2182 = vsel %vm2161, %v2150, 0
        %v2184 = vsel %vm2161, %v2152, 0
        %v2186 = vsel %vm2161, %v2154, 0
        %v2188 = vsel %vm2161, %v2156, 0
        %v2190 = vsel %vm2161, %v2158, 0
        %v2192 = vsel %vm2161, %v2160, 0
        %2194 = vmatprep.subr.mxu0 0.0
        %2195 = vmatpush1.xpose.msra.mxu0 %v2178
        %2196 = vmatprep.subr.mxu0 0.0
        %2197 = vmatpush1.xpose.msra.mxu0 %v2180
        %2198 = vmatprep.subr.mxu0 0.0
        %2199 = vmatpush1.xpose.msra.mxu0 %v2182
        %2200 = vmatprep.subr.mxu0 0.0
        %2201 = vmatpush1.xpose.msra.mxu0 %v2184
        %2202 = vmatprep.subr.mxu0 0.0
        %2203 = vmatpush1.xpose.msra.mxu0 %v2186
        %2204 = vmatprep.subr.mxu0 0.0
        %2205 = vmatpush1.xpose.msra.mxu0 %v2188
        %2206 = vmatprep.subr.mxu0 0.0
        %2207 = vmatpush1.xpose.msra.mxu0 %v2190
        %2208 = vmatprep.subr.mxu0 0.0
        %2209 = vmatpush1.xpose.msra.mxu0 %v2192
        %2210 = vmatprep.subr.mxu0 0.0
        %2211 = vmatpush1.xpose.msra.mxu0 0.0
        %2212 = vmatprep.subr.mxu0 0.0
        %2213 = vmatpush1.xpose.msra.mxu0 0.0
        %2214 = vmatprep.subr.mxu0 0.0
        %2215 = vmatpush1.xpose.msra.mxu0 0.0
        %2216 = vmatprep.subr.mxu0 0.0
        %2217 = vmatpush1.xpose.msra.mxu0 0.0
        %2218 = vmatprep.subr.mxu0 0.0
        %2219 = vmatpush1.xpose.msra.mxu0 0.0
        %2220 = vmatprep.subr.mxu0 0.0
        %2221 = vmatpush1.xpose.msra.mxu0 0.0
        %2222 = vmatprep.subr.mxu0 0.0
        %2223 = vmatpush1.xpose.msra.mxu0 0.0
        %2224 = vmatprep.subr.mxu0 0.0
        %2225 = vmatpush1.xpose.msra.mxu0 0.0
        %2226 = vmatprep.subr.mxu0 0.0
        %2227 = vmatpush1.xpose.msra.mxu0 0.0
        %2228 = vmatprep.subr.mxu0 0.0
        %2229 = vmatpush1.xpose.msra.mxu0 0.0
        %2230 = vmatprep.subr.mxu0 0.0
        %2231 = vmatpush1.xpose.msra.mxu0 0.0
        %2232 = vmatprep.subr.mxu0 0.0
        %2233 = vmatpush1.xpose.msra.mxu0 0.0
        %2234 = vmatprep.subr.mxu0 0.0
        %2235 = vmatpush1.xpose.msra.mxu0 0.0
        %2236 = vmatprep.subr.mxu0 0.0
        %2237 = vmatpush1.xpose.msra.mxu0 0.0
        %2238 = vmatprep.subr.mxu0 0.0
        %2239 = vmatpush1.xpose.msra.mxu0 0.0
        %2240 = vmatprep.subr.mxu0 0.0
        %2241 = vmatpush1.xpose.msra.mxu0 0.0
        %2242 = vmatprep.subr.mxu0 0.0
        %2243 = vmatpush1.xpose.msra.mxu0 0.0
        %2244 = vmatprep.subr.mxu0 0.0
        %2245 = vmatpush1.xpose.msra.mxu0 0.0
        %2246 = vmatprep.subr.mxu0 0.0
        %2247 = vmatpush1.xpose.msra.mxu0 0.0
        %2248 = vmatprep.subr.mxu0 0.0
        %2249 = vmatpush1.xpose.msra.mxu0 0.0
        %2250 = vmatprep.subr.mxu0 0.0
        %2251 = vmatpush1.xpose.msra.mxu0 0.0
        %2252 = vmatprep.subr.mxu0 0.0
        %2253 = vmatpush1.xpose.msra.mxu0 0.0
        %2254 = vmatprep.subr.mxu0 0.0
        %2255 = vmatpush1.xpose.msra.mxu0 0.0
        %2256 = vmatprep.subr.mxu0 0.0
        %2257 = vmatpush1.xpose.msra.mxu0 0.0
        %2258 = vmatprep.mubr.f32.mxu0 0.0
        %2259 = vmatmul.mubr.f32.gmra.mrb[0].mxu0 %v2162
        %v2260 = vpop.f32.mrb[0].mxu0
        %v2261 = vadd.f32 %v2129, %v2260
        %v2262 = vpop.f32.mrb[0].mxu0
        %2263 = vmatprep.mubr.f32.mxu0 0.0
        %2264 = vmatmul.mubr.f32.gmra.mrb[0].mxu0 %v2164
        %v2265 = vpop.f32.mrb[0].mxu0
        %v2266 = vadd.f32 %v2130, %v2265
        %v2267 = vpop.f32.mrb[0].mxu0
        %2268 = vmatprep.mubr.f32.mxu0 0.0
        %2269 = vmatmul.mubr.f32.gmra.mrb[0].mxu0 %v2166
        %v2270 = vpop.f32.mrb[0].mxu0
        %v2271 = vadd.f32 %v2131, %v2270
        %v2272 = vpop.f32.mrb[0].mxu0
        %2273 = vmatprep.mubr.f32.mxu0 0.0
        %2274 = vmatmul.mubr.f32.gmra.mrb[0].mxu0 %v2168
        %v2275 = vpop.f32.mrb[0].mxu0
        %v2276 = vadd.f32 %v2132, %v2275
        %v2277 = vpop.f32.mrb[0].mxu0
        %2278 = vmatprep.mubr.f32.mxu0 0.0
        %2279 = vmatmul.mubr.f32.gmra.mrb[0].mxu0 %v2170
        %v2280 = vpop.f32.mrb[0].mxu0
        %v2281 = vadd.f32 %v2133, %v2280
        %v2282 = vpop.f32.mrb[0].mxu0
        %2283 = vmatprep.mubr.f32.mxu0 0.0
        %2284 = vmatmul.mubr.f32.gmra.mrb[0].mxu0 %v2172
        %v2285 = vpop.f32.mrb[0].mxu0
        %v2286 = vadd.f32 %v2134, %v2285
        %v2287 = vpop.f32.mrb[0].mxu0
        %2288 = vmatprep.mubr.f32.mxu0 0.0
        %2289 = vmatmul.mubr.f32.gmra.mrb[0].mxu0 %v2174
        %v2290 = vpop.f32.mrb[0].mxu0
        %v2291 = vadd.f32 %v2135, %v2290
        %v2292 = vpop.f32.mrb[0].mxu0
        %2293 = vmatprep.mubr.f32.mxu0 0.0
        %2294 = vmatmul.mubr.f32.gmra.mrb[0].mxu0 %v2176
        %v2295 = vpop.f32.mrb[0].mxu0
        %v2296 = vadd.f32 %v2136, %v2295
        %v2297 = vpop.f32.mrb[0].mxu0
        %2298 = vdwg.mxu0
        %vm2299 = vcmask 523264
        %v2300 = vsel %vm2299, %v2261, -inf
        %2301 = vmax.xlane.f32.xlu0 %v2300
        %v2302 = vpop.xlane.xlu0 %2301
        %v2303 = vsel %vm2299, %v2266, -inf
        %2304 = vmax.xlane.f32.xlu0 %v2303
        %v2305 = vpop.xlane.xlu0 %2304
        %v2306 = vsel %vm2299, %v2271, -inf
        %2307 = vmax.xlane.f32.xlu0 %v2306
        %v2308 = vpop.xlane.xlu0 %2307
        %v2309 = vsel %vm2299, %v2276, -inf
        %2310 = vmax.xlane.f32.xlu0 %v2309
        %v2311 = vpop.xlane.xlu0 %2310
        %v2312 = vsel %vm2299, %v2281, -inf
        %2313 = vmax.xlane.f32.xlu0 %v2312
        %v2314 = vpop.xlane.xlu0 %2313
        %v2315 = vsel %vm2299, %v2286, -inf
        %2316 = vmax.xlane.f32.xlu0 %v2315
        %v2317 = vpop.xlane.xlu0 %2316
        %v2318 = vsel %vm2299, %v2291, -inf
        %2319 = vmax.xlane.f32.xlu0 %v2318
        %v2320 = vpop.xlane.xlu0 %2319
        %v2321 = vsel %vm2299, %v2296, -inf
        %2322 = vmax.xlane.f32.xlu0 %v2321
        %v2323 = vpop.xlane.xlu0 %2322
        %v2324 = vsub.f32 %v2261, %v2302
        %v2325 = vsub.f32 %v2266, %v2305
        %v2326 = vsub.f32 %v2271, %v2308
        %v2327 = vsub.f32 %v2276, %v2311
        %v2328 = vsub.f32 %v2281, %v2314
        %v2329 = vsub.f32 %v2286, %v2317
        %v2330 = vsub.f32 %v2291, %v2320
        %v2331 = vsub.f32 %v2296, %v2323
        %v2332 = vmul.f32 %v2324, 1.442695
        %v2333 = vpow.pop %v2332
        %v2334 = vmul.f32 %v2325, 1.442695
        %v2335 = vpow.pop %v2334
        %v2336 = vmul.f32 %v2326, 1.442695
        %v2337 = vpow.pop %v2336
        %v2338 = vmul.f32 %v2327, 1.442695
        %v2339 = vpow.pop %v2338
        %v2340 = vmul.f32 %v2328, 1.442695
        %v2341 = vpow.pop %v2340
        %v2342 = vmul.f32 %v2329, 1.442695
        %v2343 = vpow.pop %v2342
        %v2344 = vmul.f32 %v2330, 1.442695
        %v2345 = vpow.pop %v2344
        %v2346 = vmul.f32 %v2331, 1.442695
        %v2347 = vpow.pop %v2346
        %v2348 = vsel %vm2299, %v2333, 0.0
        %2349 = vadd.xlane.f32.xlu0 %v2348
        %v2350 = vpop.xlane.xlu0 %2349
        %v2351 = vsel %vm2299, %v2335, 0.0
        %2352 = vadd.xlane.f32.xlu0 %v2351
        %v2353 = vpop.xlane.xlu0 %2352
        %v2354 = vsel %vm2299, %v2337, 0.0
        %2355 = vadd.xlane.f32.xlu0 %v2354
        %v2356 = vpop.xlane.xlu0 %2355
        %v2357 = vsel %vm2299, %v2339, 0.0
        %2358 = vadd.xlane.f32.xlu0 %v2357
        %v2359 = vpop.xlane.xlu0 %2358
        %v2360 = vsel %vm2299, %v2341, 0.0
        %2361 = vadd.xlane.f32.xlu0 %v2360
        %v2362 = vpop.xlane.xlu0 %2361
        %v2363 = vsel %vm2299, %v2343, 0.0
        %2364 = vadd.xlane.f32.xlu0 %v2363
        %v2365 = vpop.xlane.xlu0 %2364
        %v2366 = vsel %vm2299, %v2345, 0.0
        %2367 = vadd.xlane.f32.xlu0 %v2366
        %v2368 = vpop.xlane.xlu0 %2367
        %v2369 = vsel %vm2299, %v2347, 0.0
        %2370 = vadd.xlane.f32.xlu0 %v2369
        %v2371 = vpop.xlane.xlu0 %2370
        %v2372 = vrcp.pop %v2350
        %v2373 = vmul.f32 %v2333, %v2372
        %v2374 = vrcp.pop %v2353
        %v2375 = vmul.f32 %v2335, %v2374
        %v2376 = vrcp.pop %v2356
        %v2377 = vmul.f32 %v2337, %v2376
        %v2378 = vrcp.pop %v2359
        %v2379 = vmul.f32 %v2339, %v2378
        %v2380 = vrcp.pop %v2362
        %v2381 = vmul.f32 %v2341, %v2380
        %v2382 = vrcp.pop %v2365
        %v2383 = vmul.f32 %v2343, %v2382
        %v2384 = vrcp.pop %v2368
        %v2385 = vmul.f32 %v2345, %v2384
        %v2386 = vrcp.pop %v2371
        %v2387 = vmul.f32 %v2347, %v2386
        %2388 = vrot.lane.b32.xlu0 %v2088, 112
        %v2389 = vpop.permute.xlu0 %2388
        %2390 = vrot.lane.b32.xlu0 %v2093, 112
        %v2391 = vpop.permute.xlu0 %2390
        %2392 = vrot.lane.b32.xlu0 %v2098, 112
        %v2393 = vpop.permute.xlu0 %2392
        %2394 = vrot.lane.b32.xlu0 %v2103, 112
        %v2395 = vpop.permute.xlu0 %2394
        %2396 = vrot.lane.b32.xlu0 %v2108, 112
        %v2397 = vpop.permute.xlu0 %2396
        %2398 = vrot.lane.b32.xlu0 %v2113, 112
        %v2399 = vpop.permute.xlu0 %2398
        %2400 = vrot.lane.b32.xlu0 %v2118, 112
        %v2401 = vpop.permute.xlu0 %2400
        %2402 = vrot.lane.b32.xlu0 %v2123, 112
        %v2403 = vpop.permute.xlu0 %2402
        %v2413 = vsel %vm2299, %v2373, 0
        %v2416 = vsel %vm2299, %v2375, 0
        %v2419 = vsel %vm2299, %v2377, 0
        %v2422 = vsel %vm2299, %v2379, 0
        %v2425 = vsel %vm2299, %v2381, 0
        %v2428 = vsel %vm2299, %v2383, 0
        %v2431 = vsel %vm2299, %v2385, 0
        %v2434 = vsel %vm2299, %v2387, 0
        %2436 = vmatprep.subr.mxu0 0.0
        %2437 = vmatpush1.msra.mxu0 %v2389
        %2438 = vmatprep.subr.mxu0 0.0
        %2439 = vmatpush1.msra.mxu0 %v2391
        %2440 = vmatprep.subr.mxu0 0.0
        %2441 = vmatpush1.msra.mxu0 %v2393
        %2442 = vmatprep.subr.mxu0 0.0
        %2443 = vmatpush1.msra.mxu0 %v2395
        %2444 = vmatprep.subr.mxu0 0.0
        %2445 = vmatpush1.msra.mxu0 %v2397
        %2446 = vmatprep.subr.mxu0 0.0
        %2447 = vmatpush1.msra.mxu0 %v2399
        %2448 = vmatprep.subr.mxu0 0.0
        %2449 = vmatpush1.msra.mxu0 %v2401
        %2450 = vmatprep.subr.mxu0 0.0
        %2451 = vmatpush1.msra.mxu0 %v2403
        %2452 = vmatprep.subr.mxu0 0.0
        %2453 = vmatpush1.msra.mxu0 0.0
        %2454 = vmatprep.subr.mxu0 0.0
        %2455 = vmatpush1.msra.mxu0 0.0
        %2456 = vmatprep.subr.mxu0 0.0
        %2457 = vmatpush1.msra.mxu0 0.0
        %2458 = vmatprep.subr.mxu0 0.0
        %2459 = vmatpush1.msra.mxu0 0.0
        %2460 = vmatprep.subr.mxu0 0.0
        %2461 = vmatpush1.msra.mxu0 0.0
        %2462 = vmatprep.subr.mxu0 0.0
        %2463 = vmatpush1.msra.mxu0 0.0
        %2464 = vmatprep.subr.mxu0 0.0
        %2465 = vmatpush1.msra.mxu0 0.0
        %2466 = vmatprep.subr.mxu0 0.0
        %2467 = vmatpush1.msra.mxu0 0.0
        %2468 = vmatprep.subr.mxu0 0.0
        %2469 = vmatpush1.msra.mxu0 0.0
        %2470 = vmatprep.subr.mxu0 0.0
        %2471 = vmatpush1.msra.mxu0 0.0
        %2472 = vmatprep.subr.mxu0 0.0
        %2473 = vmatpush1.msra.mxu0 0.0
        %2474 = vmatprep.subr.mxu0 0.0
        %2475 = vmatpush1.msra.mxu0 0.0
        %2476 = vmatprep.subr.mxu0 0.0
        %2477 = vmatpush1.msra.mxu0 0.0
        %2478 = vmatprep.subr.mxu0 0.0
        %2479 = vmatpush1.msra.mxu0 0.0
        %2480 = vmatprep.subr.mxu0 0.0
        %2481 = vmatpush1.msra.mxu0 0.0
        %2482 = vmatprep.subr.mxu0 0.0
        %2483 = vmatpush1.msra.mxu0 0.0
        %2484 = vmatprep.subr.mxu0 0.0
        %2485 = vmatpush1.msra.mxu0 0.0
        %2486 = vmatprep.subr.mxu0 0.0
        %2487 = vmatpush1.msra.mxu0 0.0
        %2488 = vmatprep.subr.mxu0 0.0
        %2489 = vmatpush1.msra.mxu0 0.0
        %2490 = vmatprep.subr.mxu0 0.0
        %2491 = vmatpush1.msra.mxu0 0.0
        %2492 = vmatprep.subr.mxu0 0.0
        %2493 = vmatpush1.msra.mxu0 0.0
        %2494 = vmatprep.subr.mxu0 0.0
        %2495 = vmatpush1.msra.mxu0 0.0
        %2496 = vmatprep.subr.mxu0 0.0
        %2497 = vmatpush1.msra.mxu0 0.0
        %2498 = vmatprep.subr.mxu0 0.0
        %2499 = vmatpush1.msra.mxu0 0.0
        %2500 = vmatprep.mubr.f32.mxu0 0.0
        %2501 = vmatmul.mubr.f32.gmra.mrb[0].mxu0 %v2413
        %v2502 = vpop.f32.mrb[0].mxu0
        %v2503 = vadd.f32 0.0, %v2502
        %v2504 = vpop.f32.mrb[0].mxu0
        %2505 = vmatprep.mubr.f32.mxu0 0.0
        %2506 = vmatmul.mubr.f32.gmra.mrb[0].mxu0 %v2416
        %v2507 = vpop.f32.mrb[0].mxu0
        %v2508 = vadd.f32 0.0, %v2507
        %v2509 = vpop.f32.mrb[0].mxu0
        %2510 = vmatprep.mubr.f32.mxu0 0.0
        %2511 = vmatmul.mubr.f32.gmra.mrb[0].mxu0 %v2419
        %v2512 = vpop.f32.mrb[0].mxu0
        %v2513 = vadd.f32 0.0, %v2512
        %v2514 = vpop.f32.mrb[0].mxu0
        %2515 = vmatprep.mubr.f32.mxu0 0.0
        %2516 = vmatmul.mubr.f32.gmra.mrb[0].mxu0 %v2422
        %v2517 = vpop.f32.mrb[0].mxu0
        %v2518 = vadd.f32 0.0, %v2517
        %v2519 = vpop.f32.mrb[0].mxu0
        %2520 = vmatprep.mubr.f32.mxu0 0.0
        %2521 = vmatmul.mubr.f32.gmra.mrb[0].mxu0 %v2425
        %v2522 = vpop.f32.mrb[0].mxu0
        %v2523 = vadd.f32 0.0, %v2522
        %v2524 = vpop.f32.mrb[0].mxu0
        %2525 = vmatprep.mubr.f32.mxu0 0.0
        %2526 = vmatmul.mubr.f32.gmra.mrb[0].mxu0 %v2428
        %v2527 = vpop.f32.mrb[0].mxu0
        %v2528 = vadd.f32 0.0, %v2527
        %v2529 = vpop.f32.mrb[0].mxu0
        %2530 = vmatprep.mubr.f32.mxu0 0.0
        %2531 = vmatmul.mubr.f32.gmra.mrb[0].mxu0 %v2431
        %v2532 = vpop.f32.mrb[0].mxu0
        %v2533 = vadd.f32 0.0, %v2532
        %v2534 = vpop.f32.mrb[0].mxu0
        %2535 = vmatprep.mubr.f32.mxu0 0.0
        %2536 = vmatmul.mubr.f32.gmra.mrb[0].mxu0 %v2434
        %v2537 = vpop.f32.mrb[0].mxu0
        %v2538 = vadd.f32 0.0, %v2537
        %v2539 = vpop.f32.mrb[0].mxu0
        %2540 = vdwg.mxu0
        %s2541 = smul.u32 %s1968, 8
        %s2542 = sadd.s32 %s2541, 32
        %s2543 = scalar_lea.vmem %s6, %s2542
        %v2544 = vld [vmem:[%s2543] sm:$0xff]
        %v2546 = vsel %vm2161, %v2503, 0
        %v2549 = vsel %vm2161, %v2508, 0
        %v2552 = vsel %vm2161, %v2513, 0
        %v2555 = vsel %vm2161, %v2518, 0
        %v2558 = vsel %vm2161, %v2523, 0
        %v2561 = vsel %vm2161, %v2528, 0
        %v2564 = vsel %vm2161, %v2533, 0
        %v2567 = vsel %vm2161, %v2538, 0
        %2569 = vmatprep.subr.mxu0 0.0
        %2570 = vmatpush1.msra.mxu0 %v2544
        %2571 = vmatprep.subr.mxu0 0.0
        %2572 = vmatpush1.msra.mxu0 0.0
        %2573 = vmatprep.subr.mxu0 0.0
        %2574 = vmatpush1.msra.mxu0 0.0
        %2575 = vmatprep.subr.mxu0 0.0
        %2576 = vmatpush1.msra.mxu0 0.0
        %2577 = vmatprep.subr.mxu0 0.0
        %2578 = vmatpush1.msra.mxu0 0.0
        %2579 = vmatprep.subr.mxu0 0.0
        %2580 = vmatpush1.msra.mxu0 0.0
        %2581 = vmatprep.subr.mxu0 0.0
        %2582 = vmatpush1.msra.mxu0 0.0
        %2583 = vmatprep.subr.mxu0 0.0
        %2584 = vmatpush1.msra.mxu0 0.0
        %2585 = vmatprep.subr.mxu0 0.0
        %2586 = vmatpush1.msra.mxu0 0.0
        %2587 = vmatprep.subr.mxu0 0.0
        %2588 = vmatpush1.msra.mxu0 0.0
        %2589 = vmatprep.subr.mxu0 0.0
        %2590 = vmatpush1.msra.mxu0 0.0
        %2591 = vmatprep.subr.mxu0 0.0
        %2592 = vmatpush1.msra.mxu0 0.0
        %2593 = vmatprep.subr.mxu0 0.0
        %2594 = vmatpush1.msra.mxu0 0.0
        %2595 = vmatprep.subr.mxu0 0.0
        %2596 = vmatpush1.msra.mxu0 0.0
        %2597 = vmatprep.subr.mxu0 0.0
        %2598 = vmatpush1.msra.mxu0 0.0
        %2599 = vmatprep.subr.mxu0 0.0
        %2600 = vmatpush1.msra.mxu0 0.0
        %2601 = vmatprep.subr.mxu0 0.0
        %2602 = vmatpush1.msra.mxu0 0.0
        %2603 = vmatprep.subr.mxu0 0.0
        %2604 = vmatpush1.msra.mxu0 0.0
        %2605 = vmatprep.subr.mxu0 0.0
        %2606 = vmatpush1.msra.mxu0 0.0
        %2607 = vmatprep.subr.mxu0 0.0
        %2608 = vmatpush1.msra.mxu0 0.0
        %2609 = vmatprep.subr.mxu0 0.0
        %2610 = vmatpush1.msra.mxu0 0.0
        %2611 = vmatprep.subr.mxu0 0.0
        %2612 = vmatpush1.msra.mxu0 0.0
        %2613 = vmatprep.subr.mxu0 0.0
        %2614 = vmatpush1.msra.mxu0 0.0
        %2615 = vmatprep.subr.mxu0 0.0
        %2616 = vmatpush1.msra.mxu0 0.0
        %2617 = vmatprep.subr.mxu0 0.0
        %2618 = vmatpush1.msra.mxu0 0.0
        %2619 = vmatprep.subr.mxu0 0.0
        %2620 = vmatpush1.msra.mxu0 0.0
        %2621 = vmatprep.subr.mxu0 0.0
        %2622 = vmatpush1.msra.mxu0 0.0
        %2623 = vmatprep.subr.mxu0 0.0
        %2624 = vmatpush1.msra.mxu0 0.0
        %2625 = vmatprep.subr.mxu0 0.0
        %2626 = vmatpush1.msra.mxu0 0.0
        %2627 = vmatprep.subr.mxu0 0.0
        %2628 = vmatpush1.msra.mxu0 0.0
        %2629 = vmatprep.subr.mxu0 0.0
        %2630 = vmatpush1.msra.mxu0 0.0
        %2631 = vmatprep.subr.mxu0 0.0
        %2632 = vmatpush1.msra.mxu0 0.0
        %2633 = vmatprep.mubr.f32.mxu0 0.0
        %2634 = vmatmul.mubr.f32.gmra.mrb[0].mxu0 %v2546
        %v2635 = vpop.f32.mrb[0].mxu0
        %v2636 = vadd.f32 0.0, %v2635
        %v2637 = vpop.f32.mrb[0].mxu0
        %2638 = vmatprep.mubr.f32.mxu0 0.0
        %2639 = vmatmul.mubr.f32.gmra.mrb[0].mxu0 %v2549
        %v2640 = vpop.f32.mrb[0].mxu0
        %v2641 = vadd.f32 0.0, %v2640
        %v2642 = vpop.f32.mrb[0].mxu0
        %2643 = vmatprep.mubr.f32.mxu0 0.0
        %2644 = vmatmul.mubr.f32.gmra.mrb[0].mxu0 %v2552
        %v2645 = vpop.f32.mrb[0].mxu0
        %v2646 = vadd.f32 0.0, %v2645
        %v2647 = vpop.f32.mrb[0].mxu0
        %2648 = vmatprep.mubr.f32.mxu0 0.0
        %2649 = vmatmul.mubr.f32.gmra.mrb[0].mxu0 %v2555
        %v2650 = vpop.f32.mrb[0].mxu0
        %v2651 = vadd.f32 0.0, %v2650
        %v2652 = vpop.f32.mrb[0].mxu0
        %2653 = vmatprep.mubr.f32.mxu0 0.0
        %2654 = vmatmul.mubr.f32.gmra.mrb[0].mxu0 %v2558
        %v2655 = vpop.f32.mrb[0].mxu0
        %v2656 = vadd.f32 0.0, %v2655
        %v2657 = vpop.f32.mrb[0].mxu0
        %2658 = vmatprep.mubr.f32.mxu0 0.0
        %2659 = vmatmul.mubr.f32.gmra.mrb[0].mxu0 %v2561
        %v2660 = vpop.f32.mrb[0].mxu0
        %v2661 = vadd.f32 0.0, %v2660
        %v2662 = vpop.f32.mrb[0].mxu0
        %2663 = vmatprep.mubr.f32.mxu0 0.0
        %2664 = vmatmul.mubr.f32.gmra.mrb[0].mxu0 %v2564
        %v2665 = vpop.f32.mrb[0].mxu0
        %v2666 = vadd.f32 0.0, %v2665
        %v2667 = vpop.f32.mrb[0].mxu0
        %2668 = vmatprep.mubr.f32.mxu0 0.0
        %2669 = vmatmul.mubr.f32.gmra.mrb[0].mxu0 %v2567
        %v2670 = vpop.f32.mrb[0].mxu0
        %v2671 = vadd.f32 0.0, %v2670
        %v2672 = vpop.f32.mrb[0].mxu0
        %2673 = vdwg.mxu0
        %v2674 = vadd.f32 %v1973, %v2636
        %v2675 = vadd.f32 %v1974, %v2641
        %v2676 = vadd.f32 %v1975, %v2646
        %v2677 = vadd.f32 %v1976, %v2651
        %v2678 = vadd.f32 %v1977, %v2656
        %v2679 = vadd.f32 %v1978, %v2661
        %v2680 = vadd.f32 %v1979, %v2666
        %v2681 = vadd.f32 %v1980, %v2671
      $region88: #{basic_layer_forward.1} parent=75 // loop_footer
        %s1972 = sadd.s32 1, %s1968
      $region89: #{basic_layer_forward.1} parent=75 // loop_footer_branch
        %1967 = sbr.rel target = $region85
      $region90: #{basic_layer_forward.1} parent=75 // loop_exit
        _
      %v2682 = vadd.f32 %v1823, %v1973
      %v2683 = vadd.f32 %v1824, %v1974
      %v2684 = vadd.f32 %v1825, %v1975
      %v2685 = vadd.f32 %v1826, %v1976
      %v2686 = vadd.f32 %v1827, %v1977
      %v2687 = vadd.f32 %v1828, %v1978
      %v2688 = vadd.f32 %v1829, %v1979
      %v2689 = vadd.f32 %v1830, %v1980
      %s2690 = scalar_lea.vmem %s7, 1
      %v2691 = vld [vmem:[%s2690] sm:$0x1]
      %v2693 = vlaneseq
      %v2694 = vshrl.u32 %v2693, 7
      %v2695 = vsub.s32 0, %v2694
      %v2696 = vrot.slane %v2691, %v2695
      %v2698 = vadd.f32 %v2682, %v2696
      %v2699 = vadd.f32 %v2683, %v2696
      %v2700 = vadd.f32 %v2684, %v2696
      %v2701 = vadd.f32 %v2685, %v2696
      %v2702 = vadd.f32 %v2686, %v2696
      %v2703 = vadd.f32 %v2687, %v2696
      %v2704 = vadd.f32 %v2688, %v2696
      %v2705 = vadd.f32 %v2689, %v2696
      %s2706 = scalar_lea.vmem %s8, 1
      %v2707 = vld [vmem:[%s2706] sm:$0x1]
      %s2708 = scalar_lea.vmem %s9, 1
      %v2709 = vld [vmem:[%s2708] sm:$0x1]
      %v2710 = vsel %vm481, %v2698, 0.0
      %2711 = vadd.xlane.f32.xlu0 %v2710
      %v2712 = vpop.xlane.xlu0 %2711
      %v2713 = vsel %vm481, %v2699, 0.0
      %2714 = vadd.xlane.f32.xlu0 %v2713
      %v2715 = vpop.xlane.xlu0 %2714
      %v2716 = vsel %vm481, %v2700, 0.0
      %2717 = vadd.xlane.f32.xlu0 %v2716
      %v2718 = vpop.xlane.xlu0 %2717
      %v2719 = vsel %vm481, %v2701, 0.0
      %2720 = vadd.xlane.f32.xlu0 %v2719
      %v2721 = vpop.xlane.xlu0 %2720
      %v2722 = vsel %vm481, %v2702, 0.0
      %2723 = vadd.xlane.f32.xlu0 %v2722
      %v2724 = vpop.xlane.xlu0 %2723
      %v2725 = vsel %vm481, %v2703, 0.0
      %2726 = vadd.xlane.f32.xlu0 %v2725
      %v2727 = vpop.xlane.xlu0 %2726
      %v2728 = vsel %vm481, %v2704, 0.0
      %2729 = vadd.xlane.f32.xlu0 %v2728
      %v2730 = vpop.xlane.xlu0 %2729
      %v2731 = vsel %vm481, %v2705, 0.0
      %2732 = vadd.xlane.f32.xlu0 %v2731
      %v2733 = vpop.xlane.xlu0 %2732
      %v2734 = vmul.f32 %v2712, %v506
      %v2735 = vmul.f32 %v2715, %v506
      %v2736 = vmul.f32 %v2718, %v506
      %v2737 = vmul.f32 %v2721, %v506
      %v2738 = vmul.f32 %v2724, %v506
      %v2739 = vmul.f32 %v2727, %v506
      %v2740 = vmul.f32 %v2730, %v506
      %v2741 = vmul.f32 %v2733, %v506
      %v2742 = vsub.f32 %v2698, %v2734
      %v2743 = vsub.f32 %v2699, %v2735
      %v2744 = vsub.f32 %v2700, %v2736
      %v2745 = vsub.f32 %v2701, %v2737
      %v2746 = vsub.f32 %v2702, %v2738
      %v2747 = vsub.f32 %v2703, %v2739
      %v2748 = vsub.f32 %v2704, %v2740
      %v2749 = vsub.f32 %v2705, %v2741
      %v2750 = vmul.f32 %v2742, %v2742
      %v2751 = vmul.f32 %v2743, %v2743
      %v2752 = vmul.f32 %v2744, %v2744
      %v2753 = vmul.f32 %v2745, %v2745
      %v2754 = vmul.f32 %v2746, %v2746
      %v2755 = vmul.f32 %v2747, %v2747
      %v2756 = vmul.f32 %v2748, %v2748
      %v2757 = vmul.f32 %v2749, %v2749
      %v2758 = vsel %vm481, %v2750, 0.0
      %2759 = vadd.xlane.f32.xlu0 %v2758
      %v2760 = vpop.xlane.xlu0 %2759
      %v2761 = vsel %vm481, %v2751, 0.0
      %2762 = vadd.xlane.f32.xlu0 %v2761
      %v2763 = vpop.xlane.xlu0 %2762
      %v2764 = vsel %vm481, %v2752, 0.0
      %2765 = vadd.xlane.f32.xlu0 %v2764
      %v2766 = vpop.xlane.xlu0 %2765
      %v2767 = vsel %vm481, %v2753, 0.0
      %2768 = vadd.xlane.f32.xlu0 %v2767
      %v2769 = vpop.xlane.xlu0 %2768
      %v2770 = vsel %vm481, %v2754, 0.0
      %2771 = vadd.xlane.f32.xlu0 %v2770
      %v2772 = vpop.xlane.xlu0 %2771
      %v2773 = vsel %vm481, %v2755, 0.0
      %2774 = vadd.xlane.f32.xlu0 %v2773
      %v2775 = vpop.xlane.xlu0 %2774
      %v2776 = vsel %vm481, %v2756, 0.0
      %2777 = vadd.xlane.f32.xlu0 %v2776
      %v2778 = vpop.xlane.xlu0 %2777
      %v2779 = vsel %vm481, %v2757, 0.0
      %2780 = vadd.xlane.f32.xlu0 %v2779
      %v2781 = vpop.xlane.xlu0 %2780
      %v2782 = vmul.f32 %v2760, %v506
      %v2783 = vmul.f32 %v2763, %v506
      %v2784 = vmul.f32 %v2766, %v506
      %v2785 = vmul.f32 %v2769, %v506
      %v2786 = vmul.f32 %v2772, %v506
      %v2787 = vmul.f32 %v2775, %v506
      %v2788 = vmul.f32 %v2778, %v506
      %v2789 = vmul.f32 %v2781, %v506
      %v2790 = vadd.f32 %v2782, 1e-05
      %v2791 = vadd.f32 %v2783, 1e-05
      %v2792 = vadd.f32 %v2784, 1e-05
      %v2793 = vadd.f32 %v2785, 1e-05
      %v2794 = vadd.f32 %v2786, 1e-05
      %v2795 = vadd.f32 %v2787, 1e-05
      %v2796 = vadd.f32 %v2788, 1e-05
      %v2797 = vadd.f32 %v2789, 1e-05
      %v2798 = vrsqrt.pop %v2790
      %v2799 = vrsqrt.pop %v2791
      %v2800 = vrsqrt.pop %v2792
      %v2801 = vrsqrt.pop %v2793
      %v2802 = vrsqrt.pop %v2794
      %v2803 = vrsqrt.pop %v2795
      %v2804 = vrsqrt.pop %v2796
      %v2805 = vrsqrt.pop %v2797
      %v2806 = vmul.f32 %v2742, %v2798
      %v2807 = vmul.f32 %v2743, %v2799
      %v2808 = vmul.f32 %v2744, %v2800
      %v2809 = vmul.f32 %v2745, %v2801
      %v2810 = vmul.f32 %v2746, %v2802
      %v2811 = vmul.f32 %v2747, %v2803
      %v2812 = vmul.f32 %v2748, %v2804
      %v2813 = vmul.f32 %v2749, %v2805
      %v2815 = vlaneseq
      %v2816 = vshrl.u32 %v2815, 7
      %v2817 = vsub.s32 0, %v2816
      %v2818 = vrot.slane %v2707, %v2817
      %v2820 = vmul.f32 %v2806, %v2818
      %v2821 = vmul.f32 %v2807, %v2818
      %v2822 = vmul.f32 %v2808, %v2818
      %v2823 = vmul.f32 %v2809, %v2818
      %v2824 = vmul.f32 %v2810, %v2818
      %v2825 = vmul.f32 %v2811, %v2818
      %v2826 = vmul.f32 %v2812, %v2818
      %v2827 = vmul.f32 %v2813, %v2818
      %v2829 = vlaneseq
      %v2830 = vshrl.u32 %v2829, 7
      %v2831 = vsub.s32 0, %v2830
      %v2832 = vrot.slane %v2709, %v2831
      %v2834 = vadd.f32 %v2820, %v2832
      %v2835 = vadd.f32 %v2821, %v2832
      %v2836 = vadd.f32 %v2822, %v2832
      %v2837 = vadd.f32 %v2823, %v2832
      %v2838 = vadd.f32 %v2824, %v2832
      %v2839 = vadd.f32 %v2825, %v2832
      %v2840 = vadd.f32 %v2826, %v2832
      %v2841 = vadd.f32 %v2827, %v2832
      %s2842 = scalar_lea.vmem %s10, 32
      %v2843 = vld [vmem:[%s2842] sm:$0xff]
      %v2844 = vld [vmem:[%s2842 + $0x8] sm:$0xff]
      %v2845 = vld [vmem:[%s2842 + $0x10] sm:$0xff]
      %v2846 = vld [vmem:[%s2842 + $0x18] sm:$0xff]
      %s2847 = scalar_lea.vmem %s11, 1
      %v2848 = vld [vmem:[%s2847] sm:$0x1]
      %v2850 = vlaneseq
      %v2851 = vshrl.u32 %v2850, 7
      %v2852 = vsub.s32 0, %v2851
      %v2853 = vrot.slane %v2848, %v2852
      %v2856 = vsel %vm481, %v2834, 0
      %v2859 = vsel %vm481, %v2835, 0
      %v2862 = vsel %vm481, %v2836, 0
      %v2865 = vsel %vm481, %v2837, 0
      %v2868 = vsel %vm481, %v2838, 0
      %v2871 = vsel %vm481, %v2839, 0
      %v2874 = vsel %vm481, %v2840, 0
      %v2877 = vsel %vm481, %v2841, 0
      %2879 = vmatprep.subr.mxu0 0.0
      %2880 = vmatpush1.msra.mxu0 %v2843
      %2881 = vmatprep.subr.mxu0 0.0
      %2882 = vmatpush1.msra.mxu0 %v2844
      %2883 = vmatprep.subr.mxu0 0.0
      %2884 = vmatpush1.msra.mxu0 %v2845
      %2885 = vmatprep.subr.mxu0 0.0
      %2886 = vmatpush1.msra.mxu0 %v2846
      %2887 = vmatprep.subr.mxu0 0.0
      %2888 = vmatpush1.msra.mxu0 0.0
      %2889 = vmatprep.subr.mxu0 0.0
      %2890 = vmatpush1.msra.mxu0 0.0
      %2891 = vmatprep.subr.mxu0 0.0
      %2892 = vmatpush1.msra.mxu0 0.0
      %2893 = vmatprep.subr.mxu0 0.0
      %2894 = vmatpush1.msra.mxu0 0.0
      %2895 = vmatprep.subr.mxu0 0.0
      %2896 = vmatpush1.msra.mxu0 0.0
      %2897 = vmatprep.subr.mxu0 0.0
      %2898 = vmatpush1.msra.mxu0 0.0
      %2899 = vmatprep.subr.mxu0 0.0
      %2900 = vmatpush1.msra.mxu0 0.0
      %2901 = vmatprep.subr.mxu0 0.0
      %2902 = vmatpush1.msra.mxu0 0.0
      %2903 = vmatprep.subr.mxu0 0.0
      %2904 = vmatpush1.msra.mxu0 0.0
      %2905 = vmatprep.subr.mxu0 0.0
      %2906 = vmatpush1.msra.mxu0 0.0
      %2907 = vmatprep.subr.mxu0 0.0
      %2908 = vmatpush1.msra.mxu0 0.0
      %2909 = vmatprep.subr.mxu0 0.0
      %2910 = vmatpush1.msra.mxu0 0.0
      %2911 = vmatprep.subr.mxu0 0.0
      %2912 = vmatpush1.msra.mxu0 0.0
      %2913 = vmatprep.subr.mxu0 0.0
      %2914 = vmatpush1.msra.mxu0 0.0
      %2915 = vmatprep.subr.mxu0 0.0
      %2916 = vmatpush1.msra.mxu0 0.0
      %2917 = vmatprep.subr.mxu0 0.0
      %2918 = vmatpush1.msra.mxu0 0.0
      %2919 = vmatprep.subr.mxu0 0.0
      %2920 = vmatpush1.msra.mxu0 0.0
      %2921 = vmatprep.subr.mxu0 0.0
      %2922 = vmatpush1.msra.mxu0 0.0
      %2923 = vmatprep.subr.mxu0 0.0
      %2924 = vmatpush1.msra.mxu0 0.0
      %2925 = vmatprep.subr.mxu0 0.0
      %2926 = vmatpush1.msra.mxu0 0.0
      %2927 = vmatprep.subr.mxu0 0.0
      %2928 = vmatpush1.msra.mxu0 0.0
      %2929 = vmatprep.subr.mxu0 0.0
      %2930 = vmatpush1.msra.mxu0 0.0
      %2931 = vmatprep.subr.mxu0 0.0
      %2932 = vmatpush1.msra.mxu0 0.0
      %2933 = vmatprep.subr.mxu0 0.0
      %2934 = vmatpush1.msra.mxu0 0.0
      %2935 = vmatprep.subr.mxu0 0.0
      %2936 = vmatpush1.msra.mxu0 0.0
      %2937 = vmatprep.subr.mxu0 0.0
      %2938 = vmatpush1.msra.mxu0 0.0
      %2939 = vmatprep.subr.mxu0 0.0
      %2940 = vmatpush1.msra.mxu0 0.0
      %2941 = vmatprep.subr.mxu0 0.0
      %2942 = vmatpush1.msra.mxu0 0.0
      %2943 = vmatprep.mubr.f32.mxu0 0.0
      %2944 = vmatmul.mubr.f32.gmra.mrb[0].mxu0 %v2856
      %v2945 = vpop.f32.mrb[0].mxu0
      %v2946 = vadd.f32 %v2853, %v2945
      %v2947 = vpop.f32.mrb[0].mxu0
      %2948 = vmatprep.mubr.f32.mxu0 0.0
      %2949 = vmatmul.mubr.f32.gmra.mrb[0].mxu0 %v2859
      %v2950 = vpop.f32.mrb[0].mxu0
      %v2951 = vadd.f32 %v2853, %v2950
      %v2952 = vpop.f32.mrb[0].mxu0
      %2953 = vmatprep.mubr.f32.mxu0 0.0
      %2954 = vmatmul.mubr.f32.gmra.mrb[0].mxu0 %v2862
      %v2955 = vpop.f32.mrb[0].mxu0
      %v2956 = vadd.f32 %v2853, %v2955
      %v2957 = vpop.f32.mrb[0].mxu0
      %2958 = vmatprep.mubr.f32.mxu0 0.0
      %2959 = vmatmul.mubr.f32.gmra.mrb[0].mxu0 %v2865
      %v2960 = vpop.f32.mrb[0].mxu0
      %v2961 = vadd.f32 %v2853, %v2960
      %v2962 = vpop.f32.mrb[0].mxu0
      %2963 = vmatprep.mubr.f32.mxu0 0.0
      %2964 = vmatmul.mubr.f32.gmra.mrb[0].mxu0 %v2868
      %v2965 = vpop.f32.mrb[0].mxu0
      %v2966 = vadd.f32 %v2853, %v2965
      %v2967 = vpop.f32.mrb[0].mxu0
      %2968 = vmatprep.mubr.f32.mxu0 0.0
      %2969 = vmatmul.mubr.f32.gmra.mrb[0].mxu0 %v2871
      %v2970 = vpop.f32.mrb[0].mxu0
      %v2971 = vadd.f32 %v2853, %v2970
      %v2972 = vpop.f32.mrb[0].mxu0
      %2973 = vmatprep.mubr.f32.mxu0 0.0
      %2974 = vmatmul.mubr.f32.gmra.mrb[0].mxu0 %v2874
      %v2975 = vpop.f32.mrb[0].mxu0
      %v2976 = vadd.f32 %v2853, %v2975
      %v2977 = vpop.f32.mrb[0].mxu0
      %2978 = vmatprep.mubr.f32.mxu0 0.0
      %2979 = vmatmul.mubr.f32.gmra.mrb[0].mxu0 %v2877
      %v2980 = vpop.f32.mrb[0].mxu0
      %v2981 = vadd.f32 %v2853, %v2980
      %v2982 = vpop.f32.mrb[0].mxu0
      %2983 = vdwg.mxu0
      %v2984 = vmul.f32 %v2946, %v2946
      %v2985 = vmul.f32 %v2951, %v2951
      %v2986 = vmul.f32 %v2956, %v2956
      %v2987 = vmul.f32 %v2961, %v2961
      %v2988 = vmul.f32 %v2966, %v2966
      %v2989 = vmul.f32 %v2971, %v2971
      %v2990 = vmul.f32 %v2976, %v2976
      %v2991 = vmul.f32 %v2981, %v2981
      %v2992 = vmul.f32 %v2946, %v2984
      %v2993 = vmul.f32 %v2951, %v2985
      %v2994 = vmul.f32 %v2956, %v2986
      %v2995 = vmul.f32 %v2961, %v2987
      %v2996 = vmul.f32 %v2966, %v2988
      %v2997 = vmul.f32 %v2971, %v2989
      %v2998 = vmul.f32 %v2976, %v2990
      %v2999 = vmul.f32 %v2981, %v2991
      %v3000 = vmul.f32 %v2992, 0.044715
      %v3001 = vmul.f32 %v2993, 0.044715
      %v3002 = vmul.f32 %v2994, 0.044715
      %v3003 = vmul.f32 %v2995, 0.044715
      %v3004 = vmul.f32 %v2996, 0.044715
      %v3005 = vmul.f32 %v2997, 0.044715
      %v3006 = vmul.f32 %v2998, 0.044715
      %v3007 = vmul.f32 %v2999, 0.044715
      %v3008 = vadd.f32 %v2946, %v3000
      %v3009 = vadd.f32 %v2951, %v3001
      %v3010 = vadd.f32 %v2956, %v3002
      %v3011 = vadd.f32 %v2961, %v3003
      %v3012 = vadd.f32 %v2966, %v3004
      %v3013 = vadd.f32 %v2971, %v3005
      %v3014 = vadd.f32 %v2976, %v3006
      %v3015 = vadd.f32 %v2981, %v3007
      %v3016 = vmul.f32 %v3008, 0.7978846
      %v3017 = vmul.f32 %v3009, 0.7978846
      %v3018 = vmul.f32 %v3010, 0.7978846
      %v3019 = vmul.f32 %v3011, 0.7978846
      %v3020 = vmul.f32 %v3012, 0.7978846
      %v3021 = vmul.f32 %v3013, 0.7978846
      %v3022 = vmul.f32 %v3014, 0.7978846
      %v3023 = vmul.f32 %v3015, 0.7978846
      %v3024 = vtanh.pop %v3016
      %v3025 = vtanh.pop %v3017
      %v3026 = vtanh.pop %v3018
      %v3027 = vtanh.pop %v3019
      %v3028 = vtanh.pop %v3020
      %v3029 = vtanh.pop %v3021
      %v3030 = vtanh.pop %v3022
      %v3031 = vtanh.pop %v3023
      %v3032 = vadd.f32 %v3024, 1.0
      %v3033 = vadd.f32 %v3025, 1.0
      %v3034 = vadd.f32 %v3026, 1.0
      %v3035 = vadd.f32 %v3027, 1.0
      %v3036 = vadd.f32 %v3028, 1.0
      %v3037 = vadd.f32 %v3029, 1.0
      %v3038 = vadd.f32 %v3030, 1.0
      %v3039 = vadd.f32 %v3031, 1.0
      %v3040 = vmul.f32 %v3032, 0.5
      %v3041 = vmul.f32 %v3033, 0.5
      %v3042 = vmul.f32 %v3034, 0.5
      %v3043 = vmul.f32 %v3035, 0.5
      %v3044 = vmul.f32 %v3036, 0.5
      %v3045 = vmul.f32 %v3037, 0.5
      %v3046 = vmul.f32 %v3038, 0.5
      %v3047 = vmul.f32 %v3039, 0.5
      %v3048 = vmul.f32 %v2946, %v3040
      %v3049 = vmul.f32 %v2951, %v3041
      %v3050 = vmul.f32 %v2956, %v3042
      %v3051 = vmul.f32 %v2961, %v3043
      %v3052 = vmul.f32 %v2966, %v3044
      %v3053 = vmul.f32 %v2971, %v3045
      %v3054 = vmul.f32 %v2976, %v3046
      %v3055 = vmul.f32 %v2981, %v3047
      %s3056 = scalar_lea.vmem %s12, 128
      %v3057 = vld [vmem:[%s3056] sm:$0xff]
      %v3058 = vld [vmem:[%s3056 + $0x8] sm:$0xff]
      %v3059 = vld [vmem:[%s3056 + $0x10] sm:$0xff]
      %v3060 = vld [vmem:[%s3056 + $0x18] sm:$0xff]
      %v3061 = vld [vmem:[%s3056 + $0x20] sm:$0xff]
      %v3062 = vld [vmem:[%s3056 + $0x28] sm:$0xff]
      %v3063 = vld [vmem:[%s3056 + $0x30] sm:$0xff]
      %v3064 = vld [vmem:[%s3056 + $0x38] sm:$0xff]
      %v3065 = vld [vmem:[%s3056 + $0x40] sm:$0xff]
      %v3066 = vld [vmem:[%s3056 + $0x48] sm:$0xff]
      %v3067 = vld [vmem:[%s3056 + $0x50] sm:$0xff]
      %v3068 = vld [vmem:[%s3056 + $0x58] sm:$0xff]
      %v3069 = vld [vmem:[%s3056 + $0x60] sm:$0xff]
      %v3070 = vld [vmem:[%s3056 + $0x68] sm:$0xff]
      %v3071 = vld [vmem:[%s3056 + $0x70] sm:$0xff]
      %v3072 = vld [vmem:[%s3056 + $0x78] sm:$0xff]
      %s3073 = scalar_lea.vmem %s13, 1
      %v3074 = vld [vmem:[%s3073] sm:$0x1]
      %v3076 = vlaneseq
      %v3077 = vshrl.u32 %v3076, 7
      %v3078 = vsub.s32 0, %v3077
      %v3079 = vrot.slane %v3074, %v3078
      %3081 = vmatprep.subr.mxu0 0.0
      %3082 = vmatpush1.msra.mxu0 %v3057
      %3083 = vmatprep.subr.mxu0 0.0
      %3084 = vmatpush1.msra.mxu0 %v3058
      %3085 = vmatprep.subr.mxu0 0.0
      %3086 = vmatpush1.msra.mxu0 %v3059
      %3087 = vmatprep.subr.mxu0 0.0
      %3088 = vmatpush1.msra.mxu0 %v3060
      %3089 = vmatprep.subr.mxu0 0.0
      %3090 = vmatpush1.msra.mxu0 %v3061
      %3091 = vmatprep.subr.mxu0 0.0
      %3092 = vmatpush1.msra.mxu0 %v3062
      %3093 = vmatprep.subr.mxu0 0.0
      %3094 = vmatpush1.msra.mxu0 %v3063
      %3095 = vmatprep.subr.mxu0 0.0
      %3096 = vmatpush1.msra.mxu0 %v3064
      %3097 = vmatprep.subr.mxu0 0.0
      %3098 = vmatpush1.msra.mxu0 %v3065
      %3099 = vmatprep.subr.mxu0 0.0
      %3100 = vmatpush1.msra.mxu0 %v3066
      %3101 = vmatprep.subr.mxu0 0.0
      %3102 = vmatpush1.msra.mxu0 %v3067
      %3103 = vmatprep.subr.mxu0 0.0
      %3104 = vmatpush1.msra.mxu0 %v3068
      %3105 = vmatprep.subr.mxu0 0.0
      %3106 = vmatpush1.msra.mxu0 %v3069
      %3107 = vmatprep.subr.mxu0 0.0
      %3108 = vmatpush1.msra.mxu0 %v3070
      %3109 = vmatprep.subr.mxu0 0.0
      %3110 = vmatpush1.msra.mxu0 %v3071
      %3111 = vmatprep.subr.mxu0 0.0
      %3112 = vmatpush1.msra.mxu0 %v3072
      %3113 = vmatprep.subr.mxu0 0.0
      %3114 = vmatpush1.msra.mxu0 0.0
      %3115 = vmatprep.subr.mxu0 0.0
      %3116 = vmatpush1.msra.mxu0 0.0
      %3117 = vmatprep.subr.mxu0 0.0
      %3118 = vmatpush1.msra.mxu0 0.0
      %3119 = vmatprep.subr.mxu0 0.0
      %3120 = vmatpush1.msra.mxu0 0.0
      %3121 = vmatprep.subr.mxu0 0.0
      %3122 = vmatpush1.msra.mxu0 0.0
      %3123 = vmatprep.subr.mxu0 0.0
      %3124 = vmatpush1.msra.mxu0 0.0
      %3125 = vmatprep.subr.mxu0 0.0
      %3126 = vmatpush1.msra.mxu0 0.0
      %3127 = vmatprep.subr.mxu0 0.0
      %3128 = vmatpush1.msra.mxu0 0.0
      %3129 = vmatprep.subr.mxu0 0.0
      %3130 = vmatpush1.msra.mxu0 0.0
      %3131 = vmatprep.subr.mxu0 0.0
      %3132 = vmatpush1.msra.mxu0 0.0
      %3133 = vmatprep.subr.mxu0 0.0
      %3134 = vmatpush1.msra.mxu0 0.0
      %3135 = vmatprep.subr.mxu0 0.0
      %3136 = vmatpush1.msra.mxu0 0.0
      %3137 = vmatprep.subr.mxu0 0.0
      %3138 = vmatpush1.msra.mxu0 0.0
      %3139 = vmatprep.subr.mxu0 0.0
      %3140 = vmatpush1.msra.mxu0 0.0
      %3141 = vmatprep.subr.mxu0 0.0
      %3142 = vmatpush1.msra.mxu0 0.0
      %3143 = vmatprep.subr.mxu0 0.0
      %3144 = vmatpush1.msra.mxu0 0.0
      %3145 = vmatprep.mubr.f32.mxu0 0.0
      %3146 = vmatmul.mubr.f32.gmra.mrb[0].mxu0 %v3048
      %v3147 = vpop.f32.mrb[0].mxu0
      %v3148 = vadd.f32 %v3079, %v3147
      %v3149 = vpop.f32.mrb[0].mxu0
      %3150 = vmatprep.mubr.f32.mxu0 0.0
      %3151 = vmatmul.mubr.f32.gmra.mrb[0].mxu0 %v3049
      %v3152 = vpop.f32.mrb[0].mxu0
      %v3153 = vadd.f32 %v3079, %v3152
      %v3154 = vpop.f32.mrb[0].mxu0
      %3155 = vmatprep.mubr.f32.mxu0 0.0
      %3156 = vmatmul.mubr.f32.gmra.mrb[0].mxu0 %v3050
      %v3157 = vpop.f32.mrb[0].mxu0
      %v3158 = vadd.f32 %v3079, %v3157
      %v3159 = vpop.f32.mrb[0].mxu0
      %3160 = vmatprep.mubr.f32.mxu0 0.0
      %3161 = vmatmul.mubr.f32.gmra.mrb[0].mxu0 %v3051
      %v3162 = vpop.f32.mrb[0].mxu0
      %v3163 = vadd.f32 %v3079, %v3162
      %v3164 = vpop.f32.mrb[0].mxu0
      %3165 = vmatprep.mubr.f32.mxu0 0.0
      %3166 = vmatmul.mubr.f32.gmra.mrb[0].mxu0 %v3052
      %v3167 = vpop.f32.mrb[0].mxu0
      %v3168 = vadd.f32 %v3079, %v3167
      %v3169 = vpop.f32.mrb[0].mxu0
      %3170 = vmatprep.mubr.f32.mxu0 0.0
      %3171 = vmatmul.mubr.f32.gmra.mrb[0].mxu0 %v3053
      %v3172 = vpop.f32.mrb[0].mxu0
      %v3173 = vadd.f32 %v3079, %v3172
      %v3174 = vpop.f32.mrb[0].mxu0
      %3175 = vmatprep.mubr.f32.mxu0 0.0
      %3176 = vmatmul.mubr.f32.gmra.mrb[0].mxu0 %v3054
      %v3177 = vpop.f32.mrb[0].mxu0
      %v3178 = vadd.f32 %v3079, %v3177
      %v3179 = vpop.f32.mrb[0].mxu0
      %3180 = vmatprep.mubr.f32.mxu0 0.0
      %3181 = vmatmul.mubr.f32.gmra.mrb[0].mxu0 %v3055
      %v3182 = vpop.f32.mrb[0].mxu0
      %v3183 = vadd.f32 %v3079, %v3182
      %v3184 = vpop.f32.mrb[0].mxu0
      %3185 = vdwg.mxu0
      %v3186 = vadd.f32 %v2698, %v3148
      %v3187 = vadd.f32 %v2699, %v3153
      %v3188 = vadd.f32 %v2700, %v3158
      %v3189 = vadd.f32 %v2701, %v3163
      %v3190 = vadd.f32 %v2702, %v3168
      %v3191 = vadd.f32 %v2703, %v3173
      %v3192 = vadd.f32 %v2704, %v3178
      %v3193 = vadd.f32 %v2705, %v3183
      %3194 = vst.msk [vmem:[%s469] sm:$0xff] %vm481, %v3186
      %3195 = vst.msk [vmem:[%s469 + $0x8] sm:$0xff] %vm481, %v3187
      %3196 = vst.msk [vmem:[%s469 + $0x10] sm:$0xff] %vm481, %v3188
      %3197 = vst.msk [vmem:[%s469 + $0x18] sm:$0xff] %vm481, %v3189
      %3198 = vst.msk [vmem:[%s469 + $0x20] sm:$0xff] %vm481, %v3190
      %3199 = vst.msk [vmem:[%s469 + $0x28] sm:$0xff] %vm481, %v3191
      %3200 = vst.msk [vmem:[%s469 + $0x30] sm:$0xff] %vm481, %v3192
      %3201 = vst.msk [vmem:[%s469 + $0x38] sm:$0xff] %vm481, %v3193
      %s3202 = smul.u32 8, %s25
      %p3203 = scmp.lt.s32.totalorder %s3202, 15
      %s3204 = scalar_select %p3203, %s3202, 15
      %s3205 = smul.addr %s3204, 8
      %s3206 = scalar_lea.vmem %s14, %s3205
      // Predicated region
      $region91: #{basic_layer_forward.1} parent=75 // pred_check
        %p3207 = pneg %p342
      $region92: #{basic_layer_forward.1} parent=75 // pred_check_branch
        %3209 = sbr.rel (%p3207) target = $region94
      $region93: #{basic_layer_forward.1} parent=75 // pred_region
        %s3210 = smul.u32 8, %s25
      $region94: #{basic_layer_forward.1} parent=75 // pred_fallthru
        _
    $region76: #{basic_layer_forward.1} parent=5 // pred_fallthru
      _
    %p3211 = scmp.le.s32.totalorder 2, %s20
    // Predicated region
    $region95: #{basic_layer_forward.1} parent=5 // pred_check
      %p3212 = pneg %p3211
    $region96: #{basic_layer_forward.1} parent=5 // pred_check_branch
      %3214 = sbr.rel (%p3212) target = $region98
    $region97: #{basic_layer_forward.1} parent=5 // pred_region
      %s3215 = ssub.s32 %s20, 2
      // Predicated region
      $region99: #{basic_layer_forward.1} parent=97 // pred_check
        %p3216 = pneg %p348
      $region100: #{basic_layer_forward.1} parent=97 // pred_check_branch
        %3218 = sbr.rel (%p3216) target = $region102
      $region101: #{basic_layer_forward.1} parent=97 // pred_region
        %s3219 = smul.u32 8, %s26
        %p3220 = scmp.lt.s32.totalorder %s3219, 15
        %s3221 = scalar_select %p3220, %s3219, 15
        %s3222 = smul.addr %s3221, 8
        %s3223 = scalar_lea.vmem %s14, %s3222
      $region102: #{basic_layer_forward.1} parent=97 // pred_fallthru
        _
    $region98: #{basic_layer_forward.1} parent=5 // pred_fallthru
      _
  $region6: #{basic_layer_forward.1} parent=0 // loop_footer
    %s24 = sadd.s32 1, %s20
  $region7: #{basic_layer_forward.1} parent=0 // loop_footer_branch
    %19 = sbr.rel target = $region3
  $region8: #{basic_layer_forward.1} parent=0 // loop_exit
    _

</llo_original>
